<compile_context>
chip_gen: v7x
topology: tpu7x:2x2x1
jax: 0.10.0
libtpu: 0.0.40
codegen_flags: <defaults>
</compile_context>

<pallas_src>
import jax
import jax.numpy as jnp
from jax.experimental import pallas as pl
from jax.experimental.pallas import tpu as pltpu

EPS = 1e-5
LANE = 128
ROW_TILE_TARGET = 256                   # matmul M per grid step (>=256 for v6e MXU)
VMEM_LIMIT_BYTES = 32 * 1024 * 1024     # raise v5e's 16 MiB default; safe on v6e/v7x


def _round_up(x, m):
    return (x + m - 1) // m * m


def _pick_row_tile(rows, target=ROW_TILE_TARGET):
    cand = (min(target, rows) // 8) * 8
    while cand >= 8:
        if rows % cand == 0:
            return cand
        cand -= 8
    return rows  # full-extent fallback (always a legal block)


# ------------------------------ kernels --------------------------------------
def _accumulate_stats(stats_ref, y):
    """Accumulate per-channel [sum; sum_of_squares] across grid steps."""
    s = jnp.sum(y, axis=0, keepdims=True)
    sq = jnp.sum(y * y, axis=0, keepdims=True)
    st = jnp.concatenate([s, sq], axis=0)

    @pl.when(pl.program_id(0) == 0)
    def _():
        stats_ref[...] = jnp.zeros_like(stats_ref)

    stats_ref[...] += st


def conv1_shortcut_kernel(x_ref, w_ref, y1_ref, ysc_ref, stats_ref):
    """Fused 1x1 conv1 + 1x1 shortcut conv: one MXU matmul, split on lanes."""
    y = jnp.dot(x_ref[...], w_ref[...], preferred_element_type=jnp.float32)
    pp = y1_ref.shape[1]
    y1_ref[...] = y[:, :pp]
    ysc_ref[...] = y[:, pp:]
    _accumulate_stats(stats_ref, y)


def conv2_kernel(y1_ref, sc1_ref, sh1_ref, w2_ref, y2_ref, stats_ref):
    """bn1 (folded scale/shift) + relu + 3x3 conv (pad=1) as one im2col matmul."""
    h_dim, w_dim, pp = y1_ref.shape
    h = jnp.maximum(y1_ref[...] * sc1_ref[...] + sh1_ref[...], 0.0)
    # zero-pad H and W by 1 at the value level (no scratch zero/rewrite round-trip)
    zc = jnp.zeros((h_dim, 1, pp), jnp.float32)
    hw = jnp.concatenate([zc, h, zc], axis=1)                 # (H, W+2, Pp)
    zr = jnp.zeros((1, w_dim + 2, pp), jnp.float32)
    padded = jnp.concatenate([zr, hw, zr], axis=0)            # (H+2, W+2, Pp)
    cols = [padded[dy:dy + h_dim, dx:dx + w_dim, :]
            for dy in range(3) for dx in range(3)]
    patches = jnp.concatenate(cols, axis=-1).reshape(h_dim * w_dim, 9 * pp)
    y2 = jnp.dot(patches, w2_ref[...], preferred_element_type=jnp.float32)
    y2_ref[...] = y2.reshape(h_dim, w_dim, pp)
    _accumulate_stats(stats_ref, y2)


def conv3_kernel(y2_ref, sc2_ref, sh2_ref, w3_ref, y3_ref, stats_ref):
    """bn2 (folded scale/shift) + relu + 1x1 conv3."""
    h = jnp.maximum(y2_ref[...] * sc2_ref[...] + sh2_ref[...], 0.0)
    y3 = jnp.dot(h, w3_ref[...], preferred_element_type=jnp.float32)
    y3_ref[...] = y3
    _accumulate_stats(stats_ref, y3)


def residual_kernel(y3_ref, ysc_ref, sc3_ref, sh3_ref, scs_ref, shs_ref, out_ref):
    """bn3 + bn_shortcut (folded) + residual add + relu."""
    a = y3_ref[...] * sc3_ref[...] + sh3_ref[...]
    b = ysc_ref[...] * scs_ref[...] + shs_ref[...]
    out_ref[...] = jnp.maximum(a + b, 0.0)


# ------------------------------ wrapper ---------------------------------------
def _fold_bn(stats, gamma, beta, count):
    mean = stats[0] / count
    var = jnp.maximum(stats[1] / count - mean * mean, 0.0)   # biased variance
    scale = gamma * jax.lax.rsqrt(var + EPS)
    shift = beta - mean * scale
    return scale.reshape(1, -1), shift.reshape(1, -1)


def _pad2(w, r, c):
    return jnp.zeros((r, c), jnp.float32).at[:w.shape[0], :w.shape[1]].set(w)


def _pad1(v, c):
    return jnp.zeros((c,), jnp.float32).at[:v.shape[0]].set(v)


def _mosaic(sem):
    return pltpu.CompilerParams(dimension_semantics=sem,
                                vmem_limit_bytes=VMEM_LIMIT_BYTES)


@jax.jit
def bottleneck_forward(x_nchw, params):
    """x_nchw: (N, Cin, H, W) float32. Returns (N, 4*planes, H, W)."""
    (w1, g1, b1, w2, g2, b2, w3, g3, b3, ws, gs, bs) = params
    N, Cin, H, W = x_nchw.shape
    P = w1.shape[1]
    Cout = w3.shape[1]

    cin_p = _round_up(Cin, LANE)
    pp = _round_up(P, LANE)
    cop = _round_up(Cout, LANE)
    rows = N * H * W
    tr = _pick_row_tile(rows)
    nt = rows // tr
    count = float(rows)

    # NHWC, channel-padded (lane-dense), flattened to (rows, cin_p).
    x = jnp.transpose(x_nchw, (0, 2, 3, 1)).astype(jnp.float32)
    x = jnp.pad(x, ((0, 0), (0, 0), (0, 0), (0, cin_p - Cin))).reshape(rows, cin_p)

    # Padded / fused weights (zero padding keeps the padded channels exactly 0).
    w1s = jnp.concatenate([_pad2(w1, cin_p, pp), _pad2(ws, cin_p, cop)], axis=1)
    w2col = jnp.zeros((3, 3, pp, pp), jnp.float32).at[:, :, :P, :P].set(w2)
    w2col = w2col.reshape(9 * pp, pp)                        # im2col weight
    w3p = _pad2(w3, pp, cop)
    g1p, b1p = _pad1(g1, pp), _pad1(b1, pp)                  # gamma padded with 0 -> scale 0
    g2p, b2p = _pad1(g2, pp), _pad1(b2, pp)
    g3p, b3p = _pad1(g3, cop), _pad1(b3, cop)
    gsp, bsp = _pad1(gs, cop), _pad1(bs, cop)

    # ---- pass A: fused conv1 + shortcut conv (1x1) + bn1 / bn_s statistics ---
    c1s = pp + cop
    y1, ysc, st1s = pl.pallas_call(
        conv1_shortcut_kernel,
        grid=(nt,),
        in_specs=[
            pl.BlockSpec((tr, cin_p), lambda i: (i, 0)),
            pl.BlockSpec((cin_p, c1s), lambda i: (0, 0)),
        ],
        out_specs=[
            pl.BlockSpec((tr, pp), lambda i: (i, 0)),
            pl.BlockSpec((tr, cop), lambda i: (i, 0)),
            pl.BlockSpec((2, c1s), lambda i: (0, 0)),        # accumulator
        ],
        out_shape=[
            jax.ShapeDtypeStruct((rows, pp), jnp.float32),
            jax.ShapeDtypeStruct((rows, cop), jnp.float32),
            jax.ShapeDtypeStruct((2, c1s), jnp.float32),
        ],
        compiler_params=_mosaic(("arbitrary",)),
    )(x, w1s)
    sc1, sh1 = _fold_bn(st1s[:, :pp], g1p, b1p, count)
    scs, shs = _fold_bn(st1s[:, pp:], gsp, bsp, count)

    # ---- pass B: bn1 + relu + 3x3 conv2 (im2col) + bn2 statistics ------------
    y2, st2 = pl.pallas_call(
        conv2_kernel,
        grid=(N,),
        in_specs=[
            pl.BlockSpec((None, H, W, pp), lambda n: (n, 0, 0, 0)),
            pl.BlockSpec((1, pp), lambda n: (0, 0)),
            pl.BlockSpec((1, pp), lambda n: (0, 0)),
            pl.BlockSpec((9 * pp, pp), lambda n: (0, 0)),
        ],
        out_specs=[
            pl.BlockSpec((None, H, W, pp), lambda n: (n, 0, 0, 0)),
            pl.BlockSpec((2, pp), lambda n: (0, 0)),         # accumulator
        ],
        out_shape=[
            jax.ShapeDtypeStruct((N, H, W, pp), jnp.float32),
            jax.ShapeDtypeStruct((2, pp), jnp.float32),
        ],
        compiler_params=_mosaic(("arbitrary",)),
    )(y1.reshape(N, H, W, pp), sc1, sh1, w2col)
    sc2, sh2 = _fold_bn(st2, g2p, b2p, count)

    # ---- pass C: bn2 + relu + 1x1 conv3 + bn3 statistics ---------------------
    y3, st3 = pl.pallas_call(
        conv3_kernel,
        grid=(nt,),
        in_specs=[
            pl.BlockSpec((tr, pp), lambda i: (i, 0)),
            pl.BlockSpec((1, pp), lambda i: (0, 0)),
            pl.BlockSpec((1, pp), lambda i: (0, 0)),
            pl.BlockSpec((pp, cop), lambda i: (0, 0)),
        ],
        out_specs=[
            pl.BlockSpec((tr, cop), lambda i: (i, 0)),
            pl.BlockSpec((2, cop), lambda i: (0, 0)),        # accumulator
        ],
        out_shape=[
            jax.ShapeDtypeStruct((rows, cop), jnp.float32),
            jax.ShapeDtypeStruct((2, cop), jnp.float32),
        ],
        compiler_params=_mosaic(("arbitrary",)),
    )(y2.reshape(rows, pp), sc2, sh2, w3p)
    sc3, sh3 = _fold_bn(st3, g3p, b3p, count)

    # ---- pass D: bn3 + bn_s + residual add + relu ----------------------------
    out = pl.pallas_call(
        residual_kernel,
        grid=(nt,),
        in_specs=[
            pl.BlockSpec((tr, cop), lambda i: (i, 0)),
            pl.BlockSpec((tr, cop), lambda i: (i, 0)),
            pl.BlockSpec((1, cop), lambda i: (0, 0)),
            pl.BlockSpec((1, cop), lambda i: (0, 0)),
            pl.BlockSpec((1, cop), lambda i: (0, 0)),
            pl.BlockSpec((1, cop), lambda i: (0, 0)),
        ],
        out_specs=pl.BlockSpec((tr, cop), lambda i: (i, 0)),
        out_shape=jax.ShapeDtypeStruct((rows, cop), jnp.float32),
        compiler_params=_mosaic(("parallel",)),
    )(y3, ysc, sc3, sh3, scs, shs)

    out = out.reshape(N, H, W, cop)[:, :, :, :Cout]
    return jnp.transpose(out, (0, 3, 1, 2))


# --------------------------- pure-JAX reference --------------------------------
def _bn_ref(y_nhwc, gamma, beta):
    mean = jnp.mean(y_nhwc, axis=(0, 1, 2), keepdims=True)
    var = jnp.mean((y_nhwc - mean) ** 2, axis=(0, 1, 2), keepdims=True)
    return (y_nhwc - mean) * jax.lax.rsqrt(var + EPS) * gamma + beta


def bottleneck_reference(x_nchw, params):
    (w1, g1, b1, w2, g2, b2, w3, g3, b3, ws, gs, bs) = params
    x = jnp.transpose(x_nchw, (0, 2, 3, 1)).astype(jnp.float32)  # NHWC
    dn = ("NHWC", "HWIO", "NHWC")

    def conv(inp, w, pad):
        return jax.lax.conv_general_dilated(
            inp, w, window_strides=(1, 1), padding=pad, dimension_numbers=dn
        )

    h = conv(x, w1[None, None], "VALID")
    h = jnp.maximum(_bn_ref(h, g1, b1), 0.0)
    h = conv(h, w2, [(1, 1), (1, 1)])
    h = jnp.maximum(_bn_ref(h, g2, b2), 0.0)
    h = conv(h, w3[None, None], "VALID")
    h = _bn_ref(h, g3, b3)
    sc = _bn_ref(conv(x, ws[None, None], "VALID"), gs, bs)
    out = jnp.maximum(h + sc, 0.0)
    return jnp.transpose(out, (0, 3, 1, 2))


# -------------------------------------------------------------------------------
def make_params(key, in_planes, planes):
    expansion = 4
    ks = jax.random.split(key, 6)
    w1 = 0.2 * jax.random.normal(ks[0], (in_planes, planes), jnp.float32)
    w2 = 0.2 * jax.random.normal(ks[1], (3, 3, planes, planes), jnp.float32)
    w3 = 0.2 * jax.random.normal(ks[2], (planes, expansion * planes), jnp.float32)
    ws = 0.2 * jax.random.normal(ks[3], (in_planes, expansion * planes), jnp.float32)
    g1 = 1.0 + 0.1 * jax.random.normal(ks[4], (planes,), jnp.float32)
    b1 = 0.1 * jax.random.normal(ks[5], (planes,), jnp.float32)
    g2 = jnp.ones((planes,), jnp.float32)
    b2 = jnp.zeros((planes,), jnp.float32)
    g3 = jnp.ones((expansion * planes,), jnp.float32)
    b3 = jnp.zeros((expansion * planes,), jnp.float32)
    gs = jnp.ones((expansion * planes,), jnp.float32)
    bs = jnp.zeros((expansion * planes,), jnp.float32)
    return (w1, g1, b1, w2, g2, b2, w3, g3, b3, ws, gs, bs)


if __name__ == "__main__":
    key = jax.random.PRNGKey(0)
    kx, kp = jax.random.split(key)

    N, Cin, H, W = 2, 4, 16, 16
    planes = 4  # expansion*planes = 16 != Cin -> shortcut conv+bn active
    x = jax.random.normal(kx, (N, Cin, H, W), jnp.float32)
    params = make_params(kp, Cin, planes)

    out = bottleneck_forward(x, params)
    out = jax.block_until_ready(out)

    ref = bottleneck_reference(x, params)
    assert out.shape == (N, 4 * planes, H, W), out.shape
    assert jnp.allclose(out, ref, rtol=1e-4, atol=1e-4), (
        float(jnp.max(jnp.abs(out - ref)))
    )

    print("KERNEL_OK")
</pallas_src>

<mosaic_0001>
module attributes {stable_mosaic.version = 11 : i64} {
  func.func @conv1_shortcut_kernel(%arg0: i32, %arg1: memref<256x128xf32, #tpu.memory_space<vmem>>, %arg2: memref<128x256xf32, #tpu.memory_space<vmem>>, %arg3: memref<256x128xf32, #tpu.memory_space<vmem>>, %arg4: memref<256x128xf32, #tpu.memory_space<vmem>>, %arg5: memref<2x256xf32, #tpu.memory_space<vmem>>) attributes {dimension_semantics = [#tpu.dimension_semantics<arbitrary>], iteration_bounds = array<i64: 2>, scalar_prefetch = 0 : i64, scratch_operands = 0 : i64, tpu.core_type = #tpu.core_type<tc>, window_params = [{transform_indices = @transform_0, window_bounds = array<i64: 256, 128>}, {pipeline_mode = #tpu.pipeline_mode<synchronous>, transform_indices = @transform_1, window_bounds = array<i64: 128, 256>}, {transform_indices = @transform_2, window_bounds = array<i64: 256, 128>}, {transform_indices = @transform_3, window_bounds = array<i64: 256, 128>}, {pipeline_mode = #tpu.pipeline_mode<synchronous>, transform_indices = @transform_4, window_bounds = array<i64: 2, 256>}]} {
    %c0 = arith.constant 0 : index
    %c0_0 = arith.constant 0 : index
    %0 = vector.load %arg1[%c0, %c0_0] : memref<256x128xf32, #tpu.memory_space<vmem>>, vector<256x128xf32>
    %c0_1 = arith.constant 0 : index
    %c0_2 = arith.constant 0 : index
    %1 = vector.load %arg2[%c0_1, %c0_2] : memref<128x256xf32, #tpu.memory_space<vmem>>, vector<128x256xf32>
    %cst = arith.constant dense<0.000000e+00> : vector<256x256xf32>
    %2 = tpu.matmul %0, %1, %cst {dimension_numbers = #tpu.dot_dimension_numbers<[1], [0], [0], [1], [0, 0, 1, 1], [], []>} : vector<256x128xf32>, vector<128x256xf32>, vector<256x256xf32> -> vector<256x256xf32>
    %3 = vector.extract_strided_slice %2 {offsets = [0, 0], sizes = [256, 128], strides = [1, 1]} : vector<256x256xf32> to vector<256x128xf32>
    %c0_3 = arith.constant 0 : index
    %c0_4 = arith.constant 0 : index
    %4 = vector.load %arg3[%c0_3, %c0_4] : memref<256x128xf32, #tpu.memory_space<vmem>>, vector<256x128xf32>
    tpu.vector_store %arg3[%c0_3, %c0_4], %3 {strides = array<i32>} : memref<256x128xf32, #tpu.memory_space<vmem>>, vector<256x128xf32>,
    %5 = vector.extract_strided_slice %2 {offsets = [0, 128], sizes = [256, 128], strides = [1, 1]} : vector<256x256xf32> to vector<256x128xf32>
    %c0_5 = arith.constant 0 : index
    %c0_6 = arith.constant 0 : index
    %6 = vector.load %arg4[%c0_5, %c0_6] : memref<256x128xf32, #tpu.memory_space<vmem>>, vector<256x128xf32>
    tpu.vector_store %arg4[%c0_5, %c0_6], %5 {strides = array<i32>} : memref<256x128xf32, #tpu.memory_space<vmem>>, vector<256x128xf32>,
    %cst_7 = arith.constant dense<0.000000e+00> : vector<256xf32>
    %7 = vector.multi_reduction <add>, %2, %cst_7 [0] : vector<256x256xf32> to vector<256xf32>
    %8 = vector.shape_cast %7 : vector<256xf32> to vector<1x256xf32>
    %9 = arith.mulf %2, %2 : vector<256x256xf32>
    %cst_8 = arith.constant dense<0.000000e+00> : vector<256xf32>
    %10 = vector.multi_reduction <add>, %9, %cst_8 [0] : vector<256x256xf32> to vector<256xf32>
    %11 = vector.shape_cast %10 : vector<256xf32> to vector<1x256xf32>
    %12 = tpu.concatenate %8, %11 in 0 : vector<1x256xf32>, vector<1x256xf32> -> vector<2x256xf32>
    %c0_i32 = arith.constant 0 : i32
    %13 = arith.cmpi eq, %arg0, %c0_i32 : i32
    %14 = arith.extui %13 : i1 to i32
    %c0_i32_9 = arith.constant 0 : i32
    %15 = arith.cmpi ne, %14, %c0_i32_9 : i32
    scf.if %15 {
      %cst_14 = arith.constant 0.000000e+00 : f32
      %19 = vector.broadcast %cst_14 : f32 to vector<2x256xf32>
      %c0_15 = arith.constant 0 : index
      %c0_16 = arith.constant 0 : index
      %20 = vector.load %arg5[%c0_15, %c0_16] : memref<2x256xf32, #tpu.memory_space<vmem>>, vector<2x256xf32>
      tpu.vector_store %arg5[%c0_15, %c0_16], %19 {strides = array<i32>} : memref<2x256xf32, #tpu.memory_space<vmem>>, vector<2x256xf32>,
    } else {
    }
    %c0_10 = arith.constant 0 : index
    %c0_11 = arith.constant 0 : index
    %16 = vector.load %arg5[%c0_10, %c0_11] : memref<2x256xf32, #tpu.memory_space<vmem>>, vector<2x256xf32>
    %17 = arith.addf %16, %12 : vector<2x256xf32>
    %c0_12 = arith.constant 0 : index
    %c0_13 = arith.constant 0 : index
    %18 = vector.load %arg5[%c0_12, %c0_13] : memref<2x256xf32, #tpu.memory_space<vmem>>, vector<2x256xf32>
    tpu.vector_store %arg5[%c0_12, %c0_13], %17 {strides = array<i32>} : memref<2x256xf32, #tpu.memory_space<vmem>>, vector<2x256xf32>,
    return
  }
  func.func @transform_0(%arg0: i32) -> (i32, i32) {
    %c0_i32 = arith.constant 0 : i32
    %c0_i32_0 = arith.constant 0 : i32
    return %arg0, %c0_i32 : i32, i32
  }
  func.func @transform_1(%arg0: i32) -> (i32, i32) {
    %c0_i32 = arith.constant 0 : i32
    %c0_i32_0 = arith.constant 0 : i32
    %c0_i32_1 = arith.constant 0 : i32
    return %c0_i32, %c0_i32_0 : i32, i32
  }
  func.func @transform_2(%arg0: i32) -> (i32, i32) {
    %c0_i32 = arith.constant 0 : i32
    %c0_i32_0 = arith.constant 0 : i32
    return %arg0, %c0_i32 : i32, i32
  }
  func.func @transform_3(%arg0: i32) -> (i32, i32) {
    %c0_i32 = arith.constant 0 : i32
    %c0_i32_0 = arith.constant 0 : i32
    return %arg0, %c0_i32 : i32, i32
  }
  func.func @transform_4(%arg0: i32) -> (i32, i32) {
    %c0_i32 = arith.constant 0 : i32
    %c0_i32_0 = arith.constant 0 : i32
    %c0_i32_1 = arith.constant 0 : i32
    return %c0_i32, %c0_i32_0 : i32, i32
  }
}

module attributes {stable_mosaic.version = 11 : i64} {
  func.func @conv2_kernel(%arg0: i32, %arg1: memref<1x16x16x128xf32, #tpu.memory_space<vmem>>, %arg2: memref<1x128xf32, #tpu.memory_space<vmem>>, %arg3: memref<1x128xf32, #tpu.memory_space<vmem>>, %arg4: memref<1152x128xf32, #tpu.memory_space<vmem>>, %arg5: memref<1x16x16x128xf32, #tpu.memory_space<vmem>>, %arg6: memref<2x128xf32, #tpu.memory_space<vmem>>) attributes {dimension_semantics = [#tpu.dimension_semantics<arbitrary>], iteration_bounds = array<i64: 2>, scalar_prefetch = 0 : i64, scratch_operands = 0 : i64, tpu.core_type = #tpu.core_type<tc>, window_params = [{transform_indices = @transform_0, window_bounds = array<i64: 1, 16, 16, 128>}, {pipeline_mode = #tpu.pipeline_mode<synchronous>, transform_indices = @transform_1, window_bounds = array<i64: 1, 128>}, {pipeline_mode = #tpu.pipeline_mode<synchronous>, transform_indices = @transform_2, window_bounds = array<i64: 1, 128>}, {pipeline_mode = #tpu.pipeline_mode<synchronous>, transform_indices = @transform_3, window_bounds = array<i64: 1152, 128>}, {transform_indices = @transform_4, window_bounds = array<i64: 1, 16, 16, 128>}, {pipeline_mode = #tpu.pipeline_mode<synchronous>, transform_indices = @transform_5, window_bounds = array<i64: 2, 128>}]} {
    %c0 = arith.constant 0 : index
    %c0_0 = arith.constant 0 : index
    %c0_1 = arith.constant 0 : index
    %c0_2 = arith.constant 0 : index
    %0 = vector.load %arg1[%c0, %c0_0, %c0_1, %c0_2] : memref<1x16x16x128xf32, #tpu.memory_space<vmem>>, vector<1x16x16x128xf32>
    %1 = vector.shape_cast %0 : vector<1x16x16x128xf32> to vector<16x16x128xf32>
    %c0_3 = arith.constant 0 : index
    %c0_4 = arith.constant 0 : index
    %2 = vector.load %arg2[%c0_3, %c0_4] : memref<1x128xf32, #tpu.memory_space<vmem>>, vector<1x128xf32>
    %3 = vector.shape_cast %2 : vector<1x128xf32> to vector<1x1x128xf32>
    %4 = vector.broadcast %3 : vector<1x1x128xf32> to vector<16x16x128xf32>
    %5 = arith.mulf %1, %4 : vector<16x16x128xf32>
    %c0_5 = arith.constant 0 : index
    %c0_6 = arith.constant 0 : index
    %6 = vector.load %arg3[%c0_5, %c0_6] : memref<1x128xf32, #tpu.memory_space<vmem>>, vector<1x128xf32>
    %7 = vector.shape_cast %6 : vector<1x128xf32> to vector<1x1x128xf32>
    %8 = vector.broadcast %7 : vector<1x1x128xf32> to vector<16x16x128xf32>
    %9 = arith.addf %5, %8 : vector<16x16x128xf32>
    %cst = arith.constant 0.000000e+00 : f32
    %10 = vector.broadcast %cst : f32 to vector<16x16x128xf32>
    %11 = arith.maximumf %9, %10 : vector<16x16x128xf32>
    %cst_7 = arith.constant 0.000000e+00 : f32
    %12 = vector.broadcast %cst_7 : f32 to vector<16x1x128xf32>
    %13 = tpu.concatenate %12, %11, %12 in 1 : vector<16x1x128xf32>, vector<16x16x128xf32>, vector<16x1x128xf32> -> vector<16x18x128xf32>
    %cst_8 = arith.constant 0.000000e+00 : f32
    %14 = vector.broadcast %cst_8 : f32 to vector<1x18x128xf32>
    %15 = tpu.concatenate %14, %13, %14 in 0 : vector<1x18x128xf32>, vector<16x18x128xf32>, vector<1x18x128xf32> -> vector<18x18x128xf32>
    %16 = vector.extract_strided_slice %15 {offsets = [0, 0, 0], sizes = [16, 16, 128], strides = [1, 1, 1]} : vector<18x18x128xf32> to vector<16x16x128xf32>
    %17 = vector.extract_strided_slice %15 {offsets = [0, 1, 0], sizes = [16, 16, 128], strides = [1, 1, 1]} : vector<18x18x128xf32> to vector<16x16x128xf32>
    %18 = vector.extract_strided_slice %15 {offsets = [0, 2, 0], sizes = [16, 16, 128], strides = [1, 1, 1]} : vector<18x18x128xf32> to vector<16x16x128xf32>
    %19 = vector.extract_strided_slice %15 {offsets = [1, 0, 0], sizes = [16, 16, 128], strides = [1, 1, 1]} : vector<18x18x128xf32> to vector<16x16x128xf32>
    %20 = vector.extract_strided_slice %15 {offsets = [1, 1, 0], sizes = [16, 16, 128], strides = [1, 1, 1]} : vector<18x18x128xf32> to vector<16x16x128xf32>
    %21 = vector.extract_strided_slice %15 {offsets = [1, 2, 0], sizes = [16, 16, 128], strides = [1, 1, 1]} : vector<18x18x128xf32> to vector<16x16x128xf32>
    %22 = vector.extract_strided_slice %15 {offsets = [2, 0, 0], sizes = [16, 16, 128], strides = [1, 1, 1]} : vector<18x18x128xf32> to vector<16x16x128xf32>
    %23 = vector.extract_strided_slice %15 {offsets = [2, 1, 0], sizes = [16, 16, 128], strides = [1, 1, 1]} : vector<18x18x128xf32> to vector<16x16x128xf32>
    %24 = vector.extract_strided_slice %15 {offsets = [2, 2, 0], sizes = [16, 16, 128], strides = [1, 1, 1]} : vector<18x18x128xf32> to vector<16x16x128xf32>
    %25 = tpu.concatenate %16, %17, %18, %19, %20, %21, %22, %23, %24 in 2 : vector<16x16x128xf32>, vector<16x16x128xf32>, vector<16x16x128xf32>, vector<16x16x128xf32>, vector<16x16x128xf32>, vector<16x16x128xf32>, vector<16x16x128xf32>, vector<16x16x128xf32>, vector<16x16x128xf32> -> vector<16x16x1152xf32>
    %26 = vector.shape_cast %25 : vector<16x16x1152xf32> to vector<256x1152xf32>
    %c0_9 = arith.constant 0 : index
    %c0_10 = arith.constant 0 : index
    %27 = vector.load %arg4[%c0_9, %c0_10] : memref<1152x128xf32, #tpu.memory_space<vmem>>, vector<1152x128xf32>
    %cst_11 = arith.constant dense<0.000000e+00> : vector<256x128xf32>
    %28 = tpu.matmul %26, %27, %cst_11 {dimension_numbers = #tpu.dot_dimension_numbers<[1], [0], [0], [1], [0, 0, 1, 1], [], []>} : vector<256x1152xf32>, vector<1152x128xf32>, vector<256x128xf32> -> vector<256x128xf32>
    %29 = vector.shape_cast %28 : vector<256x128xf32> to vector<16x16x128xf32>
    %c0_12 = arith.constant 0 : index
    %c0_13 = arith.constant 0 : index
    %c0_14 = arith.constant 0 : index
    %c0_15 = arith.constant 0 : index
    %30 = vector.load %arg5[%c0_12, %c0_13, %c0_14, %c0_15] : memref<1x16x16x128xf32, #tpu.memory_space<vmem>>, vector<1x16x16x128xf32>
    %31 = vector.shape_cast %30 : vector<1x16x16x128xf32> to vector<16x16x128xf32>
    %32 = vector.shape_cast %29 : vector<16x16x128xf32> to vector<1x16x16x128xf32>
    tpu.vector_store %arg5[%c0_12, %c0_13, %c0_14, %c0_15], %32 {strides = array<i32>} : memref<1x16x16x128xf32, #tpu.memory_space<vmem>>, vector<1x16x16x128xf32>,
    %cst_16 = arith.constant dense<0.000000e+00> : vector<128xf32>
    %33 = vector.multi_reduction <add>, %28, %cst_16 [0] : vector<256x128xf32> to vector<128xf32>
    %34 = vector.shape_cast %33 : vector<128xf32> to vector<1x128xf32>
    %35 = arith.mulf %28, %28 : vector<256x128xf32>
    %cst_17 = arith.constant dense<0.000000e+00> : vector<128xf32>
    %36 = vector.multi_reduction <add>, %35, %cst_17 [0] : vector<256x128xf32> to vector<128xf32>
    %37 = vector.shape_cast %36 : vector<128xf32> to vector<1x128xf32>
    %38 = tpu.concatenate %34, %37 in 0 : vector<1x128xf32>, vector<1x128xf32> -> vector<2x128xf32>
    %c0_i32 = arith.constant 0 : i32
    %39 = arith.cmpi eq, %arg0, %c0_i32 : i32
    %40 = arith.extui %39 : i1 to i32
    %c0_i32_18 = arith.constant 0 : i32
    %41 = arith.cmpi ne, %40, %c0_i32_18 : i32
    scf.if %41 {
      %cst_23 = arith.constant 0.000000e+00 : f32
      %45 = vector.broadcast %cst_23 : f32 to vector<2x128xf32>
      %c0_24 = arith.constant 0 : index
      %c0_25 = arith.constant 0 : index
      %46 = vector.load %arg6[%c0_24, %c0_25] : memref<2x128xf32, #tpu.memory_space<vmem>>, vector<2x128xf32>
      tpu.vector_store %arg6[%c0_24, %c0_25], %45 {strides = array<i32>} : memref<2x128xf32, #tpu.memory_space<vmem>>, vector<2x128xf32>,
    } else {
    }
    %c0_19 = arith.constant 0 : index
    %c0_20 = arith.constant 0 : index
    %42 = vector.load %arg6[%c0_19, %c0_20] : memref<2x128xf32, #tpu.memory_space<vmem>>, vector<2x128xf32>
    %43 = arith.addf %42, %38 : vector<2x128xf32>
    %c0_21 = arith.constant 0 : index
    %c0_22 = arith.constant 0 : index
    %44 = vector.load %arg6[%c0_21, %c0_22] : memref<2x128xf32, #tpu.memory_space<vmem>>, vector<2x128xf32>
    tpu.vector_store %arg6[%c0_21, %c0_22], %43 {strides = array<i32>} : memref<2x128xf32, #tpu.memory_space<vmem>>, vector<2x128xf32>,
    return
  }
  func.func @transform_0(%arg0: i32) -> (i32, i32, i32, i32) {
    %c0_i32 = arith.constant 0 : i32
    %c0_i32_0 = arith.constant 0 : i32
    %c0_i32_1 = arith.constant 0 : i32
    %c0_i32_2 = arith.constant 0 : i32
    return %arg0, %c0_i32, %c0_i32_0, %c0_i32_1 : i32, i32, i32, i32
  }
  func.func @transform_1(%arg0: i32) -> (i32, i32) {
    %c0_i32 = arith.constant 0 : i32
    %c0_i32_0 = arith.constant 0 : i32
    %c0_i32_1 = arith.constant 0 : i32
    return %c0_i32, %c0_i32_0 : i32, i32
  }
  func.func @transform_2(%arg0: i32) -> (i32, i32) {
    %c0_i32 = arith.constant 0 : i32
    %c0_i32_0 = arith.constant 0 : i32
    %c0_i32_1 = arith.constant 0 : i32
    return %c0_i32, %c0_i32_0 : i32, i32
  }
  func.func @transform_3(%arg0: i32) -> (i32, i32) {
    %c0_i32 = arith.constant 0 : i32
    %c0_i32_0 = arith.constant 0 : i32
    %c0_i32_1 = arith.constant 0 : i32
    return %c0_i32, %c0_i32_0 : i32, i32
  }
  func.func @transform_4(%arg0: i32) -> (i32, i32, i32, i32) {
    %c0_i32 = arith.constant 0 : i32
    %c0_i32_0 = arith.constant 0 : i32
    %c0_i32_1 = arith.constant 0 : i32
    %c0_i32_2 = arith.constant 0 : i32
    return %arg0, %c0_i32, %c0_i32_0, %c0_i32_1 : i32, i32, i32, i32
  }
  func.func @transform_5(%arg0: i32) -> (i32, i32) {
    %c0_i32 = arith.constant 0 : i32
    %c0_i32_0 = arith.constant 0 : i32
    %c0_i32_1 = arith.constant 0 : i32
    return %c0_i32, %c0_i32_0 : i32, i32
  }
}

module attributes {stable_mosaic.version = 11 : i64} {
  func.func @residual_kernel(%arg0: i32, %arg1: memref<256x128xf32, #tpu.memory_space<vmem>>, %arg2: memref<256x128xf32, #tpu.memory_space<vmem>>, %arg3: memref<1x128xf32, #tpu.memory_space<vmem>>, %arg4: memref<1x128xf32, #tpu.memory_space<vmem>>, %arg5: memref<1x128xf32, #tpu.memory_space<vmem>>, %arg6: memref<1x128xf32, #tpu.memory_space<vmem>>, %arg7: memref<256x128xf32, #tpu.memory_space<vmem>>) attributes {dimension_semantics = [#tpu.dimension_semantics<parallel>], iteration_bounds = array<i64: 2>, scalar_prefetch = 0 : i64, scratch_operands = 0 : i64, tpu.core_type = #tpu.core_type<tc>, window_params = [{transform_indices = @transform_0, window_bounds = array<i64: 256, 128>}, {transform_indices = @transform_1, window_bounds = array<i64: 256, 128>}, {pipeline_mode = #tpu.pipeline_mode<synchronous>, transform_indices = @transform_2, window_bounds = array<i64: 1, 128>}, {pipeline_mode = #tpu.pipeline_mode<synchronous>, transform_indices = @transform_3, window_bounds = array<i64: 1, 128>}, {pipeline_mode = #tpu.pipeline_mode<synchronous>, transform_indices = @transform_4, window_bounds = array<i64: 1, 128>}, {pipeline_mode = #tpu.pipeline_mode<synchronous>, transform_indices = @transform_5, window_bounds = array<i64: 1, 128>}, {transform_indices = @transform_6, window_bounds = array<i64: 256, 128>}]} {
    %c0 = arith.constant 0 : index
    %c0_0 = arith.constant 0 : index
    %0 = vector.load %arg1[%c0, %c0_0] : memref<256x128xf32, #tpu.memory_space<vmem>>, vector<256x128xf32>
    %c0_1 = arith.constant 0 : index
    %c0_2 = arith.constant 0 : index
    %1 = vector.load %arg3[%c0_1, %c0_2] : memref<1x128xf32, #tpu.memory_space<vmem>>, vector<1x128xf32>
    %2 = vector.broadcast %1 : vector<1x128xf32> to vector<256x128xf32>
    %3 = arith.mulf %0, %2 : vector<256x128xf32>
    %c0_3 = arith.constant 0 : index
    %c0_4 = arith.constant 0 : index
    %4 = vector.load %arg4[%c0_3, %c0_4] : memref<1x128xf32, #tpu.memory_space<vmem>>, vector<1x128xf32>
    %5 = vector.broadcast %4 : vector<1x128xf32> to vector<256x128xf32>
    %6 = arith.addf %3, %5 : vector<256x128xf32>
    %c0_5 = arith.constant 0 : index
    %c0_6 = arith.constant 0 : index
    %7 = vector.load %arg2[%c0_5, %c0_6] : memref<256x128xf32, #tpu.memory_space<vmem>>, vector<256x128xf32>
    %c0_7 = arith.constant 0 : index
    %c0_8 = arith.constant 0 : index
    %8 = vector.load %arg5[%c0_7, %c0_8] : memref<1x128xf32, #tpu.memory_space<vmem>>, vector<1x128xf32>
    %9 = vector.broadcast %8 : vector<1x128xf32> to vector<256x128xf32>
    %10 = arith.mulf %7, %9 : vector<256x128xf32>
    %c0_9 = arith.constant 0 : index
    %c0_10 = arith.constant 0 : index
    %11 = vector.load %arg6[%c0_9, %c0_10] : memref<1x128xf32, #tpu.memory_space<vmem>>, vector<1x128xf32>
    %12 = vector.broadcast %11 : vector<1x128xf32> to vector<256x128xf32>
    %13 = arith.addf %10, %12 : vector<256x128xf32>
    %14 = arith.addf %6, %13 : vector<256x128xf32>
    %cst = arith.constant 0.000000e+00 : f32
    %15 = vector.broadcast %cst : f32 to vector<256x128xf32>
    %16 = arith.maximumf %14, %15 : vector<256x128xf32>
    %c0_11 = arith.constant 0 : index
    %c0_12 = arith.constant 0 : index
    %17 = vector.load %arg7[%c0_11, %c0_12] : memref<256x128xf32, #tpu.memory_space<vmem>>, vector<256x128xf32>
    tpu.vector_store %arg7[%c0_11, %c0_12], %16 {strides = array<i32>} : memref<256x128xf32, #tpu.memory_space<vmem>>, vector<256x128xf32>,
    return
  }
  func.func @transform_0(%arg0: i32) -> (i32, i32) {
    %c0_i32 = arith.constant 0 : i32
    %c0_i32_0 = arith.constant 0 : i32
    return %arg0, %c0_i32 : i32, i32
  }
  func.func @transform_1(%arg0: i32) -> (i32, i32) {
    %c0_i32 = arith.constant 0 : i32
    %c0_i32_0 = arith.constant 0 : i32
    return %arg0, %c0_i32 : i32, i32
  }
  func.func @transform_2(%arg0: i32) -> (i32, i32) {
    %c0_i32 = arith.constant 0 : i32
    %c0_i32_0 = arith.constant 0 : i32
    %c0_i32_1 = arith.constant 0 : i32
    return %c0_i32, %c0_i32_0 : i32, i32
  }
  func.func @transform_3(%arg0: i32) -> (i32, i32) {
    %c0_i32 = arith.constant 0 : i32
    %c0_i32_0 = arith.constant 0 : i32
    %c0_i32_1 = arith.constant 0 : i32
    return %c0_i32, %c0_i32_0 : i32, i32
  }
  func.func @transform_4(%arg0: i32) -> (i32, i32) {
    %c0_i32 = arith.constant 0 : i32
    %c0_i32_0 = arith.constant 0 : i32
    %c0_i32_1 = arith.constant 0 : i32
    return %c0_i32, %c0_i32_0 : i32, i32
  }
  func.func @transform_5(%arg0: i32) -> (i32, i32) {
    %c0_i32 = arith.constant 0 : i32
    %c0_i32_0 = arith.constant 0 : i32
    %c0_i32_1 = arith.constant 0 : i32
    return %c0_i32, %c0_i32_0 : i32, i32
  }
  func.func @transform_6(%arg0: i32) -> (i32, i32) {
    %c0_i32 = arith.constant 0 : i32
    %c0_i32_0 = arith.constant 0 : i32
    return %arg0, %c0_i32 : i32, i32
  }
}

module attributes {stable_mosaic.version = 11 : i64} {
  func.func @conv3_kernel(%arg0: i32, %arg1: memref<256x128xf32, #tpu.memory_space<vmem>>, %arg2: memref<1x128xf32, #tpu.memory_space<vmem>>, %arg3: memref<1x128xf32, #tpu.memory_space<vmem>>, %arg4: memref<128x128xf32, #tpu.memory_space<vmem>>, %arg5: memref<256x128xf32, #tpu.memory_space<vmem>>, %arg6: memref<2x128xf32, #tpu.memory_space<vmem>>) attributes {dimension_semantics = [#tpu.dimension_semantics<arbitrary>], iteration_bounds = array<i64: 2>, scalar_prefetch = 0 : i64, scratch_operands = 0 : i64, tpu.core_type = #tpu.core_type<tc>, window_params = [{transform_indices = @transform_0, window_bounds = array<i64: 256, 128>}, {pipeline_mode = #tpu.pipeline_mode<synchronous>, transform_indices = @transform_1, window_bounds = array<i64: 1, 128>}, {pipeline_mode = #tpu.pipeline_mode<synchronous>, transform_indices = @transform_2, window_bounds = array<i64: 1, 128>}, {pipeline_mode = #tpu.pipeline_mode<synchronous>, transform_indices = @transform_3, window_bounds = array<i64: 128, 128>}, {transform_indices = @transform_4, window_bounds = array<i64: 256, 128>}, {pipeline_mode = #tpu.pipeline_mode<synchronous>, transform_indices = @transform_5, window_bounds = array<i64: 2, 128>}]} {
    %c0 = arith.constant 0 : index
    %c0_0 = arith.constant 0 : index
    %0 = vector.load %arg1[%c0, %c0_0] : memref<256x128xf32, #tpu.memory_space<vmem>>, vector<256x128xf32>
    %c0_1 = arith.constant 0 : index
    %c0_2 = arith.constant 0 : index
    %1 = vector.load %arg2[%c0_1, %c0_2] : memref<1x128xf32, #tpu.memory_space<vmem>>, vector<1x128xf32>
    %2 = vector.broadcast %1 : vector<1x128xf32> to vector<256x128xf32>
    %3 = arith.mulf %0, %2 : vector<256x128xf32>
    %c0_3 = arith.constant 0 : index
    %c0_4 = arith.constant 0 : index
    %4 = vector.load %arg3[%c0_3, %c0_4] : memref<1x128xf32, #tpu.memory_space<vmem>>, vector<1x128xf32>
    %5 = vector.broadcast %4 : vector<1x128xf32> to vector<256x128xf32>
    %6 = arith.addf %3, %5 : vector<256x128xf32>
    %cst = arith.constant 0.000000e+00 : f32
    %7 = vector.broadcast %cst : f32 to vector<256x128xf32>
    %8 = arith.maximumf %6, %7 : vector<256x128xf32>
    %c0_5 = arith.constant 0 : index
    %c0_6 = arith.constant 0 : index
    %9 = vector.load %arg4[%c0_5, %c0_6] : memref<128x128xf32, #tpu.memory_space<vmem>>, vector<128x128xf32>
    %cst_7 = arith.constant dense<0.000000e+00> : vector<256x128xf32>
    %10 = tpu.matmul %8, %9, %cst_7 {dimension_numbers = #tpu.dot_dimension_numbers<[1], [0], [0], [1], [0, 0, 1, 1], [], []>} : vector<256x128xf32>, vector<128x128xf32>, vector<256x128xf32> -> vector<256x128xf32>
    %c0_8 = arith.constant 0 : index
    %c0_9 = arith.constant 0 : index
    %11 = vector.load %arg5[%c0_8, %c0_9] : memref<256x128xf32, #tpu.memory_space<vmem>>, vector<256x128xf32>
    tpu.vector_store %arg5[%c0_8, %c0_9], %10 {strides = array<i32>} : memref<256x128xf32, #tpu.memory_space<vmem>>, vector<256x128xf32>,
    %cst_10 = arith.constant dense<0.000000e+00> : vector<128xf32>
    %12 = vector.multi_reduction <add>, %10, %cst_10 [0] : vector<256x128xf32> to vector<128xf32>
    %13 = vector.shape_cast %12 : vector<128xf32> to vector<1x128xf32>
    %14 = arith.mulf %10, %10 : vector<256x128xf32>
    %cst_11 = arith.constant dense<0.000000e+00> : vector<128xf32>
    %15 = vector.multi_reduction <add>, %14, %cst_11 [0] : vector<256x128xf32> to vector<128xf32>
    %16 = vector.shape_cast %15 : vector<128xf32> to vector<1x128xf32>
    %17 = tpu.concatenate %13, %16 in 0 : vector<1x128xf32>, vector<1x128xf32> -> vector<2x128xf32>
    %c0_i32 = arith.constant 0 : i32
    %18 = arith.cmpi eq, %arg0, %c0_i32 : i32
    %19 = arith.extui %18 : i1 to i32
    %c0_i32_12 = arith.constant 0 : i32
    %20 = arith.cmpi ne, %19, %c0_i32_12 : i32
    scf.if %20 {
      %cst_17 = arith.constant 0.000000e+00 : f32
      %24 = vector.broadcast %cst_17 : f32 to vector<2x128xf32>
      %c0_18 = arith.constant 0 : index
      %c0_19 = arith.constant 0 : index
      %25 = vector.load %arg6[%c0_18, %c0_19] : memref<2x128xf32, #tpu.memory_space<vmem>>, vector<2x128xf32>
      tpu.vector_store %arg6[%c0_18, %c0_19], %24 {strides = array<i32>} : memref<2x128xf32, #tpu.memory_space<vmem>>, vector<2x128xf32>,
    } else {
    }
    %c0_13 = arith.constant 0 : index
    %c0_14 = arith.constant 0 : index
    %21 = vector.load %arg6[%c0_13, %c0_14] : memref<2x128xf32, #tpu.memory_space<vmem>>, vector<2x128xf32>
    %22 = arith.addf %21, %17 : vector<2x128xf32>
    %c0_15 = arith.constant 0 : index
    %c0_16 = arith.constant 0 : index
    %23 = vector.load %arg6[%c0_15, %c0_16] : memref<2x128xf32, #tpu.memory_space<vmem>>, vector<2x128xf32>
    tpu.vector_store %arg6[%c0_15, %c0_16], %22 {strides = array<i32>} : memref<2x128xf32, #tpu.memory_space<vmem>>, vector<2x128xf32>,
    return
  }
  func.func @transform_0(%arg0: i32) -> (i32, i32) {
    %c0_i32 = arith.constant 0 : i32
    %c0_i32_0 = arith.constant 0 : i32
    return %arg0, %c0_i32 : i32, i32
  }
  func.func @transform_1(%arg0: i32) -> (i32, i32) {
    %c0_i32 = arith.constant 0 : i32
    %c0_i32_0 = arith.constant 0 : i32
    %c0_i32_1 = arith.constant 0 : i32
    return %c0_i32, %c0_i32_0 : i32, i32
  }
  func.func @transform_2(%arg0: i32) -> (i32, i32) {
    %c0_i32 = arith.constant 0 : i32
    %c0_i32_0 = arith.constant 0 : i32
    %c0_i32_1 = arith.constant 0 : i32
    return %c0_i32, %c0_i32_0 : i32, i32
  }
  func.func @transform_3(%arg0: i32) -> (i32, i32) {
    %c0_i32 = arith.constant 0 : i32
    %c0_i32_0 = arith.constant 0 : i32
    %c0_i32_1 = arith.constant 0 : i32
    return %c0_i32, %c0_i32_0 : i32, i32
  }
  func.func @transform_4(%arg0: i32) -> (i32, i32) {
    %c0_i32 = arith.constant 0 : i32
    %c0_i32_0 = arith.constant 0 : i32
    return %arg0, %c0_i32 : i32, i32
  }
  func.func @transform_5(%arg0: i32) -> (i32, i32) {
    %c0_i32 = arith.constant 0 : i32
    %c0_i32_0 = arith.constant 0 : i32
    %c0_i32_1 = arith.constant 0 : i32
    return %c0_i32, %c0_i32_0 : i32, i32
  }
}

</mosaic_0001>

<llo_original>
// kernel: bottleneck_forward.4
$region0: #{bottleneck_forward.4}
  #allocation0 [shape = 'u32[]', space=smem, size = 0x4, offset = 0x4, fixed_abs, tag = 'smem constant byte address 0x4 - core index']
  #allocation1 [shape = 'u32[144,128]{1,0:T(1,128)}', space=vmem, size = 0x12000, scoped, tag = 'internal scratch']
  %s0 = inlined_call_operand.vmem [shape: f32[512,128], index: 0, kind: input, shape index: {}]
  %s1 = inlined_call_operand.vmem [shape: f32[128,256], index: 1, kind: input, shape index: {}]
  %s2 = inlined_call_operand.vmem [shape: f32[512,128], index: 2, kind: output, shape index: {0}]
  %s3 = inlined_call_operand.vmem [shape: f32[512,128], index: 3, kind: output, shape index: {1}]
  %s4 = inlined_call_operand.vmem [shape: f32[2,256], index: 4, kind: output, shape index: {2}]
  %5 = xla_tuple %s2, %s3, %s4
  %s6 = sld [smem:[#allocation0]]
  $region61: #{bottleneck_forward.4} parent=0
    _
  %s8 = ssub.s32 1, %s6
  %s9 = scalar_select 0, %s8, %s6
  loop: start=0, step=1, limit=4
  $region2: #{bottleneck_forward.4} parent=0 // loop_pre_header
    _
  $region3: #{bottleneck_forward.4} parent=0 // loop_header
    %s11 = sphi 0, %s15
    %p12 = scmp.ge.s32.totalorder %s11, 4
    %s21 = sphi 0, %s23
    %s24 = sphi 0, %s21
    %s25 = sphi 0, %s24
    %s41 = sphi 0, %s25
    %s45 = sphi 0, %s45
    %s47 = sphi 0, %s45
    %s48 = sphi 0, %s47
    %s62 = sphi 0, %s48
    %s68 = sphi 0, %s70
    %s71 = sphi 0, %s68
    %s72 = sphi 0, %s71
    %s88 = sphi 0, %s72
    %s94 = sphi 0, %s96
    %s97 = sphi 0, %s94
    %s98 = sphi 0, %s97
    %s114 = sphi 0, %s98
    %s118 = sphi 0, %s118
    %s120 = sphi 0, %s118
    %s121 = sphi 0, %s120
    %s135 = sphi 0, %s121
  $region4: #{bottleneck_forward.4} parent=0 // loop_header_branch
    %14 = sbr.rel (%p12) target = $region8
  $region5: #{bottleneck_forward.4} parent=0 // loop_body
    %s16 = ssub.s32 %s11, 1
    %s17 = ssub.s32 %s11, 2
    %s18 = sadd.s32 %s11, 1
    %s19 = ssub.s32 %s11, %s18
    %p20 = scmp.eq.s32.totalorder %s19, 0
    %s22 = sadd.s32 %s21, 1
    %s23 = scalar_select %p20, %s21, %s22
    %p26 = pneg %p20
    %p27 = scmp.eq.s32.totalorder %s11, 1
    %p28 = por %p26, %p27
    %p29 = scmp.ne.s32.totalorder %s21, %s24
    %p30 = scmp.eq.s32.totalorder %s11, 0
    %p31 = por %p29, %p30
    %p32 = scmp.ne.s32.totalorder %s21, %s24
    %p33 = scmp.eq.s32.totalorder %s16, 1
    %p34 = por %p32, %p33
    %p35 = scmp.ne.s32.totalorder %s24, %s25
    %p36 = scmp.eq.s32.totalorder %s16, 0
    %p37 = por %p35, %p36
    %p38 = scmp.ne.s32.totalorder %s24, %s25
    %p39 = scmp.eq.s32.totalorder %s17, 1
    %p40 = por %p38, %p39
    %p42 = scmp.ne.s32.totalorder %s25, %s41
    %p43 = scmp.eq.s32.totalorder %s17, 0
    %p44 = por %p42, %p43
    %s46 = sadd.s32 %s45, 1
    %p49 = scmp.eq.s32.totalorder %s11, 1
    %p50 = scmp.ne.s32.totalorder %s45, %s47
    %p51 = scmp.eq.s32.totalorder %s11, 0
    %p52 = por %p50, %p51
    %p53 = scmp.ne.s32.totalorder %s45, %s47
    %p54 = scmp.eq.s32.totalorder %s16, 1
    %p55 = por %p53, %p54
    %p56 = scmp.ne.s32.totalorder %s47, %s48
    %p57 = scmp.eq.s32.totalorder %s16, 0
    %p58 = por %p56, %p57
    %p59 = scmp.ne.s32.totalorder %s47, %s48
    %p60 = scmp.eq.s32.totalorder %s17, 1
    %p61 = por %p59, %p60
    %p63 = scmp.ne.s32.totalorder %s48, %s62
    %p64 = scmp.eq.s32.totalorder %s17, 0
    %p65 = por %p63, %p64
    %s66 = ssub.s32 %s11, %s18
    %p67 = scmp.eq.s32.totalorder %s66, 0
    %s69 = sadd.s32 %s68, 1
    %s70 = scalar_select %p67, %s68, %s69
    %p73 = pneg %p67
    %p74 = scmp.eq.s32.totalorder %s11, 1
    %p75 = por %p73, %p74
    %p76 = scmp.ne.s32.totalorder %s68, %s71
    %p77 = scmp.eq.s32.totalorder %s11, 0
    %p78 = por %p76, %p77
    %p79 = scmp.ne.s32.totalorder %s68, %s71
    %p80 = scmp.eq.s32.totalorder %s16, 1
    %p81 = por %p79, %p80
    %p82 = scmp.ne.s32.totalorder %s71, %s72
    %p83 = scmp.eq.s32.totalorder %s16, 0
    %p84 = por %p82, %p83
    %p85 = scmp.ne.s32.totalorder %s71, %s72
    %p86 = scmp.eq.s32.totalorder %s17, 1
    %p87 = por %p85, %p86
    %p89 = scmp.ne.s32.totalorder %s72, %s88
    %p90 = scmp.eq.s32.totalorder %s17, 0
    %p91 = por %p89, %p90
    %s92 = ssub.s32 %s11, %s18
    %p93 = scmp.eq.s32.totalorder %s92, 0
    %s95 = sadd.s32 %s94, 1
    %s96 = scalar_select %p93, %s94, %s95
    %p99 = pneg %p93
    %p100 = scmp.eq.s32.totalorder %s11, 1
    %p101 = por %p99, %p100
    %p102 = scmp.ne.s32.totalorder %s94, %s97
    %p103 = scmp.eq.s32.totalorder %s11, 0
    %p104 = por %p102, %p103
    %p105 = scmp.ne.s32.totalorder %s94, %s97
    %p106 = scmp.eq.s32.totalorder %s16, 1
    %p107 = por %p105, %p106
    %p108 = scmp.ne.s32.totalorder %s97, %s98
    %p109 = scmp.eq.s32.totalorder %s16, 0
    %p110 = por %p108, %p109
    %p111 = scmp.ne.s32.totalorder %s97, %s98
    %p112 = scmp.eq.s32.totalorder %s17, 1
    %p113 = por %p111, %p112
    %p115 = scmp.ne.s32.totalorder %s98, %s114
    %p116 = scmp.eq.s32.totalorder %s17, 0
    %p117 = por %p115, %p116
    %s119 = sadd.s32 %s118, 1
    %p122 = scmp.eq.s32.totalorder %s11, 1
    %p123 = scmp.ne.s32.totalorder %s118, %s120
    %p124 = scmp.eq.s32.totalorder %s11, 0
    %p125 = por %p123, %p124
    %p126 = scmp.ne.s32.totalorder %s118, %s120
    %p127 = scmp.eq.s32.totalorder %s16, 1
    %p128 = por %p126, %p127
    %p129 = scmp.ne.s32.totalorder %s120, %s121
    %p130 = scmp.eq.s32.totalorder %s16, 0
    %p131 = por %p129, %p130
    %p132 = scmp.ne.s32.totalorder %s120, %s121
    %p133 = scmp.eq.s32.totalorder %s17, 1
    %p134 = por %p132, %p133
    %p136 = scmp.ne.s32.totalorder %s121, %s135
    %p137 = scmp.eq.s32.totalorder %s17, 0
    %p138 = por %p136, %p137
    %p139 = scmp.le.s32.totalorder 1, %s11
    %p140 = scmp.lt.s32.totalorder %s11, 3
    %p141 = pnand %p139, %p140
    %p142 = pneg %p141
    // Predicated region
    $region9: #{bottleneck_forward.4} parent=5 // pred_check
      _
    $region10: #{bottleneck_forward.4} parent=5 // pred_check_branch
      %144 = sbr.rel (%p141) target = $region12
    $region11: #{bottleneck_forward.4} parent=5 // pred_region
      %s145 = ssub.s32 %s11, 1
      // Predicated region
      $region13: #{bottleneck_forward.4} parent=11 // pred_check
        %p146 = pneg %p58
      $region14: #{bottleneck_forward.4} parent=11 // pred_check_branch
        %148 = sbr.rel (%p146) target = $region16
      $region15: #{bottleneck_forward.4} parent=11 // pred_region
        _
      $region16: #{bottleneck_forward.4} parent=11 // pred_fallthru
        _
    $region12: #{bottleneck_forward.4} parent=5 // pred_fallthru
      _
    %p149 = scmp.lt.s32.totalorder %s11, 2
    // Predicated region
    $region17: #{bottleneck_forward.4} parent=5 // pred_check
      %p150 = pneg %p149
    $region18: #{bottleneck_forward.4} parent=5 // pred_check_branch
      %152 = sbr.rel (%p150) target = $region20
    $region19: #{bottleneck_forward.4} parent=5 // pred_region
      // Predicated region
      $region21: #{bottleneck_forward.4} parent=19 // pred_check
        %p153 = pneg %p31
      $region22: #{bottleneck_forward.4} parent=19 // pred_check_branch
        %155 = sbr.rel (%p153) target = $region24
      $region23: #{bottleneck_forward.4} parent=19 // pred_region
        %s156 = smul.u32 32, %s11
        %p157 = scmp.lt.s32.totalorder %s156, 63
        %s158 = scalar_select %p157, %s156, 63
        %s159 = smul.addr %s158, 8
        %s160 = scalar_lea.vmem %s0, %s159
        %s161 = smul.u32 32, %s11
      $region24: #{bottleneck_forward.4} parent=19 // pred_fallthru
        _
    $region20: #{bottleneck_forward.4} parent=5 // pred_fallthru
      _
    %p162 = scmp.le.s32.totalorder 1, %s11
    %p163 = scmp.lt.s32.totalorder %s11, 3
    %p164 = pnand %p162, %p163
    %p165 = pneg %p164
    // Predicated region
    $region25: #{bottleneck_forward.4} parent=5 // pred_check
      _
    $region26: #{bottleneck_forward.4} parent=5 // pred_check_branch
      %167 = sbr.rel (%p164) target = $region28
    $region27: #{bottleneck_forward.4} parent=5 // pred_region
      %s168 = ssub.s32 %s11, 1
      %s169 = smul.u32 32, %s16
      %p170 = scmp.lt.s32.totalorder %s169, 63
      %s171 = scalar_select %p170, %s169, 63
      %s172 = smul.addr %s171, 8
      %s173 = scalar_lea.vmem %s0, %s172
      %p174 = pneg %p37
      %p175 = pneg %p34
      %p176 = pneg %p58
      %p177 = pneg %p55
      %p178 = pneg %p84
      %p179 = pneg %p81
      %s180 = smul.u32 32, %s16
      %p181 = scmp.lt.s32.totalorder %s180, 63
      %s182 = scalar_select %p181, %s180, 63
      %s183 = smul.addr %s182, 8
      %s184 = scalar_lea.vmem %s2, %s183
      %p185 = pneg %p110
      %p186 = pneg %p107
      %s187 = smul.u32 32, %s16
      %p188 = scmp.lt.s32.totalorder %s187, 63
      %s189 = scalar_select %p188, %s187, 63
      %s190 = smul.addr %s189, 8
      %s191 = scalar_lea.vmem %s3, %s190
      %p192 = pneg %p131
      %p193 = pneg %p128
      %s194 = smul.u32 32, %s16
      %p195 = scmp.lt.s32.totalorder %s194, 63
      %s196 = scalar_select %p195, %s194, 63
      %s197 = smul.addr %s196, 8
      %s198 = scalar_lea.vmem %s0, %s197
      %s199 = smul.u32 32, %s16
      %s200 = smul.u32 32, %s16
      %p201 = scmp.lt.s32.totalorder %s200, 63
      %s202 = scalar_select %p201, %s200, 63
      %s203 = smul.addr %s202, 8
      %s204 = scalar_lea.vmem %s2, %s203
      %s205 = smul.u32 32, %s16
      %s206 = smul.u32 32, %s16
      %p207 = scmp.lt.s32.totalorder %s206, 63
      %s208 = scalar_select %p207, %s206, 63
      %s209 = smul.addr %s208, 8
      %s210 = scalar_lea.vmem %s3, %s209
      %s211 = smul.u32 32, %s16
      %v212 = vld [vmem:[%s198] sm:$0xff]
      %v213 = vld [vmem:[%s198 + $0x8] sm:$0xff]
      %v214 = vld [vmem:[%s198 + $0x10] sm:$0xff]
      %v215 = vld [vmem:[%s198 + $0x18] sm:$0xff]
      %v216 = vld [vmem:[%s198 + $0x20] sm:$0xff]
      %v217 = vld [vmem:[%s198 + $0x28] sm:$0xff]
      %v218 = vld [vmem:[%s198 + $0x30] sm:$0xff]
      %v219 = vld [vmem:[%s198 + $0x38] sm:$0xff]
      %v220 = vld [vmem:[%s198 + $0x40] sm:$0xff]
      %v221 = vld [vmem:[%s198 + $0x48] sm:$0xff]
      %v222 = vld [vmem:[%s198 + $0x50] sm:$0xff]
      %v223 = vld [vmem:[%s198 + $0x58] sm:$0xff]
      %v224 = vld [vmem:[%s198 + $0x60] sm:$0xff]
      %v225 = vld [vmem:[%s198 + $0x68] sm:$0xff]
      %v226 = vld [vmem:[%s198 + $0x70] sm:$0xff]
      %v227 = vld [vmem:[%s198 + $0x78] sm:$0xff]
      %v228 = vld [vmem:[%s198 + $0x80] sm:$0xff]
      %v229 = vld [vmem:[%s198 + $0x88] sm:$0xff]
      %v230 = vld [vmem:[%s198 + $0x90] sm:$0xff]
      %v231 = vld [vmem:[%s198 + $0x98] sm:$0xff]
      %v232 = vld [vmem:[%s198 + $0xa0] sm:$0xff]
      %v233 = vld [vmem:[%s198 + $0xa8] sm:$0xff]
      %v234 = vld [vmem:[%s198 + $0xb0] sm:$0xff]
      %v235 = vld [vmem:[%s198 + $0xb8] sm:$0xff]
      %v236 = vld [vmem:[%s198 + $0xc0] sm:$0xff]
      %v237 = vld [vmem:[%s198 + $0xc8] sm:$0xff]
      %v238 = vld [vmem:[%s198 + $0xd0] sm:$0xff]
      %v239 = vld [vmem:[%s198 + $0xd8] sm:$0xff]
      %v240 = vld [vmem:[%s198 + $0xe0] sm:$0xff]
      %v241 = vld [vmem:[%s198 + $0xe8] sm:$0xff]
      %v242 = vld [vmem:[%s198 + $0xf0] sm:$0xff]
      %v243 = vld [vmem:[%s198 + $0xf8] sm:$0xff]
      %v244 = vld [vmem:[%s1] sm:$0xff]
      %v245 = vld [vmem:[%s1 + $0x8] sm:$0xff]
      %v246 = vld [vmem:[%s1 + $0x10] sm:$0xff]
      %v247 = vld [vmem:[%s1 + $0x18] sm:$0xff]
      %v248 = vld [vmem:[%s1 + $0x20] sm:$0xff]
      %v249 = vld [vmem:[%s1 + $0x28] sm:$0xff]
      %v250 = vld [vmem:[%s1 + $0x30] sm:$0xff]
      %v251 = vld [vmem:[%s1 + $0x38] sm:$0xff]
      %v252 = vld [vmem:[%s1 + $0x40] sm:$0xff]
      %v253 = vld [vmem:[%s1 + $0x48] sm:$0xff]
      %v254 = vld [vmem:[%s1 + $0x50] sm:$0xff]
      %v255 = vld [vmem:[%s1 + $0x58] sm:$0xff]
      %v256 = vld [vmem:[%s1 + $0x60] sm:$0xff]
      %v257 = vld [vmem:[%s1 + $0x68] sm:$0xff]
      %v258 = vld [vmem:[%s1 + $0x70] sm:$0xff]
      %v259 = vld [vmem:[%s1 + $0x78] sm:$0xff]
      %v260 = vld [vmem:[%s1 + $0x80] sm:$0xff]
      %v261 = vld [vmem:[%s1 + $0x88] sm:$0xff]
      %v262 = vld [vmem:[%s1 + $0x90] sm:$0xff]
      %v263 = vld [vmem:[%s1 + $0x98] sm:$0xff]
      %v264 = vld [vmem:[%s1 + $0xa0] sm:$0xff]
      %v265 = vld [vmem:[%s1 + $0xa8] sm:$0xff]
      %v266 = vld [vmem:[%s1 + $0xb0] sm:$0xff]
      %v267 = vld [vmem:[%s1 + $0xb8] sm:$0xff]
      %v268 = vld [vmem:[%s1 + $0xc0] sm:$0xff]
      %v269 = vld [vmem:[%s1 + $0xc8] sm:$0xff]
      %v270 = vld [vmem:[%s1 + $0xd0] sm:$0xff]
      %v271 = vld [vmem:[%s1 + $0xd8] sm:$0xff]
      %v272 = vld [vmem:[%s1 + $0xe0] sm:$0xff]
      %v273 = vld [vmem:[%s1 + $0xe8] sm:$0xff]
      %v274 = vld [vmem:[%s1 + $0xf0] sm:$0xff]
      %v275 = vld [vmem:[%s1 + $0xf8] sm:$0xff]
      %276 = vmatprep.subr.mxu0 %v245
      %277 = vmatpush1.msra.mxu0 %v244
      %278 = vmatprep.subr.mxu0 %v247
      %279 = vmatpush1.msra.mxu0 %v246
      %280 = vmatprep.subr.mxu0 %v249
      %281 = vmatpush1.msra.mxu0 %v248
      %282 = vmatprep.subr.mxu0 %v251
      %283 = vmatpush1.msra.mxu0 %v250
      %284 = vmatprep.subr.mxu0 %v253
      %285 = vmatpush1.msra.mxu0 %v252
      %286 = vmatprep.subr.mxu0 %v255
      %287 = vmatpush1.msra.mxu0 %v254
      %288 = vmatprep.subr.mxu0 %v257
      %289 = vmatpush1.msra.mxu0 %v256
      %290 = vmatprep.subr.mxu0 %v259
      %291 = vmatpush1.msra.mxu0 %v258
      %292 = vmatprep.subr.mxu0 %v261
      %293 = vmatpush1.msra.mxu0 %v260
      %294 = vmatprep.subr.mxu0 %v263
      %295 = vmatpush1.msra.mxu0 %v262
      %296 = vmatprep.subr.mxu0 %v265
      %297 = vmatpush1.msra.mxu0 %v264
      %298 = vmatprep.subr.mxu0 %v267
      %299 = vmatpush1.msra.mxu0 %v266
      %300 = vmatprep.subr.mxu0 %v269
      %301 = vmatpush1.msra.mxu0 %v268
      %302 = vmatprep.subr.mxu0 %v271
      %303 = vmatpush1.msra.mxu0 %v270
      %304 = vmatprep.subr.mxu0 %v273
      %305 = vmatpush1.msra.mxu0 %v272
      %306 = vmatprep.subr.mxu0 %v275
      %307 = vmatpush1.msra.mxu0 %v274
      %308 = vmatprep.subr.mxu0 0.0
      %309 = vmatpush1.msra.mxu0 0.0
      %310 = vmatprep.subr.mxu0 0.0
      %311 = vmatpush1.msra.mxu0 0.0
      %312 = vmatprep.subr.mxu0 0.0
      %313 = vmatpush1.msra.mxu0 0.0
      %314 = vmatprep.subr.mxu0 0.0
      %315 = vmatpush1.msra.mxu0 0.0
      %316 = vmatprep.subr.mxu0 0.0
      %317 = vmatpush1.msra.mxu0 0.0
      %318 = vmatprep.subr.mxu0 0.0
      %319 = vmatpush1.msra.mxu0 0.0
      %320 = vmatprep.subr.mxu0 0.0
      %321 = vmatpush1.msra.mxu0 0.0
      %322 = vmatprep.subr.mxu0 0.0
      %323 = vmatpush1.msra.mxu0 0.0
      %324 = vmatprep.subr.mxu0 0.0
      %325 = vmatpush1.msra.mxu0 0.0
      %326 = vmatprep.subr.mxu0 0.0
      %327 = vmatpush1.msra.mxu0 0.0
      %328 = vmatprep.subr.mxu0 0.0
      %329 = vmatpush1.msra.mxu0 0.0
      %330 = vmatprep.subr.mxu0 0.0
      %331 = vmatpush1.msra.mxu0 0.0
      %332 = vmatprep.subr.mxu0 0.0
      %333 = vmatpush1.msra.mxu0 0.0
      %334 = vmatprep.subr.mxu0 0.0
      %335 = vmatpush1.msra.mxu0 0.0
      %336 = vmatprep.subr.mxu0 0.0
      %337 = vmatpush1.msra.mxu0 0.0
      %338 = vmatprep.subr.mxu0 0.0
      %339 = vmatpush1.msra.mxu0 0.0
      %340 = vmatprep.mubr.f32.mxu0 0.0
      %341 = vmatmul.mubr.f32.gmra.mrb[0].mxu0 %v212
      %v342 = vpop.f32.mrb[0].mxu0
      %v343 = vadd.f32 0.0, %v342
      %v344 = vpop.f32.mrb[0].mxu0
      %v345 = vadd.f32 0.0, %v344
      %346 = vmatprep.mubr.f32.mxu0 0.0
      %347 = vmatmul.mubr.f32.gmra.mrb[0].mxu0 %v213
      %v348 = vpop.f32.mrb[0].mxu0
      %v349 = vadd.f32 0.0, %v348
      %v350 = vpop.f32.mrb[0].mxu0
      %v351 = vadd.f32 0.0, %v350
      %352 = vmatprep.mubr.f32.mxu0 0.0
      %353 = vmatmul.mubr.f32.gmra.mrb[0].mxu0 %v214
      %v354 = vpop.f32.mrb[0].mxu0
      %v355 = vadd.f32 0.0, %v354
      %v356 = vpop.f32.mrb[0].mxu0
      %v357 = vadd.f32 0.0, %v356
      %358 = vmatprep.mubr.f32.mxu0 0.0
      %359 = vmatmul.mubr.f32.gmra.mrb[0].mxu0 %v215
      %v360 = vpop.f32.mrb[0].mxu0
      %v361 = vadd.f32 0.0, %v360
      %v362 = vpop.f32.mrb[0].mxu0
      %v363 = vadd.f32 0.0, %v362
      %364 = vmatprep.mubr.f32.mxu0 0.0
      %365 = vmatmul.mubr.f32.gmra.mrb[0].mxu0 %v216
      %v366 = vpop.f32.mrb[0].mxu0
      %v367 = vadd.f32 0.0, %v366
      %v368 = vpop.f32.mrb[0].mxu0
      %v369 = vadd.f32 0.0, %v368
      %370 = vmatprep.mubr.f32.mxu0 0.0
      %371 = vmatmul.mubr.f32.gmra.mrb[0].mxu0 %v217
      %v372 = vpop.f32.mrb[0].mxu0
      %v373 = vadd.f32 0.0, %v372
      %v374 = vpop.f32.mrb[0].mxu0
      %v375 = vadd.f32 0.0, %v374
      %376 = vmatprep.mubr.f32.mxu0 0.0
      %377 = vmatmul.mubr.f32.gmra.mrb[0].mxu0 %v218
      %v378 = vpop.f32.mrb[0].mxu0
      %v379 = vadd.f32 0.0, %v378
      %v380 = vpop.f32.mrb[0].mxu0
      %v381 = vadd.f32 0.0, %v380
      %382 = vmatprep.mubr.f32.mxu0 0.0
      %383 = vmatmul.mubr.f32.gmra.mrb[0].mxu0 %v219
      %v384 = vpop.f32.mrb[0].mxu0
      %v385 = vadd.f32 0.0, %v384
      %v386 = vpop.f32.mrb[0].mxu0
      %v387 = vadd.f32 0.0, %v386
      %388 = vmatprep.mubr.f32.mxu0 0.0
      %389 = vmatmul.mubr.f32.gmra.mrb[0].mxu0 %v220
      %v390 = vpop.f32.mrb[0].mxu0
      %v391 = vadd.f32 0.0, %v390
      %v392 = vpop.f32.mrb[0].mxu0
      %v393 = vadd.f32 0.0, %v392
      %394 = vmatprep.mubr.f32.mxu0 0.0
      %395 = vmatmul.mubr.f32.gmra.mrb[0].mxu0 %v221
      %v396 = vpop.f32.mrb[0].mxu0
      %v397 = vadd.f32 0.0, %v396
      %v398 = vpop.f32.mrb[0].mxu0
      %v399 = vadd.f32 0.0, %v398
      %400 = vmatprep.mubr.f32.mxu0 0.0
      %401 = vmatmul.mubr.f32.gmra.mrb[0].mxu0 %v222
      %v402 = vpop.f32.mrb[0].mxu0
      %v403 = vadd.f32 0.0, %v402
      %v404 = vpop.f32.mrb[0].mxu0
      %v405 = vadd.f32 0.0, %v404
      %406 = vmatprep.mubr.f32.mxu0 0.0
      %407 = vmatmul.mubr.f32.gmra.mrb[0].mxu0 %v223
      %v408 = vpop.f32.mrb[0].mxu0
      %v409 = vadd.f32 0.0, %v408
      %v410 = vpop.f32.mrb[0].mxu0
      %v411 = vadd.f32 0.0, %v410
      %412 = vmatprep.mubr.f32.mxu0 0.0
      %413 = vmatmul.mubr.f32.gmra.mrb[0].mxu0 %v224
      %v414 = vpop.f32.mrb[0].mxu0
      %v415 = vadd.f32 0.0, %v414
      %v416 = vpop.f32.mrb[0].mxu0
      %v417 = vadd.f32 0.0, %v416
      %418 = vmatprep.mubr.f32.mxu0 0.0
      %419 = vmatmul.mubr.f32.gmra.mrb[0].mxu0 %v225
      %v420 = vpop.f32.mrb[0].mxu0
      %v421 = vadd.f32 0.0, %v420
      %v422 = vpop.f32.mrb[0].mxu0
      %v423 = vadd.f32 0.0, %v422
      %424 = vmatprep.mubr.f32.mxu0 0.0
      %425 = vmatmul.mubr.f32.gmra.mrb[0].mxu0 %v226
      %v426 = vpop.f32.mrb[0].mxu0
      %v427 = vadd.f32 0.0, %v426
      %v428 = vpop.f32.mrb[0].mxu0
      %v429 = vadd.f32 0.0, %v428
      %430 = vmatprep.mubr.f32.mxu0 0.0
      %431 = vmatmul.mubr.f32.gmra.mrb[0].mxu0 %v227
      %v432 = vpop.f32.mrb[0].mxu0
      %v433 = vadd.f32 0.0, %v432
      %v434 = vpop.f32.mrb[0].mxu0
      %v435 = vadd.f32 0.0, %v434
      %436 = vmatprep.mubr.f32.mxu0 0.0
      %437 = vmatmul.mubr.f32.gmra.mrb[0].mxu0 %v228
      %v438 = vpop.f32.mrb[0].mxu0
      %v439 = vadd.f32 0.0, %v438
      %v440 = vpop.f32.mrb[0].mxu0
      %v441 = vadd.f32 0.0, %v440
      %442 = vmatprep.mubr.f32.mxu0 0.0
      %443 = vmatmul.mubr.f32.gmra.mrb[0].mxu0 %v229
      %v444 = vpop.f32.mrb[0].mxu0
      %v445 = vadd.f32 0.0, %v444
      %v446 = vpop.f32.mrb[0].mxu0
      %v447 = vadd.f32 0.0, %v446
      %448 = vmatprep.mubr.f32.mxu0 0.0
      %449 = vmatmul.mubr.f32.gmra.mrb[0].mxu0 %v230
      %v450 = vpop.f32.mrb[0].mxu0
      %v451 = vadd.f32 0.0, %v450
      %v452 = vpop.f32.mrb[0].mxu0
      %v453 = vadd.f32 0.0, %v452
      %454 = vmatprep.mubr.f32.mxu0 0.0
      %455 = vmatmul.mubr.f32.gmra.mrb[0].mxu0 %v231
      %v456 = vpop.f32.mrb[0].mxu0
      %v457 = vadd.f32 0.0, %v456
      %v458 = vpop.f32.mrb[0].mxu0
      %v459 = vadd.f32 0.0, %v458
      %460 = vmatprep.mubr.f32.mxu0 0.0
      %461 = vmatmul.mubr.f32.gmra.mrb[0].mxu0 %v232
      %v462 = vpop.f32.mrb[0].mxu0
      %v463 = vadd.f32 0.0, %v462
      %v464 = vpop.f32.mrb[0].mxu0
      %v465 = vadd.f32 0.0, %v464
      %466 = vmatprep.mubr.f32.mxu0 0.0
      %467 = vmatmul.mubr.f32.gmra.mrb[0].mxu0 %v233
      %v468 = vpop.f32.mrb[0].mxu0
      %v469 = vadd.f32 0.0, %v468
      %v470 = vpop.f32.mrb[0].mxu0
      %v471 = vadd.f32 0.0, %v470
      %472 = vmatprep.mubr.f32.mxu0 0.0
      %473 = vmatmul.mubr.f32.gmra.mrb[0].mxu0 %v234
      %v474 = vpop.f32.mrb[0].mxu0
      %v475 = vadd.f32 0.0, %v474
      %v476 = vpop.f32.mrb[0].mxu0
      %v477 = vadd.f32 0.0, %v476
      %478 = vmatprep.mubr.f32.mxu0 0.0
      %479 = vmatmul.mubr.f32.gmra.mrb[0].mxu0 %v235
      %v480 = vpop.f32.mrb[0].mxu0
      %v481 = vadd.f32 0.0, %v480
      %v482 = vpop.f32.mrb[0].mxu0
      %v483 = vadd.f32 0.0, %v482
      %484 = vmatprep.mubr.f32.mxu0 0.0
      %485 = vmatmul.mubr.f32.gmra.mrb[0].mxu0 %v236
      %v486 = vpop.f32.mrb[0].mxu0
      %v487 = vadd.f32 0.0, %v486
      %v488 = vpop.f32.mrb[0].mxu0
      %v489 = vadd.f32 0.0, %v488
      %490 = vmatprep.mubr.f32.mxu0 0.0
      %491 = vmatmul.mubr.f32.gmra.mrb[0].mxu0 %v237
      %v492 = vpop.f32.mrb[0].mxu0
      %v493 = vadd.f32 0.0, %v492
      %v494 = vpop.f32.mrb[0].mxu0
      %v495 = vadd.f32 0.0, %v494
      %496 = vmatprep.mubr.f32.mxu0 0.0
      %497 = vmatmul.mubr.f32.gmra.mrb[0].mxu0 %v238
      %v498 = vpop.f32.mrb[0].mxu0
      %v499 = vadd.f32 0.0, %v498
      %v500 = vpop.f32.mrb[0].mxu0
      %v501 = vadd.f32 0.0, %v500
      %502 = vmatprep.mubr.f32.mxu0 0.0
      %503 = vmatmul.mubr.f32.gmra.mrb[0].mxu0 %v239
      %v504 = vpop.f32.mrb[0].mxu0
      %v505 = vadd.f32 0.0, %v504
      %v506 = vpop.f32.mrb[0].mxu0
      %v507 = vadd.f32 0.0, %v506
      %508 = vmatprep.mubr.f32.mxu0 0.0
      %509 = vmatmul.mubr.f32.gmra.mrb[0].mxu0 %v240
      %v510 = vpop.f32.mrb[0].mxu0
      %v511 = vadd.f32 0.0, %v510
      %v512 = vpop.f32.mrb[0].mxu0
      %v513 = vadd.f32 0.0, %v512
      %514 = vmatprep.mubr.f32.mxu0 0.0
      %515 = vmatmul.mubr.f32.gmra.mrb[0].mxu0 %v241
      %v516 = vpop.f32.mrb[0].mxu0
      %v517 = vadd.f32 0.0, %v516
      %v518 = vpop.f32.mrb[0].mxu0
      %v519 = vadd.f32 0.0, %v518
      %520 = vmatprep.mubr.f32.mxu0 0.0
      %521 = vmatmul.mubr.f32.gmra.mrb[0].mxu0 %v242
      %v522 = vpop.f32.mrb[0].mxu0
      %v523 = vadd.f32 0.0, %v522
      %v524 = vpop.f32.mrb[0].mxu0
      %v525 = vadd.f32 0.0, %v524
      %526 = vmatprep.mubr.f32.mxu0 0.0
      %527 = vmatmul.mubr.f32.gmra.mrb[0].mxu0 %v243
      %v528 = vpop.f32.mrb[0].mxu0
      %v529 = vadd.f32 0.0, %v528
      %v530 = vpop.f32.mrb[0].mxu0
      %v531 = vadd.f32 0.0, %v530
      %532 = vdwg.mxu0
      %533 = vst [vmem:[%s204] sm:$0xff] %v343
      %534 = vst [vmem:[%s204 + $0x8] sm:$0xff] %v349
      %535 = vst [vmem:[%s204 + $0x10] sm:$0xff] %v355
      %536 = vst [vmem:[%s204 + $0x18] sm:$0xff] %v361
      %537 = vst [vmem:[%s204 + $0x20] sm:$0xff] %v367
      %538 = vst [vmem:[%s204 + $0x28] sm:$0xff] %v373
      %539 = vst [vmem:[%s204 + $0x30] sm:$0xff] %v379
      %540 = vst [vmem:[%s204 + $0x38] sm:$0xff] %v385
      %541 = vst [vmem:[%s204 + $0x40] sm:$0xff] %v391
      %542 = vst [vmem:[%s204 + $0x48] sm:$0xff] %v397
      %543 = vst [vmem:[%s204 + $0x50] sm:$0xff] %v403
      %544 = vst [vmem:[%s204 + $0x58] sm:$0xff] %v409
      %545 = vst [vmem:[%s204 + $0x60] sm:$0xff] %v415
      %546 = vst [vmem:[%s204 + $0x68] sm:$0xff] %v421
      %547 = vst [vmem:[%s204 + $0x70] sm:$0xff] %v427
      %548 = vst [vmem:[%s204 + $0x78] sm:$0xff] %v433
      %549 = vst [vmem:[%s204 + $0x80] sm:$0xff] %v439
      %550 = vst [vmem:[%s204 + $0x88] sm:$0xff] %v445
      %551 = vst [vmem:[%s204 + $0x90] sm:$0xff] %v451
      %552 = vst [vmem:[%s204 + $0x98] sm:$0xff] %v457
      %553 = vst [vmem:[%s204 + $0xa0] sm:$0xff] %v463
      %554 = vst [vmem:[%s204 + $0xa8] sm:$0xff] %v469
      %555 = vst [vmem:[%s204 + $0xb0] sm:$0xff] %v475
      %556 = vst [vmem:[%s204 + $0xb8] sm:$0xff] %v481
      %557 = vst [vmem:[%s204 + $0xc0] sm:$0xff] %v487
      %558 = vst [vmem:[%s204 + $0xc8] sm:$0xff] %v493
      %559 = vst [vmem:[%s204 + $0xd0] sm:$0xff] %v499
      %560 = vst [vmem:[%s204 + $0xd8] sm:$0xff] %v505
      %561 = vst [vmem:[%s204 + $0xe0] sm:$0xff] %v511
      %562 = vst [vmem:[%s204 + $0xe8] sm:$0xff] %v517
      %563 = vst [vmem:[%s204 + $0xf0] sm:$0xff] %v523
      %564 = vst [vmem:[%s204 + $0xf8] sm:$0xff] %v529
      %565 = vst [vmem:[%s210] sm:$0xff] %v345
      %566 = vst [vmem:[%s210 + $0x8] sm:$0xff] %v351
      %567 = vst [vmem:[%s210 + $0x10] sm:$0xff] %v357
      %568 = vst [vmem:[%s210 + $0x18] sm:$0xff] %v363
      %569 = vst [vmem:[%s210 + $0x20] sm:$0xff] %v369
      %570 = vst [vmem:[%s210 + $0x28] sm:$0xff] %v375
      %571 = vst [vmem:[%s210 + $0x30] sm:$0xff] %v381
      %572 = vst [vmem:[%s210 + $0x38] sm:$0xff] %v387
      %573 = vst [vmem:[%s210 + $0x40] sm:$0xff] %v393
      %574 = vst [vmem:[%s210 + $0x48] sm:$0xff] %v399
      %575 = vst [vmem:[%s210 + $0x50] sm:$0xff] %v405
      %576 = vst [vmem:[%s210 + $0x58] sm:$0xff] %v411
      %577 = vst [vmem:[%s210 + $0x60] sm:$0xff] %v417
      %578 = vst [vmem:[%s210 + $0x68] sm:$0xff] %v423
      %579 = vst [vmem:[%s210 + $0x70] sm:$0xff] %v429
      %580 = vst [vmem:[%s210 + $0x78] sm:$0xff] %v435
      %581 = vst [vmem:[%s210 + $0x80] sm:$0xff] %v441
      %582 = vst [vmem:[%s210 + $0x88] sm:$0xff] %v447
      %583 = vst [vmem:[%s210 + $0x90] sm:$0xff] %v453
      %584 = vst [vmem:[%s210 + $0x98] sm:$0xff] %v459
      %585 = vst [vmem:[%s210 + $0xa0] sm:$0xff] %v465
      %586 = vst [vmem:[%s210 + $0xa8] sm:$0xff] %v471
      %587 = vst [vmem:[%s210 + $0xb0] sm:$0xff] %v477
      %588 = vst [vmem:[%s210 + $0xb8] sm:$0xff] %v483
      %589 = vst [vmem:[%s210 + $0xc0] sm:$0xff] %v489
      %590 = vst [vmem:[%s210 + $0xc8] sm:$0xff] %v495
      %591 = vst [vmem:[%s210 + $0xd0] sm:$0xff] %v501
      %592 = vst [vmem:[%s210 + $0xd8] sm:$0xff] %v507
      %593 = vst [vmem:[%s210 + $0xe0] sm:$0xff] %v513
      %594 = vst [vmem:[%s210 + $0xe8] sm:$0xff] %v519
      %595 = vst [vmem:[%s210 + $0xf0] sm:$0xff] %v525
      %596 = vst [vmem:[%s210 + $0xf8] sm:$0xff] %v531
      %v597 = vadd.f32 %v343, %v349
      %v598 = vadd.f32 %v597, %v355
      %v599 = vadd.f32 %v598, %v361
      %v600 = vadd.f32 %v599, %v367
      %v601 = vadd.f32 %v600, %v373
      %v602 = vadd.f32 %v601, %v379
      %v603 = vadd.f32 %v602, %v385
      %v604 = vadd.f32 %v603, %v391
      %v605 = vadd.f32 %v604, %v397
      %v606 = vadd.f32 %v605, %v403
      %v607 = vadd.f32 %v606, %v409
      %v608 = vadd.f32 %v607, %v415
      %v609 = vadd.f32 %v608, %v421
      %v610 = vadd.f32 %v609, %v427
      %v611 = vadd.f32 %v610, %v433
      %v612 = vadd.f32 %v611, %v439
      %v613 = vadd.f32 %v612, %v445
      %v614 = vadd.f32 %v613, %v451
      %v615 = vadd.f32 %v614, %v457
      %v616 = vadd.f32 %v615, %v463
      %v617 = vadd.f32 %v616, %v469
      %v618 = vadd.f32 %v617, %v475
      %v619 = vadd.f32 %v618, %v481
      %v620 = vadd.f32 %v619, %v487
      %v621 = vadd.f32 %v620, %v493
      %v622 = vadd.f32 %v621, %v499
      %v623 = vadd.f32 %v622, %v505
      %v624 = vadd.f32 %v623, %v511
      %v625 = vadd.f32 %v624, %v517
      %v626 = vadd.f32 %v625, %v523
      %v627 = vadd.f32 %v626, %v529
      %v628 = vrot.slane %v627, 4
      %v629 = vadd.f32 %v627, %v628
      %v630 = vrot.slane %v629, 2
      %v631 = vadd.f32 %v629, %v630
      %v632 = vrot.slane %v631, 1
      %v633 = vadd.f32 %v631, %v632
      %v634 = vadd.f32 %v345, %v351
      %v635 = vadd.f32 %v634, %v357
      %v636 = vadd.f32 %v635, %v363
      %v637 = vadd.f32 %v636, %v369
      %v638 = vadd.f32 %v637, %v375
      %v639 = vadd.f32 %v638, %v381
      %v640 = vadd.f32 %v639, %v387
      %v641 = vadd.f32 %v640, %v393
      %v642 = vadd.f32 %v641, %v399
      %v643 = vadd.f32 %v642, %v405
      %v644 = vadd.f32 %v643, %v411
      %v645 = vadd.f32 %v644, %v417
      %v646 = vadd.f32 %v645, %v423
      %v647 = vadd.f32 %v646, %v429
      %v648 = vadd.f32 %v647, %v435
      %v649 = vadd.f32 %v648, %v441
      %v650 = vadd.f32 %v649, %v447
      %v651 = vadd.f32 %v650, %v453
      %v652 = vadd.f32 %v651, %v459
      %v653 = vadd.f32 %v652, %v465
      %v654 = vadd.f32 %v653, %v471
      %v655 = vadd.f32 %v654, %v477
      %v656 = vadd.f32 %v655, %v483
      %v657 = vadd.f32 %v656, %v489
      %v658 = vadd.f32 %v657, %v495
      %v659 = vadd.f32 %v658, %v501
      %v660 = vadd.f32 %v659, %v507
      %v661 = vadd.f32 %v660, %v513
      %v662 = vadd.f32 %v661, %v519
      %v663 = vadd.f32 %v662, %v525
      %v664 = vadd.f32 %v663, %v531
      %v665 = vrot.slane %v664, 4
      %v666 = vadd.f32 %v664, %v665
      %v667 = vrot.slane %v666, 2
      %v668 = vadd.f32 %v666, %v667
      %v669 = vrot.slane %v668, 1
      %v670 = vadd.f32 %v668, %v669
      %v671 = vmul.f32 %v343, %v343
      %v672 = vmul.f32 %v345, %v345
      %v673 = vmul.f32 %v349, %v349
      %v674 = vmul.f32 %v351, %v351
      %v675 = vmul.f32 %v355, %v355
      %v676 = vmul.f32 %v357, %v357
      %v677 = vmul.f32 %v361, %v361
      %v678 = vmul.f32 %v363, %v363
      %v679 = vmul.f32 %v367, %v367
      %v680 = vmul.f32 %v369, %v369
      %v681 = vmul.f32 %v373, %v373
      %v682 = vmul.f32 %v375, %v375
      %v683 = vmul.f32 %v379, %v379
      %v684 = vmul.f32 %v381, %v381
      %v685 = vmul.f32 %v385, %v385
      %v686 = vmul.f32 %v387, %v387
      %v687 = vmul.f32 %v391, %v391
      %v688 = vmul.f32 %v393, %v393
      %v689 = vmul.f32 %v397, %v397
      %v690 = vmul.f32 %v399, %v399
      %v691 = vmul.f32 %v403, %v403
      %v692 = vmul.f32 %v405, %v405
      %v693 = vmul.f32 %v409, %v409
      %v694 = vmul.f32 %v411, %v411
      %v695 = vmul.f32 %v415, %v415
      %v696 = vmul.f32 %v417, %v417
      %v697 = vmul.f32 %v421, %v421
      %v698 = vmul.f32 %v423, %v423
      %v699 = vmul.f32 %v427, %v427
      %v700 = vmul.f32 %v429, %v429
      %v701 = vmul.f32 %v433, %v433
      %v702 = vmul.f32 %v435, %v435
      %v703 = vmul.f32 %v439, %v439
      %v704 = vmul.f32 %v441, %v441
      %v705 = vmul.f32 %v445, %v445
      %v706 = vmul.f32 %v447, %v447
      %v707 = vmul.f32 %v451, %v451
      %v708 = vmul.f32 %v453, %v453
      %v709 = vmul.f32 %v457, %v457
      %v710 = vmul.f32 %v459, %v459
      %v711 = vmul.f32 %v463, %v463
      %v712 = vmul.f32 %v465, %v465
      %v713 = vmul.f32 %v469, %v469
      %v714 = vmul.f32 %v471, %v471
      %v715 = vmul.f32 %v475, %v475
      %v716 = vmul.f32 %v477, %v477
      %v717 = vmul.f32 %v481, %v481
      %v718 = vmul.f32 %v483, %v483
      %v719 = vmul.f32 %v487, %v487
      %v720 = vmul.f32 %v489, %v489
      %v721 = vmul.f32 %v493, %v493
      %v722 = vmul.f32 %v495, %v495
      %v723 = vmul.f32 %v499, %v499
      %v724 = vmul.f32 %v501, %v501
      %v725 = vmul.f32 %v505, %v505
      %v726 = vmul.f32 %v507, %v507
      %v727 = vmul.f32 %v511, %v511
      %v728 = vmul.f32 %v513, %v513
      %v729 = vmul.f32 %v517, %v517
      %v730 = vmul.f32 %v519, %v519
      %v731 = vmul.f32 %v523, %v523
      %v732 = vmul.f32 %v525, %v525
      %v733 = vmul.f32 %v529, %v529
      %v734 = vmul.f32 %v531, %v531
      %v735 = vadd.f32 %v671, %v673
      %v736 = vadd.f32 %v735, %v675
      %v737 = vadd.f32 %v736, %v677
      %v738 = vadd.f32 %v737, %v679
      %v739 = vadd.f32 %v738, %v681
      %v740 = vadd.f32 %v739, %v683
      %v741 = vadd.f32 %v740, %v685
      %v742 = vadd.f32 %v741, %v687
      %v743 = vadd.f32 %v742, %v689
      %v744 = vadd.f32 %v743, %v691
      %v745 = vadd.f32 %v744, %v693
      %v746 = vadd.f32 %v745, %v695
      %v747 = vadd.f32 %v746, %v697
      %v748 = vadd.f32 %v747, %v699
      %v749 = vadd.f32 %v748, %v701
      %v750 = vadd.f32 %v749, %v703
      %v751 = vadd.f32 %v750, %v705
      %v752 = vadd.f32 %v751, %v707
      %v753 = vadd.f32 %v752, %v709
      %v754 = vadd.f32 %v753, %v711
      %v755 = vadd.f32 %v754, %v713
      %v756 = vadd.f32 %v755, %v715
      %v757 = vadd.f32 %v756, %v717
      %v758 = vadd.f32 %v757, %v719
      %v759 = vadd.f32 %v758, %v721
      %v760 = vadd.f32 %v759, %v723
      %v761 = vadd.f32 %v760, %v725
      %v762 = vadd.f32 %v761, %v727
      %v763 = vadd.f32 %v762, %v729
      %v764 = vadd.f32 %v763, %v731
      %v765 = vadd.f32 %v764, %v733
      %v766 = vrot.slane %v765, 4
      %v767 = vadd.f32 %v765, %v766
      %v768 = vrot.slane %v767, 2
      %v769 = vadd.f32 %v767, %v768
      %v770 = vrot.slane %v769, 1
      %v771 = vadd.f32 %v769, %v770
      %v772 = vadd.f32 %v672, %v674
      %v773 = vadd.f32 %v772, %v676
      %v774 = vadd.f32 %v773, %v678
      %v775 = vadd.f32 %v774, %v680
      %v776 = vadd.f32 %v775, %v682
      %v777 = vadd.f32 %v776, %v684
      %v778 = vadd.f32 %v777, %v686
      %v779 = vadd.f32 %v778, %v688
      %v780 = vadd.f32 %v779, %v690
      %v781 = vadd.f32 %v780, %v692
      %v782 = vadd.f32 %v781, %v694
      %v783 = vadd.f32 %v782, %v696
      %v784 = vadd.f32 %v783, %v698
      %v785 = vadd.f32 %v784, %v700
      %v786 = vadd.f32 %v785, %v702
      %v787 = vadd.f32 %v786, %v704
      %v788 = vadd.f32 %v787, %v706
      %v789 = vadd.f32 %v788, %v708
      %v790 = vadd.f32 %v789, %v710
      %v791 = vadd.f32 %v790, %v712
      %v792 = vadd.f32 %v791, %v714
      %v793 = vadd.f32 %v792, %v716
      %v794 = vadd.f32 %v793, %v718
      %v795 = vadd.f32 %v794, %v720
      %v796 = vadd.f32 %v795, %v722
      %v797 = vadd.f32 %v796, %v724
      %v798 = vadd.f32 %v797, %v726
      %v799 = vadd.f32 %v798, %v728
      %v800 = vadd.f32 %v799, %v730
      %v801 = vadd.f32 %v800, %v732
      %v802 = vadd.f32 %v801, %v734
      %v803 = vrot.slane %v802, 4
      %v804 = vadd.f32 %v802, %v803
      %v805 = vrot.slane %v804, 2
      %v806 = vadd.f32 %v804, %v805
      %v807 = vrot.slane %v806, 1
      %v808 = vadd.f32 %v806, %v807
      %vm809 = vcmask 1040384
      %v810 = vsel %vm809, %v633, %v771
      %v811 = vsel %vm809, %v670, %v808
      %p812 = scmp.eq.s32.totalorder %s16, 0
      // Predicated region
      $region29: #{bottleneck_forward.4} parent=27 // pred_check
        %p813 = pneg %p812
      $region30: #{bottleneck_forward.4} parent=27 // pred_check_branch
        %815 = sbr.rel (%p813) target = $region32
      $region31: #{bottleneck_forward.4} parent=27 // pred_region
        %816 = vst [vmem:[%s4] sm:$0xf] 0.0
      $region32: #{bottleneck_forward.4} parent=27 // pred_fallthru
        _
      %v817 = vld [vmem:[%s4] sm:$0xf]
      %v820 = vcombine.low %v810, %v811
      %v822 = vunpack.c.l.s4 1983009808
      %v823 = vunpack.c.0.s8 %v822
      %v824 = vlaneseq
      %v825 = vshrl.u32 %v824, 7
      %v826 = vsub.s32 %v823, %v825
      %v827 = vrot.slane %v820, %v826
      %v829 = vadd.f32 %v817, %v827
      %830 = vst [vmem:[%s4] sm:$0xf] %v829
      %s831 = smul.u32 32, %s16
      %p832 = scmp.lt.s32.totalorder %s831, 63
      %s833 = scalar_select %p832, %s831, 63
      %s834 = smul.addr %s833, 8
      %s835 = scalar_lea.vmem %s2, %s834
      %s836 = smul.u32 32, %s16
      %p837 = scmp.lt.s32.totalorder %s836, 63
      %s838 = scalar_select %p837, %s836, 63
      %s839 = smul.addr %s838, 8
      %s840 = scalar_lea.vmem %s3, %s839
      // Predicated region
      $region33: #{bottleneck_forward.4} parent=27 // pred_check
        %p841 = pneg %p81
      $region34: #{bottleneck_forward.4} parent=27 // pred_check_branch
        %843 = sbr.rel (%p841) target = $region36
      $region35: #{bottleneck_forward.4} parent=27 // pred_region
        %s844 = smul.u32 32, %s16
      $region36: #{bottleneck_forward.4} parent=27 // pred_fallthru
        _
      // Predicated region
      $region37: #{bottleneck_forward.4} parent=27 // pred_check
        %p845 = pneg %p107
      $region38: #{bottleneck_forward.4} parent=27 // pred_check_branch
        %847 = sbr.rel (%p845) target = $region40
      $region39: #{bottleneck_forward.4} parent=27 // pred_region
        %s848 = smul.u32 32, %s16
      $region40: #{bottleneck_forward.4} parent=27 // pred_fallthru
        _
      // Predicated region
      $region41: #{bottleneck_forward.4} parent=27 // pred_check
        %p849 = pneg %p128
      $region42: #{bottleneck_forward.4} parent=27 // pred_check_branch
        %851 = sbr.rel (%p849) target = $region44
      $region43: #{bottleneck_forward.4} parent=27 // pred_region
        _
      $region44: #{bottleneck_forward.4} parent=27 // pred_fallthru
        _
      // Predicated region
      $region45: #{bottleneck_forward.4} parent=27 // pred_check
        %p852 = pneg %p128
      $region46: #{bottleneck_forward.4} parent=27 // pred_check_branch
        %854 = sbr.rel (%p852) target = $region48
      $region47: #{bottleneck_forward.4} parent=27 // pred_region
        _
      $region48: #{bottleneck_forward.4} parent=27 // pred_fallthru
        _
    $region28: #{bottleneck_forward.4} parent=5 // pred_fallthru
      _
    %p855 = scmp.le.s32.totalorder 2, %s11
    // Predicated region
    $region49: #{bottleneck_forward.4} parent=5 // pred_check
      %p856 = pneg %p855
    $region50: #{bottleneck_forward.4} parent=5 // pred_check_branch
      %858 = sbr.rel (%p856) target = $region52
    $region51: #{bottleneck_forward.4} parent=5 // pred_region
      %s859 = ssub.s32 %s11, 2
      // Predicated region
      $region53: #{bottleneck_forward.4} parent=51 // pred_check
        %p860 = pneg %p87
      $region54: #{bottleneck_forward.4} parent=51 // pred_check_branch
        %862 = sbr.rel (%p860) target = $region56
      $region55: #{bottleneck_forward.4} parent=51 // pred_region
        %s863 = smul.u32 32, %s17
        %p864 = scmp.lt.s32.totalorder %s863, 63
        %s865 = scalar_select %p864, %s863, 63
        %s866 = smul.addr %s865, 8
        %s867 = scalar_lea.vmem %s2, %s866
      $region56: #{bottleneck_forward.4} parent=51 // pred_fallthru
        _
      // Predicated region
      $region57: #{bottleneck_forward.4} parent=51 // pred_check
        %p868 = pneg %p113
      $region58: #{bottleneck_forward.4} parent=51 // pred_check_branch
        %870 = sbr.rel (%p868) target = $region60
      $region59: #{bottleneck_forward.4} parent=51 // pred_region
        %s871 = smul.u32 32, %s17
        %p872 = scmp.lt.s32.totalorder %s871, 63
        %s873 = scalar_select %p872, %s871, 63
        %s874 = smul.addr %s873, 8
        %s875 = scalar_lea.vmem %s3, %s874
      $region60: #{bottleneck_forward.4} parent=51 // pred_fallthru
        _
    $region52: #{bottleneck_forward.4} parent=5 // pred_fallthru
      _
  $region6: #{bottleneck_forward.4} parent=0 // loop_footer
    %s15 = sadd.s32 1, %s11
  $region7: #{bottleneck_forward.4} parent=0 // loop_footer_branch
    %10 = sbr.rel target = $region3
  $region8: #{bottleneck_forward.4} parent=0 // loop_exit
    _

// kernel: bottleneck_forward.5
$region0: #{bottleneck_forward.5}
  #allocation0 [shape = 'u32[]', space=smem, size = 0x4, offset = 0x4, fixed_abs, tag = 'smem constant byte address 0x4 - core index']
  #allocation1 [shape = 'u32[144,128]{1,0:T(1,128)}', space=vmem, size = 0x12000, scoped, tag = 'internal scratch']
  %s0 = inlined_call_operand.vmem [shape: f32[2,16,16,128], index: 0, kind: input, shape index: {}]
  %s1 = inlined_call_operand.vmem [shape: f32[1,128], index: 1, kind: input, shape index: {}]
  %s2 = inlined_call_operand.vmem [shape: f32[1,128], index: 2, kind: input, shape index: {}]
  %s3 = inlined_call_operand.vmem [shape: f32[1152,128], index: 3, kind: input, shape index: {}]
  %s4 = inlined_call_operand.vmem [shape: f32[2,16,16,128], index: 4, kind: output, shape index: {0}]
  %s5 = inlined_call_operand.vmem [shape: f32[2,128], index: 5, kind: output, shape index: {1}]
  %6 = xla_tuple %s4, %s5
  %s7 = sld [smem:[#allocation0]]
  $region61: #{bottleneck_forward.5} parent=0
    _
  %s9 = ssub.s32 1, %s7
  %s10 = scalar_select 0, %s9, %s7
  loop: start=0, step=1, limit=4
  $region2: #{bottleneck_forward.5} parent=0 // loop_pre_header
    _
  $region3: #{bottleneck_forward.5} parent=0 // loop_header
    %s12 = sphi 0, %s16
    %p13 = scmp.ge.s32.totalorder %s12, 4
    %s22 = sphi 0, %s24
    %s25 = sphi 0, %s22
    %s26 = sphi 0, %s25
    %s42 = sphi 0, %s26
    %s46 = sphi 0, %s46
    %s48 = sphi 0, %s46
    %s49 = sphi 0, %s48
    %s63 = sphi 0, %s49
    %s67 = sphi 0, %s67
    %s69 = sphi 0, %s67
    %s70 = sphi 0, %s69
    %s84 = sphi 0, %s70
    %s88 = sphi 0, %s88
    %s90 = sphi 0, %s88
    %s91 = sphi 0, %s90
    %s105 = sphi 0, %s91
    %s111 = sphi 0, %s113
    %s114 = sphi 0, %s111
    %s115 = sphi 0, %s114
    %s131 = sphi 0, %s115
    %s135 = sphi 0, %s135
    %s137 = sphi 0, %s135
    %s138 = sphi 0, %s137
    %s152 = sphi 0, %s138
  $region4: #{bottleneck_forward.5} parent=0 // loop_header_branch
    %15 = sbr.rel (%p13) target = $region8
  $region5: #{bottleneck_forward.5} parent=0 // loop_body
    %s17 = ssub.s32 %s12, 1
    %s18 = ssub.s32 %s12, 2
    %s19 = sadd.s32 %s12, 1
    %s20 = ssub.s32 %s12, %s19
    %p21 = scmp.eq.s32.totalorder %s20, 0
    %s23 = sadd.s32 %s22, 1
    %s24 = scalar_select %p21, %s22, %s23
    %p27 = pneg %p21
    %p28 = scmp.eq.s32.totalorder %s12, 1
    %p29 = por %p27, %p28
    %p30 = scmp.ne.s32.totalorder %s22, %s25
    %p31 = scmp.eq.s32.totalorder %s12, 0
    %p32 = por %p30, %p31
    %p33 = scmp.ne.s32.totalorder %s22, %s25
    %p34 = scmp.eq.s32.totalorder %s17, 1
    %p35 = por %p33, %p34
    %p36 = scmp.ne.s32.totalorder %s25, %s26
    %p37 = scmp.eq.s32.totalorder %s17, 0
    %p38 = por %p36, %p37
    %p39 = scmp.ne.s32.totalorder %s25, %s26
    %p40 = scmp.eq.s32.totalorder %s18, 1
    %p41 = por %p39, %p40
    %p43 = scmp.ne.s32.totalorder %s26, %s42
    %p44 = scmp.eq.s32.totalorder %s18, 0
    %p45 = por %p43, %p44
    %s47 = sadd.s32 %s46, 1
    %p50 = scmp.eq.s32.totalorder %s12, 1
    %p51 = scmp.ne.s32.totalorder %s46, %s48
    %p52 = scmp.eq.s32.totalorder %s12, 0
    %p53 = por %p51, %p52
    %p54 = scmp.ne.s32.totalorder %s46, %s48
    %p55 = scmp.eq.s32.totalorder %s17, 1
    %p56 = por %p54, %p55
    %p57 = scmp.ne.s32.totalorder %s48, %s49
    %p58 = scmp.eq.s32.totalorder %s17, 0
    %p59 = por %p57, %p58
    %p60 = scmp.ne.s32.totalorder %s48, %s49
    %p61 = scmp.eq.s32.totalorder %s18, 1
    %p62 = por %p60, %p61
    %p64 = scmp.ne.s32.totalorder %s49, %s63
    %p65 = scmp.eq.s32.totalorder %s18, 0
    %p66 = por %p64, %p65
    %s68 = sadd.s32 %s67, 1
    %p71 = scmp.eq.s32.totalorder %s12, 1
    %p72 = scmp.ne.s32.totalorder %s67, %s69
    %p73 = scmp.eq.s32.totalorder %s12, 0
    %p74 = por %p72, %p73
    %p75 = scmp.ne.s32.totalorder %s67, %s69
    %p76 = scmp.eq.s32.totalorder %s17, 1
    %p77 = por %p75, %p76
    %p78 = scmp.ne.s32.totalorder %s69, %s70
    %p79 = scmp.eq.s32.totalorder %s17, 0
    %p80 = por %p78, %p79
    %p81 = scmp.ne.s32.totalorder %s69, %s70
    %p82 = scmp.eq.s32.totalorder %s18, 1
    %p83 = por %p81, %p82
    %p85 = scmp.ne.s32.totalorder %s70, %s84
    %p86 = scmp.eq.s32.totalorder %s18, 0
    %p87 = por %p85, %p86
    %s89 = sadd.s32 %s88, 1
    %p92 = scmp.eq.s32.totalorder %s12, 1
    %p93 = scmp.ne.s32.totalorder %s88, %s90
    %p94 = scmp.eq.s32.totalorder %s12, 0
    %p95 = por %p93, %p94
    %p96 = scmp.ne.s32.totalorder %s88, %s90
    %p97 = scmp.eq.s32.totalorder %s17, 1
    %p98 = por %p96, %p97
    %p99 = scmp.ne.s32.totalorder %s90, %s91
    %p100 = scmp.eq.s32.totalorder %s17, 0
    %p101 = por %p99, %p100
    %p102 = scmp.ne.s32.totalorder %s90, %s91
    %p103 = scmp.eq.s32.totalorder %s18, 1
    %p104 = por %p102, %p103
    %p106 = scmp.ne.s32.totalorder %s91, %s105
    %p107 = scmp.eq.s32.totalorder %s18, 0
    %p108 = por %p106, %p107
    %s109 = ssub.s32 %s12, %s19
    %p110 = scmp.eq.s32.totalorder %s109, 0
    %s112 = sadd.s32 %s111, 1
    %s113 = scalar_select %p110, %s111, %s112
    %p116 = pneg %p110
    %p117 = scmp.eq.s32.totalorder %s12, 1
    %p118 = por %p116, %p117
    %p119 = scmp.ne.s32.totalorder %s111, %s114
    %p120 = scmp.eq.s32.totalorder %s12, 0
    %p121 = por %p119, %p120
    %p122 = scmp.ne.s32.totalorder %s111, %s114
    %p123 = scmp.eq.s32.totalorder %s17, 1
    %p124 = por %p122, %p123
    %p125 = scmp.ne.s32.totalorder %s114, %s115
    %p126 = scmp.eq.s32.totalorder %s17, 0
    %p127 = por %p125, %p126
    %p128 = scmp.ne.s32.totalorder %s114, %s115
    %p129 = scmp.eq.s32.totalorder %s18, 1
    %p130 = por %p128, %p129
    %p132 = scmp.ne.s32.totalorder %s115, %s131
    %p133 = scmp.eq.s32.totalorder %s18, 0
    %p134 = por %p132, %p133
    %s136 = sadd.s32 %s135, 1
    %p139 = scmp.eq.s32.totalorder %s12, 1
    %p140 = scmp.ne.s32.totalorder %s135, %s137
    %p141 = scmp.eq.s32.totalorder %s12, 0
    %p142 = por %p140, %p141
    %p143 = scmp.ne.s32.totalorder %s135, %s137
    %p144 = scmp.eq.s32.totalorder %s17, 1
    %p145 = por %p143, %p144
    %p146 = scmp.ne.s32.totalorder %s137, %s138
    %p147 = scmp.eq.s32.totalorder %s17, 0
    %p148 = por %p146, %p147
    %p149 = scmp.ne.s32.totalorder %s137, %s138
    %p150 = scmp.eq.s32.totalorder %s18, 1
    %p151 = por %p149, %p150
    %p153 = scmp.ne.s32.totalorder %s138, %s152
    %p154 = scmp.eq.s32.totalorder %s18, 0
    %p155 = por %p153, %p154
    %p156 = scmp.le.s32.totalorder 1, %s12
    %p157 = scmp.lt.s32.totalorder %s12, 3
    %p158 = pnand %p156, %p157
    %p159 = pneg %p158
    // Predicated region
    $region9: #{bottleneck_forward.5} parent=5 // pred_check
      _
    $region10: #{bottleneck_forward.5} parent=5 // pred_check_branch
      %161 = sbr.rel (%p158) target = $region12
    $region11: #{bottleneck_forward.5} parent=5 // pred_region
      %s162 = ssub.s32 %s12, 1
      // Predicated region
      $region13: #{bottleneck_forward.5} parent=11 // pred_check
        %p163 = pneg %p59
      $region14: #{bottleneck_forward.5} parent=11 // pred_check_branch
        %165 = sbr.rel (%p163) target = $region16
      $region15: #{bottleneck_forward.5} parent=11 // pred_region
        _
      $region16: #{bottleneck_forward.5} parent=11 // pred_fallthru
        _
      // Predicated region
      $region17: #{bottleneck_forward.5} parent=11 // pred_check
        %p166 = pneg %p80
      $region18: #{bottleneck_forward.5} parent=11 // pred_check_branch
        %168 = sbr.rel (%p166) target = $region20
      $region19: #{bottleneck_forward.5} parent=11 // pred_region
        _
      $region20: #{bottleneck_forward.5} parent=11 // pred_fallthru
        _
      // Predicated region
      $region21: #{bottleneck_forward.5} parent=11 // pred_check
        %p169 = pneg %p101
      $region22: #{bottleneck_forward.5} parent=11 // pred_check_branch
        %171 = sbr.rel (%p169) target = $region24
      $region23: #{bottleneck_forward.5} parent=11 // pred_region
        _
      $region24: #{bottleneck_forward.5} parent=11 // pred_fallthru
        _
    $region12: #{bottleneck_forward.5} parent=5 // pred_fallthru
      _
    %p172 = scmp.lt.s32.totalorder %s12, 2
    // Predicated region
    $region25: #{bottleneck_forward.5} parent=5 // pred_check
      %p173 = pneg %p172
    $region26: #{bottleneck_forward.5} parent=5 // pred_check_branch
      %175 = sbr.rel (%p173) target = $region28
    $region27: #{bottleneck_forward.5} parent=5 // pred_region
      // Predicated region
      $region29: #{bottleneck_forward.5} parent=27 // pred_check
        %p176 = pneg %p32
      $region30: #{bottleneck_forward.5} parent=27 // pred_check_branch
        %178 = sbr.rel (%p176) target = $region32
      $region31: #{bottleneck_forward.5} parent=27 // pred_region
        %p179 = scmp.lt.s32.totalorder %s12, 1
        %s180 = scalar_select %p179, %s12, 1
        %s181 = smul.addr %s180, 32
        %s182 = smul.addr %s181, 8
        %s183 = scalar_lea.vmem %s0, %s182
      $region32: #{bottleneck_forward.5} parent=27 // pred_fallthru
        _
    $region28: #{bottleneck_forward.5} parent=5 // pred_fallthru
      _
    %p184 = scmp.le.s32.totalorder 1, %s12
    %p185 = scmp.lt.s32.totalorder %s12, 3
    %p186 = pnand %p184, %p185
    %p187 = pneg %p186
    // Predicated region
    $region33: #{bottleneck_forward.5} parent=5 // pred_check
      _
    $region34: #{bottleneck_forward.5} parent=5 // pred_check_branch
      %189 = sbr.rel (%p186) target = $region36
    $region35: #{bottleneck_forward.5} parent=5 // pred_region
      %s190 = ssub.s32 %s12, 1
      %p191 = scmp.lt.s32.totalorder %s17, 1
      %s192 = scalar_select %p191, %s17, 1
      %s193 = smul.addr %s192, 32
      %s194 = smul.addr %s193, 8
      %s195 = scalar_lea.vmem %s0, %s194
      %p196 = pneg %p38
      %p197 = pneg %p35
      %p198 = pneg %p59
      %p199 = pneg %p56
      %p200 = pneg %p80
      %p201 = pneg %p77
      %p202 = pneg %p101
      %p203 = pneg %p98
      %p204 = pneg %p127
      %p205 = pneg %p124
      %p206 = scmp.lt.s32.totalorder %s17, 1
      %s207 = scalar_select %p206, %s17, 1
      %s208 = smul.addr %s207, 32
      %s209 = smul.addr %s208, 8
      %s210 = scalar_lea.vmem %s4, %s209
      %p211 = pneg %p148
      %p212 = pneg %p145
      %p213 = scmp.lt.s32.totalorder %s17, 1
      %s214 = scalar_select %p213, %s17, 1
      %s215 = smul.addr %s214, 32
      %s216 = smul.addr %s215, 8
      %s217 = scalar_lea.vmem %s0, %s216
      %p218 = scmp.lt.s32.totalorder %s17, 1
      %s219 = scalar_select %p218, %s17, 1
      %s220 = smul.addr %s219, 32
      %s221 = smul.addr %s220, 8
      %s222 = scalar_lea.vmem %s4, %s221
      %v223 = vld [vmem:[%s217] sm:$0xff]
      %v224 = vld [vmem:[%s217 + $0x8] sm:$0xff]
      %v225 = vld [vmem:[%s217 + $0x10] sm:$0xff]
      %v226 = vld [vmem:[%s217 + $0x18] sm:$0xff]
      %v227 = vld [vmem:[%s217 + $0x20] sm:$0xff]
      %v228 = vld [vmem:[%s217 + $0x28] sm:$0xff]
      %v229 = vld [vmem:[%s217 + $0x30] sm:$0xff]
      %v230 = vld [vmem:[%s217 + $0x38] sm:$0xff]
      %v231 = vld [vmem:[%s217 + $0x40] sm:$0xff]
      %v232 = vld [vmem:[%s217 + $0x48] sm:$0xff]
      %v233 = vld [vmem:[%s217 + $0x50] sm:$0xff]
      %v234 = vld [vmem:[%s217 + $0x58] sm:$0xff]
      %v235 = vld [vmem:[%s217 + $0x60] sm:$0xff]
      %v236 = vld [vmem:[%s217 + $0x68] sm:$0xff]
      %v237 = vld [vmem:[%s217 + $0x70] sm:$0xff]
      %v238 = vld [vmem:[%s217 + $0x78] sm:$0xff]
      %v239 = vld [vmem:[%s217 + $0x80] sm:$0xff]
      %v240 = vld [vmem:[%s217 + $0x88] sm:$0xff]
      %v241 = vld [vmem:[%s217 + $0x90] sm:$0xff]
      %v242 = vld [vmem:[%s217 + $0x98] sm:$0xff]
      %v243 = vld [vmem:[%s217 + $0xa0] sm:$0xff]
      %v244 = vld [vmem:[%s217 + $0xa8] sm:$0xff]
      %v245 = vld [vmem:[%s217 + $0xb0] sm:$0xff]
      %v246 = vld [vmem:[%s217 + $0xb8] sm:$0xff]
      %v247 = vld [vmem:[%s217 + $0xc0] sm:$0xff]
      %v248 = vld [vmem:[%s217 + $0xc8] sm:$0xff]
      %v249 = vld [vmem:[%s217 + $0xd0] sm:$0xff]
      %v250 = vld [vmem:[%s217 + $0xd8] sm:$0xff]
      %v251 = vld [vmem:[%s217 + $0xe0] sm:$0xff]
      %v252 = vld [vmem:[%s217 + $0xe8] sm:$0xff]
      %v253 = vld [vmem:[%s217 + $0xf0] sm:$0xff]
      %v254 = vld [vmem:[%s217 + $0xf8] sm:$0xff]
      %v255 = vld [vmem:[%s1] sm:$0x1]
      %v257 = vlaneseq
      %v258 = vshrl.u32 %v257, 7
      %v259 = vsub.s32 0, %v258
      %v260 = vrot.slane %v255, %v259
      %v262 = vmul.f32 %v223, %v260
      %v263 = vmul.f32 %v224, %v260
      %v264 = vmul.f32 %v225, %v260
      %v265 = vmul.f32 %v226, %v260
      %v266 = vmul.f32 %v227, %v260
      %v267 = vmul.f32 %v228, %v260
      %v268 = vmul.f32 %v229, %v260
      %v269 = vmul.f32 %v230, %v260
      %v270 = vmul.f32 %v231, %v260
      %v271 = vmul.f32 %v232, %v260
      %v272 = vmul.f32 %v233, %v260
      %v273 = vmul.f32 %v234, %v260
      %v274 = vmul.f32 %v235, %v260
      %v275 = vmul.f32 %v236, %v260
      %v276 = vmul.f32 %v237, %v260
      %v277 = vmul.f32 %v238, %v260
      %v278 = vmul.f32 %v239, %v260
      %v279 = vmul.f32 %v240, %v260
      %v280 = vmul.f32 %v241, %v260
      %v281 = vmul.f32 %v242, %v260
      %v282 = vmul.f32 %v243, %v260
      %v283 = vmul.f32 %v244, %v260
      %v284 = vmul.f32 %v245, %v260
      %v285 = vmul.f32 %v246, %v260
      %v286 = vmul.f32 %v247, %v260
      %v287 = vmul.f32 %v248, %v260
      %v288 = vmul.f32 %v249, %v260
      %v289 = vmul.f32 %v250, %v260
      %v290 = vmul.f32 %v251, %v260
      %v291 = vmul.f32 %v252, %v260
      %v292 = vmul.f32 %v253, %v260
      %v293 = vmul.f32 %v254, %v260
      %v294 = vld [vmem:[%s2] sm:$0x1]
      %v296 = vlaneseq
      %v297 = vshrl.u32 %v296, 7
      %v298 = vsub.s32 0, %v297
      %v299 = vrot.slane %v294, %v298
      %v301 = vadd.f32 %v262, %v299
      %v302 = vadd.f32 %v263, %v299
      %v303 = vadd.f32 %v264, %v299
      %v304 = vadd.f32 %v265, %v299
      %v305 = vadd.f32 %v266, %v299
      %v306 = vadd.f32 %v267, %v299
      %v307 = vadd.f32 %v268, %v299
      %v308 = vadd.f32 %v269, %v299
      %v309 = vadd.f32 %v270, %v299
      %v310 = vadd.f32 %v271, %v299
      %v311 = vadd.f32 %v272, %v299
      %v312 = vadd.f32 %v273, %v299
      %v313 = vadd.f32 %v274, %v299
      %v314 = vadd.f32 %v275, %v299
      %v315 = vadd.f32 %v276, %v299
      %v316 = vadd.f32 %v277, %v299
      %v317 = vadd.f32 %v278, %v299
      %v318 = vadd.f32 %v279, %v299
      %v319 = vadd.f32 %v280, %v299
      %v320 = vadd.f32 %v281, %v299
      %v321 = vadd.f32 %v282, %v299
      %v322 = vadd.f32 %v283, %v299
      %v323 = vadd.f32 %v284, %v299
      %v324 = vadd.f32 %v285, %v299
      %v325 = vadd.f32 %v286, %v299
      %v326 = vadd.f32 %v287, %v299
      %v327 = vadd.f32 %v288, %v299
      %v328 = vadd.f32 %v289, %v299
      %v329 = vadd.f32 %v290, %v299
      %v330 = vadd.f32 %v291, %v299
      %v331 = vadd.f32 %v292, %v299
      %v332 = vadd.f32 %v293, %v299
      %v333 = vmax.f32 %v301, 0.0
      %v334 = vmax.f32 %v302, 0.0
      %v335 = vmax.f32 %v303, 0.0
      %v336 = vmax.f32 %v304, 0.0
      %v337 = vmax.f32 %v305, 0.0
      %v338 = vmax.f32 %v306, 0.0
      %v339 = vmax.f32 %v307, 0.0
      %v340 = vmax.f32 %v308, 0.0
      %v341 = vmax.f32 %v309, 0.0
      %v342 = vmax.f32 %v310, 0.0
      %v343 = vmax.f32 %v311, 0.0
      %v344 = vmax.f32 %v312, 0.0
      %v345 = vmax.f32 %v313, 0.0
      %v346 = vmax.f32 %v314, 0.0
      %v347 = vmax.f32 %v315, 0.0
      %v348 = vmax.f32 %v316, 0.0
      %v349 = vmax.f32 %v317, 0.0
      %v350 = vmax.f32 %v318, 0.0
      %v351 = vmax.f32 %v319, 0.0
      %v352 = vmax.f32 %v320, 0.0
      %v353 = vmax.f32 %v321, 0.0
      %v354 = vmax.f32 %v322, 0.0
      %v355 = vmax.f32 %v323, 0.0
      %v356 = vmax.f32 %v324, 0.0
      %v357 = vmax.f32 %v325, 0.0
      %v358 = vmax.f32 %v326, 0.0
      %v359 = vmax.f32 %v327, 0.0
      %v360 = vmax.f32 %v328, 0.0
      %v361 = vmax.f32 %v329, 0.0
      %v362 = vmax.f32 %v330, 0.0
      %v363 = vmax.f32 %v331, 0.0
      %v364 = vmax.f32 %v332, 0.0
      %vm397 = vcmask 1040384
      %v398 = vrot.slane %v333, 7
      %v399 = vrot.slane %v334, 7
      %v400 = vsel %vm397, %v398, %v399
      %v401 = vrot.slane %v335, 7
      %v402 = vrot.slane %v336, 7
      %v403 = vsel %vm397, %v401, %v402
      %v404 = vrot.slane %v337, 7
      %v405 = vrot.slane %v338, 7
      %v406 = vsel %vm397, %v404, %v405
      %v407 = vrot.slane %v339, 7
      %v408 = vrot.slane %v340, 7
      %v409 = vsel %vm397, %v407, %v408
      %v410 = vrot.slane %v341, 7
      %v411 = vrot.slane %v342, 7
      %v412 = vsel %vm397, %v410, %v411
      %v413 = vrot.slane %v343, 7
      %v414 = vrot.slane %v344, 7
      %v415 = vsel %vm397, %v413, %v414
      %v416 = vrot.slane %v345, 7
      %v417 = vrot.slane %v346, 7
      %v418 = vsel %vm397, %v416, %v417
      %v419 = vrot.slane %v347, 7
      %v420 = vrot.slane %v348, 7
      %v421 = vsel %vm397, %v419, %v420
      %v422 = vrot.slane %v349, 7
      %v423 = vrot.slane %v350, 7
      %v424 = vsel %vm397, %v422, %v423
      %v425 = vrot.slane %v351, 7
      %v426 = vrot.slane %v352, 7
      %v427 = vsel %vm397, %v425, %v426
      %v428 = vrot.slane %v353, 7
      %v429 = vrot.slane %v354, 7
      %v430 = vsel %vm397, %v428, %v429
      %v431 = vrot.slane %v355, 7
      %v432 = vrot.slane %v356, 7
      %v433 = vsel %vm397, %v431, %v432
      %v434 = vrot.slane %v357, 7
      %v435 = vrot.slane %v358, 7
      %v436 = vsel %vm397, %v434, %v435
      %v437 = vrot.slane %v359, 7
      %v438 = vrot.slane %v360, 7
      %v439 = vsel %vm397, %v437, %v438
      %v440 = vrot.slane %v361, 7
      %v441 = vrot.slane %v362, 7
      %v442 = vsel %vm397, %v440, %v441
      %v443 = vrot.slane %v363, 7
      %v444 = vrot.slane %v364, 7
      %v445 = vsel %vm397, %v443, %v444
      %v494 = vsel %vm397, 0.0, %v398
      %v495 = vsel %vm397, 0.0, %v401
      %v496 = vsel %vm397, 0.0, %v404
      %v497 = vsel %vm397, 0.0, %v407
      %v498 = vsel %vm397, 0.0, %v410
      %v499 = vsel %vm397, 0.0, %v413
      %v500 = vsel %vm397, 0.0, %v416
      %v501 = vsel %vm397, 0.0, %v419
      %v502 = vsel %vm397, 0.0, %v422
      %v503 = vsel %vm397, 0.0, %v425
      %v504 = vsel %vm397, 0.0, %v428
      %v505 = vsel %vm397, 0.0, %v431
      %v506 = vsel %vm397, 0.0, %v434
      %v507 = vsel %vm397, 0.0, %v437
      %v508 = vsel %vm397, 0.0, %v440
      %v509 = vsel %vm397, 0.0, %v443
      %v510 = vsel %vm397, %v399, 0.0
      %v511 = vsel %vm397, %v402, 0.0
      %v512 = vsel %vm397, %v405, 0.0
      %v513 = vsel %vm397, %v408, 0.0
      %v514 = vsel %vm397, %v411, 0.0
      %v515 = vsel %vm397, %v414, 0.0
      %v516 = vsel %vm397, %v417, 0.0
      %v517 = vsel %vm397, %v420, 0.0
      %v518 = vsel %vm397, %v423, 0.0
      %v519 = vsel %vm397, %v426, 0.0
      %v520 = vsel %vm397, %v429, 0.0
      %v521 = vsel %vm397, %v432, 0.0
      %v522 = vsel %vm397, %v435, 0.0
      %v523 = vsel %vm397, %v438, 0.0
      %v524 = vsel %vm397, %v441, 0.0
      %v525 = vsel %vm397, %v444, 0.0
      %vm557 = vcmask 1046528
      %v558 = vrot.slane 0.0, 1
      %v559 = vsel %vm557, %v558, %v558
      %v560 = vrot.slane %v494, 1
      %v561 = vrot.slane %v400, 1
      %v562 = vsel %vm557, %v560, %v561
      %v563 = vrot.slane %v510, 1
      %v564 = vsel %vm557, %v561, %v563
      %v565 = vrot.slane %v495, 1
      %v566 = vrot.slane %v403, 1
      %v567 = vsel %vm557, %v565, %v566
      %v568 = vrot.slane %v511, 1
      %v569 = vsel %vm557, %v566, %v568
      %v570 = vrot.slane %v496, 1
      %v571 = vrot.slane %v406, 1
      %v572 = vsel %vm557, %v570, %v571
      %v573 = vrot.slane %v512, 1
      %v574 = vsel %vm557, %v571, %v573
      %v575 = vrot.slane %v497, 1
      %v576 = vrot.slane %v409, 1
      %v577 = vsel %vm557, %v575, %v576
      %v578 = vrot.slane %v513, 1
      %v579 = vsel %vm557, %v576, %v578
      %v580 = vrot.slane %v498, 1
      %v581 = vrot.slane %v412, 1
      %v582 = vsel %vm557, %v580, %v581
      %v583 = vrot.slane %v514, 1
      %v584 = vsel %vm557, %v581, %v583
      %v585 = vrot.slane %v499, 1
      %v586 = vrot.slane %v415, 1
      %v587 = vsel %vm557, %v585, %v586
      %v588 = vrot.slane %v515, 1
      %v589 = vsel %vm557, %v586, %v588
      %v590 = vrot.slane %v500, 1
      %v591 = vrot.slane %v418, 1
      %v592 = vsel %vm557, %v590, %v591
      %v593 = vrot.slane %v516, 1
      %v594 = vsel %vm557, %v591, %v593
      %v595 = vrot.slane %v501, 1
      %v596 = vrot.slane %v421, 1
      %v597 = vsel %vm557, %v595, %v596
      %v598 = vrot.slane %v517, 1
      %v599 = vsel %vm557, %v596, %v598
      %v600 = vrot.slane %v502, 1
      %v601 = vrot.slane %v424, 1
      %v602 = vsel %vm557, %v600, %v601
      %v603 = vrot.slane %v518, 1
      %v604 = vsel %vm557, %v601, %v603
      %v605 = vrot.slane %v503, 1
      %v606 = vrot.slane %v427, 1
      %v607 = vsel %vm557, %v605, %v606
      %v608 = vrot.slane %v519, 1
      %v609 = vsel %vm557, %v606, %v608
      %v610 = vrot.slane %v504, 1
      %v611 = vrot.slane %v430, 1
      %v612 = vsel %vm557, %v610, %v611
      %v613 = vrot.slane %v520, 1
      %v614 = vsel %vm557, %v611, %v613
      %v615 = vrot.slane %v505, 1
      %v616 = vrot.slane %v433, 1
      %v617 = vsel %vm557, %v615, %v616
      %v618 = vrot.slane %v521, 1
      %v619 = vsel %vm557, %v616, %v618
      %v620 = vrot.slane %v506, 1
      %v621 = vrot.slane %v436, 1
      %v622 = vsel %vm557, %v620, %v621
      %v623 = vrot.slane %v522, 1
      %v624 = vsel %vm557, %v621, %v623
      %v625 = vrot.slane %v507, 1
      %v626 = vrot.slane %v439, 1
      %v627 = vsel %vm557, %v625, %v626
      %v628 = vrot.slane %v523, 1
      %v629 = vsel %vm557, %v626, %v628
      %v630 = vrot.slane %v508, 1
      %v631 = vrot.slane %v442, 1
      %v632 = vsel %vm557, %v630, %v631
      %v633 = vrot.slane %v524, 1
      %v634 = vsel %vm557, %v631, %v633
      %vm666 = vcmask 1045504
      %v667 = vrot.slane 0.0, 2
      %v668 = vsel %vm666, %v667, %v667
      %v669 = vrot.slane %v494, 2
      %v670 = vrot.slane %v400, 2
      %v671 = vsel %vm666, %v669, %v670
      %v672 = vrot.slane %v510, 2
      %v673 = vsel %vm666, %v670, %v672
      %v674 = vrot.slane %v495, 2
      %v675 = vrot.slane %v403, 2
      %v676 = vsel %vm666, %v674, %v675
      %v677 = vrot.slane %v511, 2
      %v678 = vsel %vm666, %v675, %v677
      %v679 = vrot.slane %v496, 2
      %v680 = vrot.slane %v406, 2
      %v681 = vsel %vm666, %v679, %v680
      %v682 = vrot.slane %v512, 2
      %v683 = vsel %vm666, %v680, %v682
      %v684 = vrot.slane %v497, 2
      %v685 = vrot.slane %v409, 2
      %v686 = vsel %vm666, %v684, %v685
      %v687 = vrot.slane %v513, 2
      %v688 = vsel %vm666, %v685, %v687
      %v689 = vrot.slane %v498, 2
      %v690 = vrot.slane %v412, 2
      %v691 = vsel %vm666, %v689, %v690
      %v692 = vrot.slane %v514, 2
      %v693 = vsel %vm666, %v690, %v692
      %v694 = vrot.slane %v499, 2
      %v695 = vrot.slane %v415, 2
      %v696 = vsel %vm666, %v694, %v695
      %v697 = vrot.slane %v515, 2
      %v698 = vsel %vm666, %v695, %v697
      %v699 = vrot.slane %v500, 2
      %v700 = vrot.slane %v418, 2
      %v701 = vsel %vm666, %v699, %v700
      %v702 = vrot.slane %v516, 2
      %v703 = vsel %vm666, %v700, %v702
      %v704 = vrot.slane %v501, 2
      %v705 = vrot.slane %v421, 2
      %v706 = vsel %vm666, %v704, %v705
      %v707 = vrot.slane %v517, 2
      %v708 = vsel %vm666, %v705, %v707
      %v709 = vrot.slane %v502, 2
      %v710 = vrot.slane %v424, 2
      %v711 = vsel %vm666, %v709, %v710
      %v712 = vrot.slane %v518, 2
      %v713 = vsel %vm666, %v710, %v712
      %v714 = vrot.slane %v503, 2
      %v715 = vrot.slane %v427, 2
      %v716 = vsel %vm666, %v714, %v715
      %v717 = vrot.slane %v519, 2
      %v718 = vsel %vm666, %v715, %v717
      %v719 = vrot.slane %v504, 2
      %v720 = vrot.slane %v430, 2
      %v721 = vsel %vm666, %v719, %v720
      %v722 = vrot.slane %v520, 2
      %v723 = vsel %vm666, %v720, %v722
      %v724 = vrot.slane %v505, 2
      %v725 = vrot.slane %v433, 2
      %v726 = vsel %vm666, %v724, %v725
      %v727 = vrot.slane %v521, 2
      %v728 = vsel %vm666, %v725, %v727
      %v729 = vrot.slane %v506, 2
      %v730 = vrot.slane %v436, 2
      %v731 = vsel %vm666, %v729, %v730
      %v732 = vrot.slane %v522, 2
      %v733 = vsel %vm666, %v730, %v732
      %v734 = vrot.slane %v507, 2
      %v735 = vrot.slane %v439, 2
      %v736 = vsel %vm666, %v734, %v735
      %v737 = vrot.slane %v523, 2
      %v738 = vsel %vm666, %v735, %v737
      %v739 = vrot.slane %v508, 2
      %v740 = vrot.slane %v442, 2
      %v741 = vsel %vm666, %v739, %v740
      %v742 = vrot.slane %v524, 2
      %v743 = vsel %vm666, %v740, %v742
      %v777 = vrot.slane %v509, 1
      %v778 = vrot.slane %v445, 1
      %v779 = vsel %vm557, %v777, %v778
      %v780 = vrot.slane %v525, 1
      %v781 = vsel %vm557, %v778, %v780
      %v784 = vrot.slane %v509, 2
      %v785 = vrot.slane %v445, 2
      %v786 = vsel %vm666, %v784, %v785
      %v787 = vrot.slane %v525, 2
      %v788 = vsel %vm666, %v785, %v787
      %v791 = vld [vmem:[%s3] sm:$0xff]
      %v792 = vld [vmem:[%s3 + $0x8] sm:$0xff]
      %v793 = vld [vmem:[%s3 + $0x10] sm:$0xff]
      %v794 = vld [vmem:[%s3 + $0x18] sm:$0xff]
      %v795 = vld [vmem:[%s3 + $0x20] sm:$0xff]
      %v796 = vld [vmem:[%s3 + $0x28] sm:$0xff]
      %v797 = vld [vmem:[%s3 + $0x30] sm:$0xff]
      %v798 = vld [vmem:[%s3 + $0x38] sm:$0xff]
      %v799 = vld [vmem:[%s3 + $0x40] sm:$0xff]
      %v800 = vld [vmem:[%s3 + $0x48] sm:$0xff]
      %v801 = vld [vmem:[%s3 + $0x50] sm:$0xff]
      %v802 = vld [vmem:[%s3 + $0x58] sm:$0xff]
      %v803 = vld [vmem:[%s3 + $0x60] sm:$0xff]
      %v804 = vld [vmem:[%s3 + $0x68] sm:$0xff]
      %v805 = vld [vmem:[%s3 + $0x70] sm:$0xff]
      %v806 = vld [vmem:[%s3 + $0x78] sm:$0xff]
      %v807 = vld [vmem:[%s3 + $0x80] sm:$0xff]
      %v808 = vld [vmem:[%s3 + $0x88] sm:$0xff]
      %v809 = vld [vmem:[%s3 + $0x90] sm:$0xff]
      %v810 = vld [vmem:[%s3 + $0x98] sm:$0xff]
      %v811 = vld [vmem:[%s3 + $0xa0] sm:$0xff]
      %v812 = vld [vmem:[%s3 + $0xa8] sm:$0xff]
      %v813 = vld [vmem:[%s3 + $0xb0] sm:$0xff]
      %v814 = vld [vmem:[%s3 + $0xb8] sm:$0xff]
      %v815 = vld [vmem:[%s3 + $0xc0] sm:$0xff]
      %v816 = vld [vmem:[%s3 + $0xc8] sm:$0xff]
      %v817 = vld [vmem:[%s3 + $0xd0] sm:$0xff]
      %v818 = vld [vmem:[%s3 + $0xd8] sm:$0xff]
      %v819 = vld [vmem:[%s3 + $0xe0] sm:$0xff]
      %v820 = vld [vmem:[%s3 + $0xe8] sm:$0xff]
      %v821 = vld [vmem:[%s3 + $0xf0] sm:$0xff]
      %v822 = vld [vmem:[%s3 + $0xf8] sm:$0xff]
      %v823 = vld [vmem:[%s3 + $0x100] sm:$0xff]
      %v824 = vld [vmem:[%s3 + $0x108] sm:$0xff]
      %v825 = vld [vmem:[%s3 + $0x110] sm:$0xff]
      %v826 = vld [vmem:[%s3 + $0x118] sm:$0xff]
      %v827 = vld [vmem:[%s3 + $0x120] sm:$0xff]
      %v828 = vld [vmem:[%s3 + $0x128] sm:$0xff]
      %v829 = vld [vmem:[%s3 + $0x130] sm:$0xff]
      %v830 = vld [vmem:[%s3 + $0x138] sm:$0xff]
      %v831 = vld [vmem:[%s3 + $0x140] sm:$0xff]
      %v832 = vld [vmem:[%s3 + $0x148] sm:$0xff]
      %v833 = vld [vmem:[%s3 + $0x150] sm:$0xff]
      %v834 = vld [vmem:[%s3 + $0x158] sm:$0xff]
      %v835 = vld [vmem:[%s3 + $0x160] sm:$0xff]
      %v836 = vld [vmem:[%s3 + $0x168] sm:$0xff]
      %v837 = vld [vmem:[%s3 + $0x170] sm:$0xff]
      %v838 = vld [vmem:[%s3 + $0x178] sm:$0xff]
      %v839 = vld [vmem:[%s3 + $0x180] sm:$0xff]
      %v840 = vld [vmem:[%s3 + $0x188] sm:$0xff]
      %v841 = vld [vmem:[%s3 + $0x190] sm:$0xff]
      %v842 = vld [vmem:[%s3 + $0x198] sm:$0xff]
      %v843 = vld [vmem:[%s3 + $0x1a0] sm:$0xff]
      %v844 = vld [vmem:[%s3 + $0x1a8] sm:$0xff]
      %v845 = vld [vmem:[%s3 + $0x1b0] sm:$0xff]
      %v846 = vld [vmem:[%s3 + $0x1b8] sm:$0xff]
      %v847 = vld [vmem:[%s3 + $0x1c0] sm:$0xff]
      %v848 = vld [vmem:[%s3 + $0x1c8] sm:$0xff]
      %v849 = vld [vmem:[%s3 + $0x1d0] sm:$0xff]
      %v850 = vld [vmem:[%s3 + $0x1d8] sm:$0xff]
      %v851 = vld [vmem:[%s3 + $0x1e0] sm:$0xff]
      %v852 = vld [vmem:[%s3 + $0x1e8] sm:$0xff]
      %v853 = vld [vmem:[%s3 + $0x1f0] sm:$0xff]
      %v854 = vld [vmem:[%s3 + $0x1f8] sm:$0xff]
      %v855 = vld [vmem:[%s3 + $0x200] sm:$0xff]
      %v856 = vld [vmem:[%s3 + $0x208] sm:$0xff]
      %v857 = vld [vmem:[%s3 + $0x210] sm:$0xff]
      %v858 = vld [vmem:[%s3 + $0x218] sm:$0xff]
      %v859 = vld [vmem:[%s3 + $0x220] sm:$0xff]
      %v860 = vld [vmem:[%s3 + $0x228] sm:$0xff]
      %v861 = vld [vmem:[%s3 + $0x230] sm:$0xff]
      %v862 = vld [vmem:[%s3 + $0x238] sm:$0xff]
      %v863 = vld [vmem:[%s3 + $0x240] sm:$0xff]
      %v864 = vld [vmem:[%s3 + $0x248] sm:$0xff]
      %v865 = vld [vmem:[%s3 + $0x250] sm:$0xff]
      %v866 = vld [vmem:[%s3 + $0x258] sm:$0xff]
      %v867 = vld [vmem:[%s3 + $0x260] sm:$0xff]
      %v868 = vld [vmem:[%s3 + $0x268] sm:$0xff]
      %v869 = vld [vmem:[%s3 + $0x270] sm:$0xff]
      %v870 = vld [vmem:[%s3 + $0x278] sm:$0xff]
      %v871 = vld [vmem:[%s3 + $0x280] sm:$0xff]
      %v872 = vld [vmem:[%s3 + $0x288] sm:$0xff]
      %v873 = vld [vmem:[%s3 + $0x290] sm:$0xff]
      %v874 = vld [vmem:[%s3 + $0x298] sm:$0xff]
      %v875 = vld [vmem:[%s3 + $0x2a0] sm:$0xff]
      %v876 = vld [vmem:[%s3 + $0x2a8] sm:$0xff]
      %v877 = vld [vmem:[%s3 + $0x2b0] sm:$0xff]
      %v878 = vld [vmem:[%s3 + $0x2b8] sm:$0xff]
      %v879 = vld [vmem:[%s3 + $0x2c0] sm:$0xff]
      %v880 = vld [vmem:[%s3 + $0x2c8] sm:$0xff]
      %v881 = vld [vmem:[%s3 + $0x2d0] sm:$0xff]
      %v882 = vld [vmem:[%s3 + $0x2d8] sm:$0xff]
      %v883 = vld [vmem:[%s3 + $0x2e0] sm:$0xff]
      %v884 = vld [vmem:[%s3 + $0x2e8] sm:$0xff]
      %v885 = vld [vmem:[%s3 + $0x2f0] sm:$0xff]
      %v886 = vld [vmem:[%s3 + $0x2f8] sm:$0xff]
      %v887 = vld [vmem:[%s3 + $0x300] sm:$0xff]
      %v888 = vld [vmem:[%s3 + $0x308] sm:$0xff]
      %v889 = vld [vmem:[%s3 + $0x310] sm:$0xff]
      %v890 = vld [vmem:[%s3 + $0x318] sm:$0xff]
      %v891 = vld [vmem:[%s3 + $0x320] sm:$0xff]
      %v892 = vld [vmem:[%s3 + $0x328] sm:$0xff]
      %v893 = vld [vmem:[%s3 + $0x330] sm:$0xff]
      %v894 = vld [vmem:[%s3 + $0x338] sm:$0xff]
      %v895 = vld [vmem:[%s3 + $0x340] sm:$0xff]
      %v896 = vld [vmem:[%s3 + $0x348] sm:$0xff]
      %v897 = vld [vmem:[%s3 + $0x350] sm:$0xff]
      %v898 = vld [vmem:[%s3 + $0x358] sm:$0xff]
      %v899 = vld [vmem:[%s3 + $0x360] sm:$0xff]
      %v900 = vld [vmem:[%s3 + $0x368] sm:$0xff]
      %v901 = vld [vmem:[%s3 + $0x370] sm:$0xff]
      %v902 = vld [vmem:[%s3 + $0x378] sm:$0xff]
      %v903 = vld [vmem:[%s3 + $0x380] sm:$0xff]
      %v904 = vld [vmem:[%s3 + $0x388] sm:$0xff]
      %v905 = vld [vmem:[%s3 + $0x390] sm:$0xff]
      %v906 = vld [vmem:[%s3 + $0x398] sm:$0xff]
      %v907 = vld [vmem:[%s3 + $0x3a0] sm:$0xff]
      %v908 = vld [vmem:[%s3 + $0x3a8] sm:$0xff]
      %v909 = vld [vmem:[%s3 + $0x3b0] sm:$0xff]
      %v910 = vld [vmem:[%s3 + $0x3b8] sm:$0xff]
      %v911 = vld [vmem:[%s3 + $0x3c0] sm:$0xff]
      %v912 = vld [vmem:[%s3 + $0x3c8] sm:$0xff]
      %v913 = vld [vmem:[%s3 + $0x3d0] sm:$0xff]
      %v914 = vld [vmem:[%s3 + $0x3d8] sm:$0xff]
      %v915 = vld [vmem:[%s3 + $0x3e0] sm:$0xff]
      %v916 = vld [vmem:[%s3 + $0x3e8] sm:$0xff]
      %v917 = vld [vmem:[%s3 + $0x3f0] sm:$0xff]
      %v918 = vld [vmem:[%s3 + $0x3f8] sm:$0xff]
      %v919 = vld [vmem:[%s3 + $0x400] sm:$0xff]
      %v920 = vld [vmem:[%s3 + $0x408] sm:$0xff]
      %v921 = vld [vmem:[%s3 + $0x410] sm:$0xff]
      %v922 = vld [vmem:[%s3 + $0x418] sm:$0xff]
      %v923 = vld [vmem:[%s3 + $0x420] sm:$0xff]
      %v924 = vld [vmem:[%s3 + $0x428] sm:$0xff]
      %v925 = vld [vmem:[%s3 + $0x430] sm:$0xff]
      %v926 = vld [vmem:[%s3 + $0x438] sm:$0xff]
      %v927 = vld [vmem:[%s3 + $0x440] sm:$0xff]
      %v928 = vld [vmem:[%s3 + $0x448] sm:$0xff]
      %v929 = vld [vmem:[%s3 + $0x450] sm:$0xff]
      %v930 = vld [vmem:[%s3 + $0x458] sm:$0xff]
      %v931 = vld [vmem:[%s3 + $0x460] sm:$0xff]
      %v932 = vld [vmem:[%s3 + $0x468] sm:$0xff]
      %v933 = vld [vmem:[%s3 + $0x470] sm:$0xff]
      %v934 = vld [vmem:[%s3 + $0x478] sm:$0xff]
      %935 = vmatprep.subr.mxu0 0.0
      %936 = vmatpush1.msra.mxu0 %v791
      %937 = vmatprep.subr.mxu0 0.0
      %938 = vmatpush1.msra.mxu0 %v792
      %939 = vmatprep.subr.mxu0 0.0
      %940 = vmatpush1.msra.mxu0 %v793
      %941 = vmatprep.subr.mxu0 0.0
      %942 = vmatpush1.msra.mxu0 %v794
      %943 = vmatprep.subr.mxu0 0.0
      %944 = vmatpush1.msra.mxu0 %v795
      %945 = vmatprep.subr.mxu0 0.0
      %946 = vmatpush1.msra.mxu0 %v796
      %947 = vmatprep.subr.mxu0 0.0
      %948 = vmatpush1.msra.mxu0 %v797
      %949 = vmatprep.subr.mxu0 0.0
      %950 = vmatpush1.msra.mxu0 %v798
      %951 = vmatprep.subr.mxu0 0.0
      %952 = vmatpush1.msra.mxu0 %v799
      %953 = vmatprep.subr.mxu0 0.0
      %954 = vmatpush1.msra.mxu0 %v800
      %955 = vmatprep.subr.mxu0 0.0
      %956 = vmatpush1.msra.mxu0 %v801
      %957 = vmatprep.subr.mxu0 0.0
      %958 = vmatpush1.msra.mxu0 %v802
      %959 = vmatprep.subr.mxu0 0.0
      %960 = vmatpush1.msra.mxu0 %v803
      %961 = vmatprep.subr.mxu0 0.0
      %962 = vmatpush1.msra.mxu0 %v804
      %963 = vmatprep.subr.mxu0 0.0
      %964 = vmatpush1.msra.mxu0 %v805
      %965 = vmatprep.subr.mxu0 0.0
      %966 = vmatpush1.msra.mxu0 %v806
      %967 = vmatprep.subr.mxu0 0.0
      %968 = vmatpush1.msra.mxu0 %v807
      %969 = vmatprep.subr.mxu0 0.0
      %970 = vmatpush1.msra.mxu0 %v808
      %971 = vmatprep.subr.mxu0 0.0
      %972 = vmatpush1.msra.mxu0 %v809
      %973 = vmatprep.subr.mxu0 0.0
      %974 = vmatpush1.msra.mxu0 %v810
      %975 = vmatprep.subr.mxu0 0.0
      %976 = vmatpush1.msra.mxu0 %v811
      %977 = vmatprep.subr.mxu0 0.0
      %978 = vmatpush1.msra.mxu0 %v812
      %979 = vmatprep.subr.mxu0 0.0
      %980 = vmatpush1.msra.mxu0 %v813
      %981 = vmatprep.subr.mxu0 0.0
      %982 = vmatpush1.msra.mxu0 %v814
      %983 = vmatprep.subr.mxu0 0.0
      %984 = vmatpush1.msra.mxu0 %v815
      %985 = vmatprep.subr.mxu0 0.0
      %986 = vmatpush1.msra.mxu0 %v816
      %987 = vmatprep.subr.mxu0 0.0
      %988 = vmatpush1.msra.mxu0 %v817
      %989 = vmatprep.subr.mxu0 0.0
      %990 = vmatpush1.msra.mxu0 %v818
      %991 = vmatprep.subr.mxu0 0.0
      %992 = vmatpush1.msra.mxu0 %v819
      %993 = vmatprep.subr.mxu0 0.0
      %994 = vmatpush1.msra.mxu0 %v820
      %995 = vmatprep.subr.mxu0 0.0
      %996 = vmatpush1.msra.mxu0 %v821
      %997 = vmatprep.subr.mxu0 0.0
      %998 = vmatpush1.msra.mxu0 %v822
      %999 = vmatprep.mubr.f32.mxu0 %v559
      %1000 = vmatmul.mubr.f32.gmra.mrb[0].mxu0 0.0
      %v1001 = vpop.f32.mrb[0].mxu0
      %v1002 = vadd.f32 0.0, %v1001
      %v1003 = vpop.f32.mrb[0].mxu0
      %1004 = vmatprep.mubr.f32.mxu0 %v559
      %1005 = vmatmul.mubr.f32.gmra.mrb[0].mxu0 0.0
      %v1006 = vpop.f32.mrb[0].mxu0
      %v1007 = vadd.f32 0.0, %v1006
      %v1008 = vpop.f32.mrb[0].mxu0
      %1009 = vmatprep.mubr.f32.mxu0 %v562
      %1010 = vmatmul.mubr.f32.gmra.mrb[0].mxu0 %v494
      %v1011 = vpop.f32.mrb[0].mxu0
      %v1012 = vadd.f32 0.0, %v1011
      %v1013 = vpop.f32.mrb[0].mxu0
      %1014 = vmatprep.mubr.f32.mxu0 %v564
      %1015 = vmatmul.mubr.f32.gmra.mrb[0].mxu0 %v400
      %v1016 = vpop.f32.mrb[0].mxu0
      %v1017 = vadd.f32 0.0, %v1016
      %v1018 = vpop.f32.mrb[0].mxu0
      %1019 = vmatprep.mubr.f32.mxu0 %v567
      %1020 = vmatmul.mubr.f32.gmra.mrb[0].mxu0 %v495
      %v1021 = vpop.f32.mrb[0].mxu0
      %v1022 = vadd.f32 0.0, %v1021
      %v1023 = vpop.f32.mrb[0].mxu0
      %1024 = vmatprep.mubr.f32.mxu0 %v569
      %1025 = vmatmul.mubr.f32.gmra.mrb[0].mxu0 %v403
      %v1026 = vpop.f32.mrb[0].mxu0
      %v1027 = vadd.f32 0.0, %v1026
      %v1028 = vpop.f32.mrb[0].mxu0
      %1029 = vmatprep.mubr.f32.mxu0 %v572
      %1030 = vmatmul.mubr.f32.gmra.mrb[0].mxu0 %v496
      %v1031 = vpop.f32.mrb[0].mxu0
      %v1032 = vadd.f32 0.0, %v1031
      %v1033 = vpop.f32.mrb[0].mxu0
      %1034 = vmatprep.mubr.f32.mxu0 %v574
      %1035 = vmatmul.mubr.f32.gmra.mrb[0].mxu0 %v406
      %v1036 = vpop.f32.mrb[0].mxu0
      %v1037 = vadd.f32 0.0, %v1036
      %v1038 = vpop.f32.mrb[0].mxu0
      %1039 = vmatprep.mubr.f32.mxu0 %v577
      %1040 = vmatmul.mubr.f32.gmra.mrb[0].mxu0 %v497
      %v1041 = vpop.f32.mrb[0].mxu0
      %v1042 = vadd.f32 0.0, %v1041
      %v1043 = vpop.f32.mrb[0].mxu0
      %1044 = vmatprep.mubr.f32.mxu0 %v579
      %1045 = vmatmul.mubr.f32.gmra.mrb[0].mxu0 %v409
      %v1046 = vpop.f32.mrb[0].mxu0
      %v1047 = vadd.f32 0.0, %v1046
      %v1048 = vpop.f32.mrb[0].mxu0
      %1049 = vmatprep.mubr.f32.mxu0 %v582
      %1050 = vmatmul.mubr.f32.gmra.mrb[0].mxu0 %v498
      %v1051 = vpop.f32.mrb[0].mxu0
      %v1052 = vadd.f32 0.0, %v1051
      %v1053 = vpop.f32.mrb[0].mxu0
      %1054 = vmatprep.mubr.f32.mxu0 %v584
      %1055 = vmatmul.mubr.f32.gmra.mrb[0].mxu0 %v412
      %v1056 = vpop.f32.mrb[0].mxu0
      %v1057 = vadd.f32 0.0, %v1056
      %v1058 = vpop.f32.mrb[0].mxu0
      %1059 = vmatprep.mubr.f32.mxu0 %v587
      %1060 = vmatmul.mubr.f32.gmra.mrb[0].mxu0 %v499
      %v1061 = vpop.f32.mrb[0].mxu0
      %v1062 = vadd.f32 0.0, %v1061
      %v1063 = vpop.f32.mrb[0].mxu0
      %1064 = vmatprep.mubr.f32.mxu0 %v589
      %1065 = vmatmul.mubr.f32.gmra.mrb[0].mxu0 %v415
      %v1066 = vpop.f32.mrb[0].mxu0
      %v1067 = vadd.f32 0.0, %v1066
      %v1068 = vpop.f32.mrb[0].mxu0
      %1069 = vmatprep.mubr.f32.mxu0 %v592
      %1070 = vmatmul.mubr.f32.gmra.mrb[0].mxu0 %v500
      %v1071 = vpop.f32.mrb[0].mxu0
      %v1072 = vadd.f32 0.0, %v1071
      %v1073 = vpop.f32.mrb[0].mxu0
      %1074 = vmatprep.mubr.f32.mxu0 %v594
      %1075 = vmatmul.mubr.f32.gmra.mrb[0].mxu0 %v418
      %v1076 = vpop.f32.mrb[0].mxu0
      %v1077 = vadd.f32 0.0, %v1076
      %v1078 = vpop.f32.mrb[0].mxu0
      %1079 = vmatprep.mubr.f32.mxu0 %v597
      %1080 = vmatmul.mubr.f32.gmra.mrb[0].mxu0 %v501
      %v1081 = vpop.f32.mrb[0].mxu0
      %v1082 = vadd.f32 0.0, %v1081
      %v1083 = vpop.f32.mrb[0].mxu0
      %1084 = vmatprep.mubr.f32.mxu0 %v599
      %1085 = vmatmul.mubr.f32.gmra.mrb[0].mxu0 %v421
      %v1086 = vpop.f32.mrb[0].mxu0
      %v1087 = vadd.f32 0.0, %v1086
      %v1088 = vpop.f32.mrb[0].mxu0
      %1089 = vmatprep.mubr.f32.mxu0 %v602
      %1090 = vmatmul.mubr.f32.gmra.mrb[0].mxu0 %v502
      %v1091 = vpop.f32.mrb[0].mxu0
      %v1092 = vadd.f32 0.0, %v1091
      %v1093 = vpop.f32.mrb[0].mxu0
      %1094 = vmatprep.mubr.f32.mxu0 %v604
      %1095 = vmatmul.mubr.f32.gmra.mrb[0].mxu0 %v424
      %v1096 = vpop.f32.mrb[0].mxu0
      %v1097 = vadd.f32 0.0, %v1096
      %v1098 = vpop.f32.mrb[0].mxu0
      %1099 = vmatprep.mubr.f32.mxu0 %v607
      %1100 = vmatmul.mubr.f32.gmra.mrb[0].mxu0 %v503
      %v1101 = vpop.f32.mrb[0].mxu0
      %v1102 = vadd.f32 0.0, %v1101
      %v1103 = vpop.f32.mrb[0].mxu0
      %1104 = vmatprep.mubr.f32.mxu0 %v609
      %1105 = vmatmul.mubr.f32.gmra.mrb[0].mxu0 %v427
      %v1106 = vpop.f32.mrb[0].mxu0
      %v1107 = vadd.f32 0.0, %v1106
      %v1108 = vpop.f32.mrb[0].mxu0
      %1109 = vmatprep.mubr.f32.mxu0 %v612
      %1110 = vmatmul.mubr.f32.gmra.mrb[0].mxu0 %v504
      %v1111 = vpop.f32.mrb[0].mxu0
      %v1112 = vadd.f32 0.0, %v1111
      %v1113 = vpop.f32.mrb[0].mxu0
      %1114 = vmatprep.mubr.f32.mxu0 %v614
      %1115 = vmatmul.mubr.f32.gmra.mrb[0].mxu0 %v430
      %v1116 = vpop.f32.mrb[0].mxu0
      %v1117 = vadd.f32 0.0, %v1116
      %v1118 = vpop.f32.mrb[0].mxu0
      %1119 = vmatprep.mubr.f32.mxu0 %v617
      %1120 = vmatmul.mubr.f32.gmra.mrb[0].mxu0 %v505
      %v1121 = vpop.f32.mrb[0].mxu0
      %v1122 = vadd.f32 0.0, %v1121
      %v1123 = vpop.f32.mrb[0].mxu0
      %1124 = vmatprep.mubr.f32.mxu0 %v619
      %1125 = vmatmul.mubr.f32.gmra.mrb[0].mxu0 %v433
      %v1126 = vpop.f32.mrb[0].mxu0
      %v1127 = vadd.f32 0.0, %v1126
      %v1128 = vpop.f32.mrb[0].mxu0
      %1129 = vmatprep.mubr.f32.mxu0 %v622
      %1130 = vmatmul.mubr.f32.gmra.mrb[0].mxu0 %v506
      %v1131 = vpop.f32.mrb[0].mxu0
      %v1132 = vadd.f32 0.0, %v1131
      %v1133 = vpop.f32.mrb[0].mxu0
      %1134 = vmatprep.mubr.f32.mxu0 %v624
      %1135 = vmatmul.mubr.f32.gmra.mrb[0].mxu0 %v436
      %v1136 = vpop.f32.mrb[0].mxu0
      %v1137 = vadd.f32 0.0, %v1136
      %v1138 = vpop.f32.mrb[0].mxu0
      %1139 = vmatprep.mubr.f32.mxu0 %v627
      %1140 = vmatmul.mubr.f32.gmra.mrb[0].mxu0 %v507
      %v1141 = vpop.f32.mrb[0].mxu0
      %v1142 = vadd.f32 0.0, %v1141
      %v1143 = vpop.f32.mrb[0].mxu0
      %1144 = vmatprep.mubr.f32.mxu0 %v629
      %1145 = vmatmul.mubr.f32.gmra.mrb[0].mxu0 %v439
      %v1146 = vpop.f32.mrb[0].mxu0
      %v1147 = vadd.f32 0.0, %v1146
      %v1148 = vpop.f32.mrb[0].mxu0
      %1149 = vmatprep.mubr.f32.mxu0 %v632
      %1150 = vmatmul.mubr.f32.gmra.mrb[0].mxu0 %v508
      %v1151 = vpop.f32.mrb[0].mxu0
      %v1152 = vadd.f32 0.0, %v1151
      %v1153 = vpop.f32.mrb[0].mxu0
      %1154 = vmatprep.mubr.f32.mxu0 %v634
      %1155 = vmatmul.mubr.f32.gmra.mrb[0].mxu0 %v442
      %v1156 = vpop.f32.mrb[0].mxu0
      %v1157 = vadd.f32 0.0, %v1156
      %v1158 = vpop.f32.mrb[0].mxu0
      %1159 = vdwg.mxu0
      %1160 = vmatprep.subr.mxu0 0.0
      %1161 = vmatpush1.msra.mxu0 %v823
      %1162 = vmatprep.subr.mxu0 0.0
      %1163 = vmatpush1.msra.mxu0 %v824
      %1164 = vmatprep.subr.mxu0 0.0
      %1165 = vmatpush1.msra.mxu0 %v825
      %1166 = vmatprep.subr.mxu0 0.0
      %1167 = vmatpush1.msra.mxu0 %v826
      %1168 = vmatprep.subr.mxu0 0.0
      %1169 = vmatpush1.msra.mxu0 %v827
      %1170 = vmatprep.subr.mxu0 0.0
      %1171 = vmatpush1.msra.mxu0 %v828
      %1172 = vmatprep.subr.mxu0 0.0
      %1173 = vmatpush1.msra.mxu0 %v829
      %1174 = vmatprep.subr.mxu0 0.0
      %1175 = vmatpush1.msra.mxu0 %v830
      %1176 = vmatprep.subr.mxu0 0.0
      %1177 = vmatpush1.msra.mxu0 %v831
      %1178 = vmatprep.subr.mxu0 0.0
      %1179 = vmatpush1.msra.mxu0 %v832
      %1180 = vmatprep.subr.mxu0 0.0
      %1181 = vmatpush1.msra.mxu0 %v833
      %1182 = vmatprep.subr.mxu0 0.0
      %1183 = vmatpush1.msra.mxu0 %v834
      %1184 = vmatprep.subr.mxu0 0.0
      %1185 = vmatpush1.msra.mxu0 %v835
      %1186 = vmatprep.subr.mxu0 0.0
      %1187 = vmatpush1.msra.mxu0 %v836
      %1188 = vmatprep.subr.mxu0 0.0
      %1189 = vmatpush1.msra.mxu0 %v837
      %1190 = vmatprep.subr.mxu0 0.0
      %1191 = vmatpush1.msra.mxu0 %v838
      %1192 = vmatprep.subr.mxu0 0.0
      %1193 = vmatpush1.msra.mxu0 %v839
      %1194 = vmatprep.subr.mxu0 0.0
      %1195 = vmatpush1.msra.mxu0 %v840
      %1196 = vmatprep.subr.mxu0 0.0
      %1197 = vmatpush1.msra.mxu0 %v841
      %1198 = vmatprep.subr.mxu0 0.0
      %1199 = vmatpush1.msra.mxu0 %v842
      %1200 = vmatprep.subr.mxu0 0.0
      %1201 = vmatpush1.msra.mxu0 %v843
      %1202 = vmatprep.subr.mxu0 0.0
      %1203 = vmatpush1.msra.mxu0 %v844
      %1204 = vmatprep.subr.mxu0 0.0
      %1205 = vmatpush1.msra.mxu0 %v845
      %1206 = vmatprep.subr.mxu0 0.0
      %1207 = vmatpush1.msra.mxu0 %v846
      %1208 = vmatprep.subr.mxu0 0.0
      %1209 = vmatpush1.msra.mxu0 %v847
      %1210 = vmatprep.subr.mxu0 0.0
      %1211 = vmatpush1.msra.mxu0 %v848
      %1212 = vmatprep.subr.mxu0 0.0
      %1213 = vmatpush1.msra.mxu0 %v849
      %1214 = vmatprep.subr.mxu0 0.0
      %1215 = vmatpush1.msra.mxu0 %v850
      %1216 = vmatprep.subr.mxu0 0.0
      %1217 = vmatpush1.msra.mxu0 %v851
      %1218 = vmatprep.subr.mxu0 0.0
      %1219 = vmatpush1.msra.mxu0 %v852
      %1220 = vmatprep.subr.mxu0 0.0
      %1221 = vmatpush1.msra.mxu0 %v853
      %1222 = vmatprep.subr.mxu0 0.0
      %1223 = vmatpush1.msra.mxu0 %v854
      %1224 = vmatprep.mubr.f32.mxu0 %v494
      %1225 = vmatmul.mubr.f32.gmra.mrb[0].mxu0 %v668
      %v1226 = vpop.f32.mrb[0].mxu0
      %v1227 = vadd.f32 %v1002, %v1226
      %v1228 = vpop.f32.mrb[0].mxu0
      %1229 = vmatprep.mubr.f32.mxu0 %v400
      %1230 = vmatmul.mubr.f32.gmra.mrb[0].mxu0 %v668
      %v1231 = vpop.f32.mrb[0].mxu0
      %v1232 = vadd.f32 %v1007, %v1231
      %v1233 = vpop.f32.mrb[0].mxu0
      %1234 = vmatprep.mubr.f32.mxu0 %v495
      %1235 = vmatmul.mubr.f32.gmra.mrb[0].mxu0 %v671
      %v1236 = vpop.f32.mrb[0].mxu0
      %v1237 = vadd.f32 %v1012, %v1236
      %v1238 = vpop.f32.mrb[0].mxu0
      %1239 = vmatprep.mubr.f32.mxu0 %v403
      %1240 = vmatmul.mubr.f32.gmra.mrb[0].mxu0 %v673
      %v1241 = vpop.f32.mrb[0].mxu0
      %v1242 = vadd.f32 %v1017, %v1241
      %v1243 = vpop.f32.mrb[0].mxu0
      %1244 = vmatprep.mubr.f32.mxu0 %v496
      %1245 = vmatmul.mubr.f32.gmra.mrb[0].mxu0 %v676
      %v1246 = vpop.f32.mrb[0].mxu0
      %v1247 = vadd.f32 %v1022, %v1246
      %v1248 = vpop.f32.mrb[0].mxu0
      %1249 = vmatprep.mubr.f32.mxu0 %v406
      %1250 = vmatmul.mubr.f32.gmra.mrb[0].mxu0 %v678
      %v1251 = vpop.f32.mrb[0].mxu0
      %v1252 = vadd.f32 %v1027, %v1251
      %v1253 = vpop.f32.mrb[0].mxu0
      %1254 = vmatprep.mubr.f32.mxu0 %v497
      %1255 = vmatmul.mubr.f32.gmra.mrb[0].mxu0 %v681
      %v1256 = vpop.f32.mrb[0].mxu0
      %v1257 = vadd.f32 %v1032, %v1256
      %v1258 = vpop.f32.mrb[0].mxu0
      %1259 = vmatprep.mubr.f32.mxu0 %v409
      %1260 = vmatmul.mubr.f32.gmra.mrb[0].mxu0 %v683
      %v1261 = vpop.f32.mrb[0].mxu0
      %v1262 = vadd.f32 %v1037, %v1261
      %v1263 = vpop.f32.mrb[0].mxu0
      %1264 = vmatprep.mubr.f32.mxu0 %v498
      %1265 = vmatmul.mubr.f32.gmra.mrb[0].mxu0 %v686
      %v1266 = vpop.f32.mrb[0].mxu0
      %v1267 = vadd.f32 %v1042, %v1266
      %v1268 = vpop.f32.mrb[0].mxu0
      %1269 = vmatprep.mubr.f32.mxu0 %v412
      %1270 = vmatmul.mubr.f32.gmra.mrb[0].mxu0 %v688
      %v1271 = vpop.f32.mrb[0].mxu0
      %v1272 = vadd.f32 %v1047, %v1271
      %v1273 = vpop.f32.mrb[0].mxu0
      %1274 = vmatprep.mubr.f32.mxu0 %v499
      %1275 = vmatmul.mubr.f32.gmra.mrb[0].mxu0 %v691
      %v1276 = vpop.f32.mrb[0].mxu0
      %v1277 = vadd.f32 %v1052, %v1276
      %v1278 = vpop.f32.mrb[0].mxu0
      %1279 = vmatprep.mubr.f32.mxu0 %v415
      %1280 = vmatmul.mubr.f32.gmra.mrb[0].mxu0 %v693
      %v1281 = vpop.f32.mrb[0].mxu0
      %v1282 = vadd.f32 %v1057, %v1281
      %v1283 = vpop.f32.mrb[0].mxu0
      %1284 = vmatprep.mubr.f32.mxu0 %v500
      %1285 = vmatmul.mubr.f32.gmra.mrb[0].mxu0 %v696
      %v1286 = vpop.f32.mrb[0].mxu0
      %v1287 = vadd.f32 %v1062, %v1286
      %v1288 = vpop.f32.mrb[0].mxu0
      %1289 = vmatprep.mubr.f32.mxu0 %v418
      %1290 = vmatmul.mubr.f32.gmra.mrb[0].mxu0 %v698
      %v1291 = vpop.f32.mrb[0].mxu0
      %v1292 = vadd.f32 %v1067, %v1291
      %v1293 = vpop.f32.mrb[0].mxu0
      %1294 = vmatprep.mubr.f32.mxu0 %v501
      %1295 = vmatmul.mubr.f32.gmra.mrb[0].mxu0 %v701
      %v1296 = vpop.f32.mrb[0].mxu0
      %v1297 = vadd.f32 %v1072, %v1296
      %v1298 = vpop.f32.mrb[0].mxu0
      %1299 = vmatprep.mubr.f32.mxu0 %v421
      %1300 = vmatmul.mubr.f32.gmra.mrb[0].mxu0 %v703
      %v1301 = vpop.f32.mrb[0].mxu0
      %v1302 = vadd.f32 %v1077, %v1301
      %v1303 = vpop.f32.mrb[0].mxu0
      %1304 = vmatprep.mubr.f32.mxu0 %v502
      %1305 = vmatmul.mubr.f32.gmra.mrb[0].mxu0 %v706
      %v1306 = vpop.f32.mrb[0].mxu0
      %v1307 = vadd.f32 %v1082, %v1306
      %v1308 = vpop.f32.mrb[0].mxu0
      %1309 = vmatprep.mubr.f32.mxu0 %v424
      %1310 = vmatmul.mubr.f32.gmra.mrb[0].mxu0 %v708
      %v1311 = vpop.f32.mrb[0].mxu0
      %v1312 = vadd.f32 %v1087, %v1311
      %v1313 = vpop.f32.mrb[0].mxu0
      %1314 = vmatprep.mubr.f32.mxu0 %v503
      %1315 = vmatmul.mubr.f32.gmra.mrb[0].mxu0 %v711
      %v1316 = vpop.f32.mrb[0].mxu0
      %v1317 = vadd.f32 %v1092, %v1316
      %v1318 = vpop.f32.mrb[0].mxu0
      %1319 = vmatprep.mubr.f32.mxu0 %v427
      %1320 = vmatmul.mubr.f32.gmra.mrb[0].mxu0 %v713
      %v1321 = vpop.f32.mrb[0].mxu0
      %v1322 = vadd.f32 %v1097, %v1321
      %v1323 = vpop.f32.mrb[0].mxu0
      %1324 = vmatprep.mubr.f32.mxu0 %v504
      %1325 = vmatmul.mubr.f32.gmra.mrb[0].mxu0 %v716
      %v1326 = vpop.f32.mrb[0].mxu0
      %v1327 = vadd.f32 %v1102, %v1326
      %v1328 = vpop.f32.mrb[0].mxu0
      %1329 = vmatprep.mubr.f32.mxu0 %v430
      %1330 = vmatmul.mubr.f32.gmra.mrb[0].mxu0 %v718
      %v1331 = vpop.f32.mrb[0].mxu0
      %v1332 = vadd.f32 %v1107, %v1331
      %v1333 = vpop.f32.mrb[0].mxu0
      %1334 = vmatprep.mubr.f32.mxu0 %v505
      %1335 = vmatmul.mubr.f32.gmra.mrb[0].mxu0 %v721
      %v1336 = vpop.f32.mrb[0].mxu0
      %v1337 = vadd.f32 %v1112, %v1336
      %v1338 = vpop.f32.mrb[0].mxu0
      %1339 = vmatprep.mubr.f32.mxu0 %v433
      %1340 = vmatmul.mubr.f32.gmra.mrb[0].mxu0 %v723
      %v1341 = vpop.f32.mrb[0].mxu0
      %v1342 = vadd.f32 %v1117, %v1341
      %v1343 = vpop.f32.mrb[0].mxu0
      %1344 = vmatprep.mubr.f32.mxu0 %v506
      %1345 = vmatmul.mubr.f32.gmra.mrb[0].mxu0 %v726
      %v1346 = vpop.f32.mrb[0].mxu0
      %v1347 = vadd.f32 %v1122, %v1346
      %v1348 = vpop.f32.mrb[0].mxu0
      %1349 = vmatprep.mubr.f32.mxu0 %v436
      %1350 = vmatmul.mubr.f32.gmra.mrb[0].mxu0 %v728
      %v1351 = vpop.f32.mrb[0].mxu0
      %v1352 = vadd.f32 %v1127, %v1351
      %v1353 = vpop.f32.mrb[0].mxu0
      %1354 = vmatprep.mubr.f32.mxu0 %v507
      %1355 = vmatmul.mubr.f32.gmra.mrb[0].mxu0 %v731
      %v1356 = vpop.f32.mrb[0].mxu0
      %v1357 = vadd.f32 %v1132, %v1356
      %v1358 = vpop.f32.mrb[0].mxu0
      %1359 = vmatprep.mubr.f32.mxu0 %v439
      %1360 = vmatmul.mubr.f32.gmra.mrb[0].mxu0 %v733
      %v1361 = vpop.f32.mrb[0].mxu0
      %v1362 = vadd.f32 %v1137, %v1361
      %v1363 = vpop.f32.mrb[0].mxu0
      %1364 = vmatprep.mubr.f32.mxu0 %v508
      %1365 = vmatmul.mubr.f32.gmra.mrb[0].mxu0 %v736
      %v1366 = vpop.f32.mrb[0].mxu0
      %v1367 = vadd.f32 %v1142, %v1366
      %v1368 = vpop.f32.mrb[0].mxu0
      %1369 = vmatprep.mubr.f32.mxu0 %v442
      %1370 = vmatmul.mubr.f32.gmra.mrb[0].mxu0 %v738
      %v1371 = vpop.f32.mrb[0].mxu0
      %v1372 = vadd.f32 %v1147, %v1371
      %v1373 = vpop.f32.mrb[0].mxu0
      %1374 = vmatprep.mubr.f32.mxu0 %v509
      %1375 = vmatmul.mubr.f32.gmra.mrb[0].mxu0 %v741
      %v1376 = vpop.f32.mrb[0].mxu0
      %v1377 = vadd.f32 %v1152, %v1376
      %v1378 = vpop.f32.mrb[0].mxu0
      %1379 = vmatprep.mubr.f32.mxu0 %v445
      %1380 = vmatmul.mubr.f32.gmra.mrb[0].mxu0 %v743
      %v1381 = vpop.f32.mrb[0].mxu0
      %v1382 = vadd.f32 %v1157, %v1381
      %v1383 = vpop.f32.mrb[0].mxu0
      %1384 = vdwg.mxu0
      %1385 = vmatprep.subr.mxu0 0.0
      %1386 = vmatpush1.msra.mxu0 %v855
      %1387 = vmatprep.subr.mxu0 0.0
      %1388 = vmatpush1.msra.mxu0 %v856
      %1389 = vmatprep.subr.mxu0 0.0
      %1390 = vmatpush1.msra.mxu0 %v857
      %1391 = vmatprep.subr.mxu0 0.0
      %1392 = vmatpush1.msra.mxu0 %v858
      %1393 = vmatprep.subr.mxu0 0.0
      %1394 = vmatpush1.msra.mxu0 %v859
      %1395 = vmatprep.subr.mxu0 0.0
      %1396 = vmatpush1.msra.mxu0 %v860
      %1397 = vmatprep.subr.mxu0 0.0
      %1398 = vmatpush1.msra.mxu0 %v861
      %1399 = vmatprep.subr.mxu0 0.0
      %1400 = vmatpush1.msra.mxu0 %v862
      %1401 = vmatprep.subr.mxu0 0.0
      %1402 = vmatpush1.msra.mxu0 %v863
      %1403 = vmatprep.subr.mxu0 0.0
      %1404 = vmatpush1.msra.mxu0 %v864
      %1405 = vmatprep.subr.mxu0 0.0
      %1406 = vmatpush1.msra.mxu0 %v865
      %1407 = vmatprep.subr.mxu0 0.0
      %1408 = vmatpush1.msra.mxu0 %v866
      %1409 = vmatprep.subr.mxu0 0.0
      %1410 = vmatpush1.msra.mxu0 %v867
      %1411 = vmatprep.subr.mxu0 0.0
      %1412 = vmatpush1.msra.mxu0 %v868
      %1413 = vmatprep.subr.mxu0 0.0
      %1414 = vmatpush1.msra.mxu0 %v869
      %1415 = vmatprep.subr.mxu0 0.0
      %1416 = vmatpush1.msra.mxu0 %v870
      %1417 = vmatprep.subr.mxu0 0.0
      %1418 = vmatpush1.msra.mxu0 %v871
      %1419 = vmatprep.subr.mxu0 0.0
      %1420 = vmatpush1.msra.mxu0 %v872
      %1421 = vmatprep.subr.mxu0 0.0
      %1422 = vmatpush1.msra.mxu0 %v873
      %1423 = vmatprep.subr.mxu0 0.0
      %1424 = vmatpush1.msra.mxu0 %v874
      %1425 = vmatprep.subr.mxu0 0.0
      %1426 = vmatpush1.msra.mxu0 %v875
      %1427 = vmatprep.subr.mxu0 0.0
      %1428 = vmatpush1.msra.mxu0 %v876
      %1429 = vmatprep.subr.mxu0 0.0
      %1430 = vmatpush1.msra.mxu0 %v877
      %1431 = vmatprep.subr.mxu0 0.0
      %1432 = vmatpush1.msra.mxu0 %v878
      %1433 = vmatprep.subr.mxu0 0.0
      %1434 = vmatpush1.msra.mxu0 %v879
      %1435 = vmatprep.subr.mxu0 0.0
      %1436 = vmatpush1.msra.mxu0 %v880
      %1437 = vmatprep.subr.mxu0 0.0
      %1438 = vmatpush1.msra.mxu0 %v881
      %1439 = vmatprep.subr.mxu0 0.0
      %1440 = vmatpush1.msra.mxu0 %v882
      %1441 = vmatprep.subr.mxu0 0.0
      %1442 = vmatpush1.msra.mxu0 %v883
      %1443 = vmatprep.subr.mxu0 0.0
      %1444 = vmatpush1.msra.mxu0 %v884
      %1445 = vmatprep.subr.mxu0 0.0
      %1446 = vmatpush1.msra.mxu0 %v885
      %1447 = vmatprep.subr.mxu0 0.0
      %1448 = vmatpush1.msra.mxu0 %v886
      %1449 = vmatprep.mubr.f32.mxu0 %v671
      %1450 = vmatmul.mubr.f32.gmra.mrb[0].mxu0 %v562
      %v1451 = vpop.f32.mrb[0].mxu0
      %v1452 = vadd.f32 %v1227, %v1451
      %v1453 = vpop.f32.mrb[0].mxu0
      %1454 = vmatprep.mubr.f32.mxu0 %v673
      %1455 = vmatmul.mubr.f32.gmra.mrb[0].mxu0 %v564
      %v1456 = vpop.f32.mrb[0].mxu0
      %v1457 = vadd.f32 %v1232, %v1456
      %v1458 = vpop.f32.mrb[0].mxu0
      %1459 = vmatprep.mubr.f32.mxu0 %v676
      %1460 = vmatmul.mubr.f32.gmra.mrb[0].mxu0 %v567
      %v1461 = vpop.f32.mrb[0].mxu0
      %v1462 = vadd.f32 %v1237, %v1461
      %v1463 = vpop.f32.mrb[0].mxu0
      %1464 = vmatprep.mubr.f32.mxu0 %v678
      %1465 = vmatmul.mubr.f32.gmra.mrb[0].mxu0 %v569
      %v1466 = vpop.f32.mrb[0].mxu0
      %v1467 = vadd.f32 %v1242, %v1466
      %v1468 = vpop.f32.mrb[0].mxu0
      %1469 = vmatprep.mubr.f32.mxu0 %v681
      %1470 = vmatmul.mubr.f32.gmra.mrb[0].mxu0 %v572
      %v1471 = vpop.f32.mrb[0].mxu0
      %v1472 = vadd.f32 %v1247, %v1471
      %v1473 = vpop.f32.mrb[0].mxu0
      %1474 = vmatprep.mubr.f32.mxu0 %v683
      %1475 = vmatmul.mubr.f32.gmra.mrb[0].mxu0 %v574
      %v1476 = vpop.f32.mrb[0].mxu0
      %v1477 = vadd.f32 %v1252, %v1476
      %v1478 = vpop.f32.mrb[0].mxu0
      %1479 = vmatprep.mubr.f32.mxu0 %v686
      %1480 = vmatmul.mubr.f32.gmra.mrb[0].mxu0 %v577
      %v1481 = vpop.f32.mrb[0].mxu0
      %v1482 = vadd.f32 %v1257, %v1481
      %v1483 = vpop.f32.mrb[0].mxu0
      %1484 = vmatprep.mubr.f32.mxu0 %v688
      %1485 = vmatmul.mubr.f32.gmra.mrb[0].mxu0 %v579
      %v1486 = vpop.f32.mrb[0].mxu0
      %v1487 = vadd.f32 %v1262, %v1486
      %v1488 = vpop.f32.mrb[0].mxu0
      %1489 = vmatprep.mubr.f32.mxu0 %v691
      %1490 = vmatmul.mubr.f32.gmra.mrb[0].mxu0 %v582
      %v1491 = vpop.f32.mrb[0].mxu0
      %v1492 = vadd.f32 %v1267, %v1491
      %v1493 = vpop.f32.mrb[0].mxu0
      %1494 = vmatprep.mubr.f32.mxu0 %v693
      %1495 = vmatmul.mubr.f32.gmra.mrb[0].mxu0 %v584
      %v1496 = vpop.f32.mrb[0].mxu0
      %v1497 = vadd.f32 %v1272, %v1496
      %v1498 = vpop.f32.mrb[0].mxu0
      %1499 = vmatprep.mubr.f32.mxu0 %v696
      %1500 = vmatmul.mubr.f32.gmra.mrb[0].mxu0 %v587
      %v1501 = vpop.f32.mrb[0].mxu0
      %v1502 = vadd.f32 %v1277, %v1501
      %v1503 = vpop.f32.mrb[0].mxu0
      %1504 = vmatprep.mubr.f32.mxu0 %v698
      %1505 = vmatmul.mubr.f32.gmra.mrb[0].mxu0 %v589
      %v1506 = vpop.f32.mrb[0].mxu0
      %v1507 = vadd.f32 %v1282, %v1506
      %v1508 = vpop.f32.mrb[0].mxu0
      %1509 = vmatprep.mubr.f32.mxu0 %v701
      %1510 = vmatmul.mubr.f32.gmra.mrb[0].mxu0 %v592
      %v1511 = vpop.f32.mrb[0].mxu0
      %v1512 = vadd.f32 %v1287, %v1511
      %v1513 = vpop.f32.mrb[0].mxu0
      %1514 = vmatprep.mubr.f32.mxu0 %v703
      %1515 = vmatmul.mubr.f32.gmra.mrb[0].mxu0 %v594
      %v1516 = vpop.f32.mrb[0].mxu0
      %v1517 = vadd.f32 %v1292, %v1516
      %v1518 = vpop.f32.mrb[0].mxu0
      %1519 = vmatprep.mubr.f32.mxu0 %v706
      %1520 = vmatmul.mubr.f32.gmra.mrb[0].mxu0 %v597
      %v1521 = vpop.f32.mrb[0].mxu0
      %v1522 = vadd.f32 %v1297, %v1521
      %v1523 = vpop.f32.mrb[0].mxu0
      %1524 = vmatprep.mubr.f32.mxu0 %v708
      %1525 = vmatmul.mubr.f32.gmra.mrb[0].mxu0 %v599
      %v1526 = vpop.f32.mrb[0].mxu0
      %v1527 = vadd.f32 %v1302, %v1526
      %v1528 = vpop.f32.mrb[0].mxu0
      %1529 = vmatprep.mubr.f32.mxu0 %v711
      %1530 = vmatmul.mubr.f32.gmra.mrb[0].mxu0 %v602
      %v1531 = vpop.f32.mrb[0].mxu0
      %v1532 = vadd.f32 %v1307, %v1531
      %v1533 = vpop.f32.mrb[0].mxu0
      %1534 = vmatprep.mubr.f32.mxu0 %v713
      %1535 = vmatmul.mubr.f32.gmra.mrb[0].mxu0 %v604
      %v1536 = vpop.f32.mrb[0].mxu0
      %v1537 = vadd.f32 %v1312, %v1536
      %v1538 = vpop.f32.mrb[0].mxu0
      %1539 = vmatprep.mubr.f32.mxu0 %v716
      %1540 = vmatmul.mubr.f32.gmra.mrb[0].mxu0 %v607
      %v1541 = vpop.f32.mrb[0].mxu0
      %v1542 = vadd.f32 %v1317, %v1541
      %v1543 = vpop.f32.mrb[0].mxu0
      %1544 = vmatprep.mubr.f32.mxu0 %v718
      %1545 = vmatmul.mubr.f32.gmra.mrb[0].mxu0 %v609
      %v1546 = vpop.f32.mrb[0].mxu0
      %v1547 = vadd.f32 %v1322, %v1546
      %v1548 = vpop.f32.mrb[0].mxu0
      %1549 = vmatprep.mubr.f32.mxu0 %v721
      %1550 = vmatmul.mubr.f32.gmra.mrb[0].mxu0 %v612
      %v1551 = vpop.f32.mrb[0].mxu0
      %v1552 = vadd.f32 %v1327, %v1551
      %v1553 = vpop.f32.mrb[0].mxu0
      %1554 = vmatprep.mubr.f32.mxu0 %v723
      %1555 = vmatmul.mubr.f32.gmra.mrb[0].mxu0 %v614
      %v1556 = vpop.f32.mrb[0].mxu0
      %v1557 = vadd.f32 %v1332, %v1556
      %v1558 = vpop.f32.mrb[0].mxu0
      %1559 = vmatprep.mubr.f32.mxu0 %v726
      %1560 = vmatmul.mubr.f32.gmra.mrb[0].mxu0 %v617
      %v1561 = vpop.f32.mrb[0].mxu0
      %v1562 = vadd.f32 %v1337, %v1561
      %v1563 = vpop.f32.mrb[0].mxu0
      %1564 = vmatprep.mubr.f32.mxu0 %v728
      %1565 = vmatmul.mubr.f32.gmra.mrb[0].mxu0 %v619
      %v1566 = vpop.f32.mrb[0].mxu0
      %v1567 = vadd.f32 %v1342, %v1566
      %v1568 = vpop.f32.mrb[0].mxu0
      %1569 = vmatprep.mubr.f32.mxu0 %v731
      %1570 = vmatmul.mubr.f32.gmra.mrb[0].mxu0 %v622
      %v1571 = vpop.f32.mrb[0].mxu0
      %v1572 = vadd.f32 %v1347, %v1571
      %v1573 = vpop.f32.mrb[0].mxu0
      %1574 = vmatprep.mubr.f32.mxu0 %v733
      %1575 = vmatmul.mubr.f32.gmra.mrb[0].mxu0 %v624
      %v1576 = vpop.f32.mrb[0].mxu0
      %v1577 = vadd.f32 %v1352, %v1576
      %v1578 = vpop.f32.mrb[0].mxu0
      %1579 = vmatprep.mubr.f32.mxu0 %v736
      %1580 = vmatmul.mubr.f32.gmra.mrb[0].mxu0 %v627
      %v1581 = vpop.f32.mrb[0].mxu0
      %v1582 = vadd.f32 %v1357, %v1581
      %v1583 = vpop.f32.mrb[0].mxu0
      %1584 = vmatprep.mubr.f32.mxu0 %v738
      %1585 = vmatmul.mubr.f32.gmra.mrb[0].mxu0 %v629
      %v1586 = vpop.f32.mrb[0].mxu0
      %v1587 = vadd.f32 %v1362, %v1586
      %v1588 = vpop.f32.mrb[0].mxu0
      %1589 = vmatprep.mubr.f32.mxu0 %v741
      %1590 = vmatmul.mubr.f32.gmra.mrb[0].mxu0 %v632
      %v1591 = vpop.f32.mrb[0].mxu0
      %v1592 = vadd.f32 %v1367, %v1591
      %v1593 = vpop.f32.mrb[0].mxu0
      %1594 = vmatprep.mubr.f32.mxu0 %v743
      %1595 = vmatmul.mubr.f32.gmra.mrb[0].mxu0 %v634
      %v1596 = vpop.f32.mrb[0].mxu0
      %v1597 = vadd.f32 %v1372, %v1596
      %v1598 = vpop.f32.mrb[0].mxu0
      %1599 = vmatprep.mubr.f32.mxu0 %v786
      %1600 = vmatmul.mubr.f32.gmra.mrb[0].mxu0 %v779
      %v1601 = vpop.f32.mrb[0].mxu0
      %v1602 = vadd.f32 %v1377, %v1601
      %v1603 = vpop.f32.mrb[0].mxu0
      %1604 = vmatprep.mubr.f32.mxu0 %v788
      %1605 = vmatmul.mubr.f32.gmra.mrb[0].mxu0 %v781
      %v1606 = vpop.f32.mrb[0].mxu0
      %v1607 = vadd.f32 %v1382, %v1606
      %v1608 = vpop.f32.mrb[0].mxu0
      %1609 = vdwg.mxu0
      %1610 = vmatprep.subr.mxu0 0.0
      %1611 = vmatpush1.msra.mxu0 %v887
      %1612 = vmatprep.subr.mxu0 0.0
      %1613 = vmatpush1.msra.mxu0 %v888
      %1614 = vmatprep.subr.mxu0 0.0
      %1615 = vmatpush1.msra.mxu0 %v889
      %1616 = vmatprep.subr.mxu0 0.0
      %1617 = vmatpush1.msra.mxu0 %v890
      %1618 = vmatprep.subr.mxu0 0.0
      %1619 = vmatpush1.msra.mxu0 %v891
      %1620 = vmatprep.subr.mxu0 0.0
      %1621 = vmatpush1.msra.mxu0 %v892
      %1622 = vmatprep.subr.mxu0 0.0
      %1623 = vmatpush1.msra.mxu0 %v893
      %1624 = vmatprep.subr.mxu0 0.0
      %1625 = vmatpush1.msra.mxu0 %v894
      %1626 = vmatprep.subr.mxu0 0.0
      %1627 = vmatpush1.msra.mxu0 %v895
      %1628 = vmatprep.subr.mxu0 0.0
      %1629 = vmatpush1.msra.mxu0 %v896
      %1630 = vmatprep.subr.mxu0 0.0
      %1631 = vmatpush1.msra.mxu0 %v897
      %1632 = vmatprep.subr.mxu0 0.0
      %1633 = vmatpush1.msra.mxu0 %v898
      %1634 = vmatprep.subr.mxu0 0.0
      %1635 = vmatpush1.msra.mxu0 %v899
      %1636 = vmatprep.subr.mxu0 0.0
      %1637 = vmatpush1.msra.mxu0 %v900
      %1638 = vmatprep.subr.mxu0 0.0
      %1639 = vmatpush1.msra.mxu0 %v901
      %1640 = vmatprep.subr.mxu0 0.0
      %1641 = vmatpush1.msra.mxu0 %v902
      %1642 = vmatprep.subr.mxu0 0.0
      %1643 = vmatpush1.msra.mxu0 %v903
      %1644 = vmatprep.subr.mxu0 0.0
      %1645 = vmatpush1.msra.mxu0 %v904
      %1646 = vmatprep.subr.mxu0 0.0
      %1647 = vmatpush1.msra.mxu0 %v905
      %1648 = vmatprep.subr.mxu0 0.0
      %1649 = vmatpush1.msra.mxu0 %v906
      %1650 = vmatprep.subr.mxu0 0.0
      %1651 = vmatpush1.msra.mxu0 %v907
      %1652 = vmatprep.subr.mxu0 0.0
      %1653 = vmatpush1.msra.mxu0 %v908
      %1654 = vmatprep.subr.mxu0 0.0
      %1655 = vmatpush1.msra.mxu0 %v909
      %1656 = vmatprep.subr.mxu0 0.0
      %1657 = vmatpush1.msra.mxu0 %v910
      %1658 = vmatprep.subr.mxu0 0.0
      %1659 = vmatpush1.msra.mxu0 %v911
      %1660 = vmatprep.subr.mxu0 0.0
      %1661 = vmatpush1.msra.mxu0 %v912
      %1662 = vmatprep.subr.mxu0 0.0
      %1663 = vmatpush1.msra.mxu0 %v913
      %1664 = vmatprep.subr.mxu0 0.0
      %1665 = vmatpush1.msra.mxu0 %v914
      %1666 = vmatprep.subr.mxu0 0.0
      %1667 = vmatpush1.msra.mxu0 %v915
      %1668 = vmatprep.subr.mxu0 0.0
      %1669 = vmatpush1.msra.mxu0 %v916
      %1670 = vmatprep.subr.mxu0 0.0
      %1671 = vmatpush1.msra.mxu0 %v917
      %1672 = vmatprep.subr.mxu0 0.0
      %1673 = vmatpush1.msra.mxu0 %v918
      %1674 = vmatprep.mubr.f32.mxu0 %v567
      %1675 = vmatmul.mubr.f32.gmra.mrb[0].mxu0 %v495
      %v1676 = vpop.f32.mrb[0].mxu0
      %v1677 = vadd.f32 %v1452, %v1676
      %v1678 = vpop.f32.mrb[0].mxu0
      %1679 = vmatprep.mubr.f32.mxu0 %v569
      %1680 = vmatmul.mubr.f32.gmra.mrb[0].mxu0 %v403
      %v1681 = vpop.f32.mrb[0].mxu0
      %v1682 = vadd.f32 %v1457, %v1681
      %v1683 = vpop.f32.mrb[0].mxu0
      %1684 = vmatprep.mubr.f32.mxu0 %v572
      %1685 = vmatmul.mubr.f32.gmra.mrb[0].mxu0 %v496
      %v1686 = vpop.f32.mrb[0].mxu0
      %v1687 = vadd.f32 %v1462, %v1686
      %v1688 = vpop.f32.mrb[0].mxu0
      %1689 = vmatprep.mubr.f32.mxu0 %v574
      %1690 = vmatmul.mubr.f32.gmra.mrb[0].mxu0 %v406
      %v1691 = vpop.f32.mrb[0].mxu0
      %v1692 = vadd.f32 %v1467, %v1691
      %v1693 = vpop.f32.mrb[0].mxu0
      %1694 = vmatprep.mubr.f32.mxu0 %v577
      %1695 = vmatmul.mubr.f32.gmra.mrb[0].mxu0 %v497
      %v1696 = vpop.f32.mrb[0].mxu0
      %v1697 = vadd.f32 %v1472, %v1696
      %v1698 = vpop.f32.mrb[0].mxu0
      %1699 = vmatprep.mubr.f32.mxu0 %v579
      %1700 = vmatmul.mubr.f32.gmra.mrb[0].mxu0 %v409
      %v1701 = vpop.f32.mrb[0].mxu0
      %v1702 = vadd.f32 %v1477, %v1701
      %v1703 = vpop.f32.mrb[0].mxu0
      %1704 = vmatprep.mubr.f32.mxu0 %v582
      %1705 = vmatmul.mubr.f32.gmra.mrb[0].mxu0 %v498
      %v1706 = vpop.f32.mrb[0].mxu0
      %v1707 = vadd.f32 %v1482, %v1706
      %v1708 = vpop.f32.mrb[0].mxu0
      %1709 = vmatprep.mubr.f32.mxu0 %v584
      %1710 = vmatmul.mubr.f32.gmra.mrb[0].mxu0 %v412
      %v1711 = vpop.f32.mrb[0].mxu0
      %v1712 = vadd.f32 %v1487, %v1711
      %v1713 = vpop.f32.mrb[0].mxu0
      %1714 = vmatprep.mubr.f32.mxu0 %v587
      %1715 = vmatmul.mubr.f32.gmra.mrb[0].mxu0 %v499
      %v1716 = vpop.f32.mrb[0].mxu0
      %v1717 = vadd.f32 %v1492, %v1716
      %v1718 = vpop.f32.mrb[0].mxu0
      %1719 = vmatprep.mubr.f32.mxu0 %v589
      %1720 = vmatmul.mubr.f32.gmra.mrb[0].mxu0 %v415
      %v1721 = vpop.f32.mrb[0].mxu0
      %v1722 = vadd.f32 %v1497, %v1721
      %v1723 = vpop.f32.mrb[0].mxu0
      %1724 = vmatprep.mubr.f32.mxu0 %v592
      %1725 = vmatmul.mubr.f32.gmra.mrb[0].mxu0 %v500
      %v1726 = vpop.f32.mrb[0].mxu0
      %v1727 = vadd.f32 %v1502, %v1726
      %v1728 = vpop.f32.mrb[0].mxu0
      %1729 = vmatprep.mubr.f32.mxu0 %v594
      %1730 = vmatmul.mubr.f32.gmra.mrb[0].mxu0 %v418
      %v1731 = vpop.f32.mrb[0].mxu0
      %v1732 = vadd.f32 %v1507, %v1731
      %v1733 = vpop.f32.mrb[0].mxu0
      %1734 = vmatprep.mubr.f32.mxu0 %v597
      %1735 = vmatmul.mubr.f32.gmra.mrb[0].mxu0 %v501
      %v1736 = vpop.f32.mrb[0].mxu0
      %v1737 = vadd.f32 %v1512, %v1736
      %v1738 = vpop.f32.mrb[0].mxu0
      %1739 = vmatprep.mubr.f32.mxu0 %v599
      %1740 = vmatmul.mubr.f32.gmra.mrb[0].mxu0 %v421
      %v1741 = vpop.f32.mrb[0].mxu0
      %v1742 = vadd.f32 %v1517, %v1741
      %v1743 = vpop.f32.mrb[0].mxu0
      %1744 = vmatprep.mubr.f32.mxu0 %v602
      %1745 = vmatmul.mubr.f32.gmra.mrb[0].mxu0 %v502
      %v1746 = vpop.f32.mrb[0].mxu0
      %v1747 = vadd.f32 %v1522, %v1746
      %v1748 = vpop.f32.mrb[0].mxu0
      %1749 = vmatprep.mubr.f32.mxu0 %v604
      %1750 = vmatmul.mubr.f32.gmra.mrb[0].mxu0 %v424
      %v1751 = vpop.f32.mrb[0].mxu0
      %v1752 = vadd.f32 %v1527, %v1751
      %v1753 = vpop.f32.mrb[0].mxu0
      %1754 = vmatprep.mubr.f32.mxu0 %v607
      %1755 = vmatmul.mubr.f32.gmra.mrb[0].mxu0 %v503
      %v1756 = vpop.f32.mrb[0].mxu0
      %v1757 = vadd.f32 %v1532, %v1756
      %v1758 = vpop.f32.mrb[0].mxu0
      %1759 = vmatprep.mubr.f32.mxu0 %v609
      %1760 = vmatmul.mubr.f32.gmra.mrb[0].mxu0 %v427
      %v1761 = vpop.f32.mrb[0].mxu0
      %v1762 = vadd.f32 %v1537, %v1761
      %v1763 = vpop.f32.mrb[0].mxu0
      %1764 = vmatprep.mubr.f32.mxu0 %v612
      %1765 = vmatmul.mubr.f32.gmra.mrb[0].mxu0 %v504
      %v1766 = vpop.f32.mrb[0].mxu0
      %v1767 = vadd.f32 %v1542, %v1766
      %v1768 = vpop.f32.mrb[0].mxu0
      %1769 = vmatprep.mubr.f32.mxu0 %v614
      %1770 = vmatmul.mubr.f32.gmra.mrb[0].mxu0 %v430
      %v1771 = vpop.f32.mrb[0].mxu0
      %v1772 = vadd.f32 %v1547, %v1771
      %v1773 = vpop.f32.mrb[0].mxu0
      %1774 = vmatprep.mubr.f32.mxu0 %v617
      %1775 = vmatmul.mubr.f32.gmra.mrb[0].mxu0 %v505
      %v1776 = vpop.f32.mrb[0].mxu0
      %v1777 = vadd.f32 %v1552, %v1776
      %v1778 = vpop.f32.mrb[0].mxu0
      %1779 = vmatprep.mubr.f32.mxu0 %v619
      %1780 = vmatmul.mubr.f32.gmra.mrb[0].mxu0 %v433
      %v1781 = vpop.f32.mrb[0].mxu0
      %v1782 = vadd.f32 %v1557, %v1781
      %v1783 = vpop.f32.mrb[0].mxu0
      %1784 = vmatprep.mubr.f32.mxu0 %v622
      %1785 = vmatmul.mubr.f32.gmra.mrb[0].mxu0 %v506
      %v1786 = vpop.f32.mrb[0].mxu0
      %v1787 = vadd.f32 %v1562, %v1786
      %v1788 = vpop.f32.mrb[0].mxu0
      %1789 = vmatprep.mubr.f32.mxu0 %v624
      %1790 = vmatmul.mubr.f32.gmra.mrb[0].mxu0 %v436
      %v1791 = vpop.f32.mrb[0].mxu0
      %v1792 = vadd.f32 %v1567, %v1791
      %v1793 = vpop.f32.mrb[0].mxu0
      %1794 = vmatprep.mubr.f32.mxu0 %v627
      %1795 = vmatmul.mubr.f32.gmra.mrb[0].mxu0 %v507
      %v1796 = vpop.f32.mrb[0].mxu0
      %v1797 = vadd.f32 %v1572, %v1796
      %v1798 = vpop.f32.mrb[0].mxu0
      %1799 = vmatprep.mubr.f32.mxu0 %v629
      %1800 = vmatmul.mubr.f32.gmra.mrb[0].mxu0 %v439
      %v1801 = vpop.f32.mrb[0].mxu0
      %v1802 = vadd.f32 %v1577, %v1801
      %v1803 = vpop.f32.mrb[0].mxu0
      %1804 = vmatprep.mubr.f32.mxu0 %v632
      %1805 = vmatmul.mubr.f32.gmra.mrb[0].mxu0 %v508
      %v1806 = vpop.f32.mrb[0].mxu0
      %v1807 = vadd.f32 %v1582, %v1806
      %v1808 = vpop.f32.mrb[0].mxu0
      %1809 = vmatprep.mubr.f32.mxu0 %v634
      %1810 = vmatmul.mubr.f32.gmra.mrb[0].mxu0 %v442
      %v1811 = vpop.f32.mrb[0].mxu0
      %v1812 = vadd.f32 %v1587, %v1811
      %v1813 = vpop.f32.mrb[0].mxu0
      %1814 = vmatprep.mubr.f32.mxu0 %v779
      %1815 = vmatmul.mubr.f32.gmra.mrb[0].mxu0 %v509
      %v1816 = vpop.f32.mrb[0].mxu0
      %v1817 = vadd.f32 %v1592, %v1816
      %v1818 = vpop.f32.mrb[0].mxu0
      %1819 = vmatprep.mubr.f32.mxu0 %v781
      %1820 = vmatmul.mubr.f32.gmra.mrb[0].mxu0 %v445
      %v1821 = vpop.f32.mrb[0].mxu0
      %v1822 = vadd.f32 %v1597, %v1821
      %v1823 = vpop.f32.mrb[0].mxu0
      %1824 = vmatprep.mubr.f32.mxu0 %v559
      %1825 = vmatmul.mubr.f32.gmra.mrb[0].mxu0 0.0
      %v1826 = vpop.f32.mrb[0].mxu0
      %v1827 = vadd.f32 %v1602, %v1826
      %v1828 = vpop.f32.mrb[0].mxu0
      %1829 = vmatprep.mubr.f32.mxu0 %v559
      %1830 = vmatmul.mubr.f32.gmra.mrb[0].mxu0 0.0
      %v1831 = vpop.f32.mrb[0].mxu0
      %v1832 = vadd.f32 %v1607, %v1831
      %v1833 = vpop.f32.mrb[0].mxu0
      %1834 = vdwg.mxu0
      %1835 = vmatprep.subr.mxu0 0.0
      %1836 = vmatpush1.msra.mxu0 %v919
      %1837 = vmatprep.subr.mxu0 0.0
      %1838 = vmatpush1.msra.mxu0 %v920
      %1839 = vmatprep.subr.mxu0 0.0
      %1840 = vmatpush1.msra.mxu0 %v921
      %1841 = vmatprep.subr.mxu0 0.0
      %1842 = vmatpush1.msra.mxu0 %v922
      %1843 = vmatprep.subr.mxu0 0.0
      %1844 = vmatpush1.msra.mxu0 %v923
      %1845 = vmatprep.subr.mxu0 0.0
      %1846 = vmatpush1.msra.mxu0 %v924
      %1847 = vmatprep.subr.mxu0 0.0
      %1848 = vmatpush1.msra.mxu0 %v925
      %1849 = vmatprep.subr.mxu0 0.0
      %1850 = vmatpush1.msra.mxu0 %v926
      %1851 = vmatprep.subr.mxu0 0.0
      %1852 = vmatpush1.msra.mxu0 %v927
      %1853 = vmatprep.subr.mxu0 0.0
      %1854 = vmatpush1.msra.mxu0 %v928
      %1855 = vmatprep.subr.mxu0 0.0
      %1856 = vmatpush1.msra.mxu0 %v929
      %1857 = vmatprep.subr.mxu0 0.0
      %1858 = vmatpush1.msra.mxu0 %v930
      %1859 = vmatprep.subr.mxu0 0.0
      %1860 = vmatpush1.msra.mxu0 %v931
      %1861 = vmatprep.subr.mxu0 0.0
      %1862 = vmatpush1.msra.mxu0 %v932
      %1863 = vmatprep.subr.mxu0 0.0
      %1864 = vmatpush1.msra.mxu0 %v933
      %1865 = vmatprep.subr.mxu0 0.0
      %1866 = vmatpush1.msra.mxu0 %v934
      %1867 = vmatprep.subr.mxu0 0.0
      %1868 = vmatpush1.msra.mxu0 0.0
      %1869 = vmatprep.subr.mxu0 0.0
      %1870 = vmatpush1.msra.mxu0 0.0
      %1871 = vmatprep.subr.mxu0 0.0
      %1872 = vmatpush1.msra.mxu0 0.0
      %1873 = vmatprep.subr.mxu0 0.0
      %1874 = vmatpush1.msra.mxu0 0.0
      %1875 = vmatprep.subr.mxu0 0.0
      %1876 = vmatpush1.msra.mxu0 0.0
      %1877 = vmatprep.subr.mxu0 0.0
      %1878 = vmatpush1.msra.mxu0 0.0
      %1879 = vmatprep.subr.mxu0 0.0
      %1880 = vmatpush1.msra.mxu0 0.0
      %1881 = vmatprep.subr.mxu0 0.0
      %1882 = vmatpush1.msra.mxu0 0.0
      %1883 = vmatprep.subr.mxu0 0.0
      %1884 = vmatpush1.msra.mxu0 0.0
      %1885 = vmatprep.subr.mxu0 0.0
      %1886 = vmatpush1.msra.mxu0 0.0
      %1887 = vmatprep.subr.mxu0 0.0
      %1888 = vmatpush1.msra.mxu0 0.0
      %1889 = vmatprep.subr.mxu0 0.0
      %1890 = vmatpush1.msra.mxu0 0.0
      %1891 = vmatprep.subr.mxu0 0.0
      %1892 = vmatpush1.msra.mxu0 0.0
      %1893 = vmatprep.subr.mxu0 0.0
      %1894 = vmatpush1.msra.mxu0 0.0
      %1895 = vmatprep.subr.mxu0 0.0
      %1896 = vmatpush1.msra.mxu0 0.0
      %1897 = vmatprep.subr.mxu0 0.0
      %1898 = vmatpush1.msra.mxu0 0.0
      %1899 = vmatprep.mubr.f32.mxu0 0.0
      %1900 = vmatmul.mubr.f32.gmra.mrb[0].mxu0 %v676
      %v1901 = vpop.f32.mrb[0].mxu0
      %v1902 = vadd.f32 %v1677, %v1901
      %v1903 = vpop.f32.mrb[0].mxu0
      %1904 = vmatprep.mubr.f32.mxu0 0.0
      %1905 = vmatmul.mubr.f32.gmra.mrb[0].mxu0 %v678
      %v1906 = vpop.f32.mrb[0].mxu0
      %v1907 = vadd.f32 %v1682, %v1906
      %v1908 = vpop.f32.mrb[0].mxu0
      %1909 = vmatprep.mubr.f32.mxu0 0.0
      %1910 = vmatmul.mubr.f32.gmra.mrb[0].mxu0 %v681
      %v1911 = vpop.f32.mrb[0].mxu0
      %v1912 = vadd.f32 %v1687, %v1911
      %v1913 = vpop.f32.mrb[0].mxu0
      %1914 = vmatprep.mubr.f32.mxu0 0.0
      %1915 = vmatmul.mubr.f32.gmra.mrb[0].mxu0 %v683
      %v1916 = vpop.f32.mrb[0].mxu0
      %v1917 = vadd.f32 %v1692, %v1916
      %v1918 = vpop.f32.mrb[0].mxu0
      %1919 = vmatprep.mubr.f32.mxu0 0.0
      %1920 = vmatmul.mubr.f32.gmra.mrb[0].mxu0 %v686
      %v1921 = vpop.f32.mrb[0].mxu0
      %v1922 = vadd.f32 %v1697, %v1921
      %v1923 = vpop.f32.mrb[0].mxu0
      %1924 = vmatprep.mubr.f32.mxu0 0.0
      %1925 = vmatmul.mubr.f32.gmra.mrb[0].mxu0 %v688
      %v1926 = vpop.f32.mrb[0].mxu0
      %v1927 = vadd.f32 %v1702, %v1926
      %v1928 = vpop.f32.mrb[0].mxu0
      %1929 = vmatprep.mubr.f32.mxu0 0.0
      %1930 = vmatmul.mubr.f32.gmra.mrb[0].mxu0 %v691
      %v1931 = vpop.f32.mrb[0].mxu0
      %v1932 = vadd.f32 %v1707, %v1931
      %v1933 = vpop.f32.mrb[0].mxu0
      %1934 = vmatprep.mubr.f32.mxu0 0.0
      %1935 = vmatmul.mubr.f32.gmra.mrb[0].mxu0 %v693
      %v1936 = vpop.f32.mrb[0].mxu0
      %v1937 = vadd.f32 %v1712, %v1936
      %v1938 = vpop.f32.mrb[0].mxu0
      %1939 = vmatprep.mubr.f32.mxu0 0.0
      %1940 = vmatmul.mubr.f32.gmra.mrb[0].mxu0 %v696
      %v1941 = vpop.f32.mrb[0].mxu0
      %v1942 = vadd.f32 %v1717, %v1941
      %v1943 = vpop.f32.mrb[0].mxu0
      %1944 = vmatprep.mubr.f32.mxu0 0.0
      %1945 = vmatmul.mubr.f32.gmra.mrb[0].mxu0 %v698
      %v1946 = vpop.f32.mrb[0].mxu0
      %v1947 = vadd.f32 %v1722, %v1946
      %v1948 = vpop.f32.mrb[0].mxu0
      %1949 = vmatprep.mubr.f32.mxu0 0.0
      %1950 = vmatmul.mubr.f32.gmra.mrb[0].mxu0 %v701
      %v1951 = vpop.f32.mrb[0].mxu0
      %v1952 = vadd.f32 %v1727, %v1951
      %v1953 = vpop.f32.mrb[0].mxu0
      %1954 = vmatprep.mubr.f32.mxu0 0.0
      %1955 = vmatmul.mubr.f32.gmra.mrb[0].mxu0 %v703
      %v1956 = vpop.f32.mrb[0].mxu0
      %v1957 = vadd.f32 %v1732, %v1956
      %v1958 = vpop.f32.mrb[0].mxu0
      %1959 = vmatprep.mubr.f32.mxu0 0.0
      %1960 = vmatmul.mubr.f32.gmra.mrb[0].mxu0 %v706
      %v1961 = vpop.f32.mrb[0].mxu0
      %v1962 = vadd.f32 %v1737, %v1961
      %v1963 = vpop.f32.mrb[0].mxu0
      %1964 = vmatprep.mubr.f32.mxu0 0.0
      %1965 = vmatmul.mubr.f32.gmra.mrb[0].mxu0 %v708
      %v1966 = vpop.f32.mrb[0].mxu0
      %v1967 = vadd.f32 %v1742, %v1966
      %v1968 = vpop.f32.mrb[0].mxu0
      %1969 = vmatprep.mubr.f32.mxu0 0.0
      %1970 = vmatmul.mubr.f32.gmra.mrb[0].mxu0 %v711
      %v1971 = vpop.f32.mrb[0].mxu0
      %v1972 = vadd.f32 %v1747, %v1971
      %v1973 = vpop.f32.mrb[0].mxu0
      %1974 = vmatprep.mubr.f32.mxu0 0.0
      %1975 = vmatmul.mubr.f32.gmra.mrb[0].mxu0 %v713
      %v1976 = vpop.f32.mrb[0].mxu0
      %v1977 = vadd.f32 %v1752, %v1976
      %v1978 = vpop.f32.mrb[0].mxu0
      %1979 = vmatprep.mubr.f32.mxu0 0.0
      %1980 = vmatmul.mubr.f32.gmra.mrb[0].mxu0 %v716
      %v1981 = vpop.f32.mrb[0].mxu0
      %v1982 = vadd.f32 %v1757, %v1981
      %v1983 = vpop.f32.mrb[0].mxu0
      %1984 = vmatprep.mubr.f32.mxu0 0.0
      %1985 = vmatmul.mubr.f32.gmra.mrb[0].mxu0 %v718
      %v1986 = vpop.f32.mrb[0].mxu0
      %v1987 = vadd.f32 %v1762, %v1986
      %v1988 = vpop.f32.mrb[0].mxu0
      %1989 = vmatprep.mubr.f32.mxu0 0.0
      %1990 = vmatmul.mubr.f32.gmra.mrb[0].mxu0 %v721
      %v1991 = vpop.f32.mrb[0].mxu0
      %v1992 = vadd.f32 %v1767, %v1991
      %v1993 = vpop.f32.mrb[0].mxu0
      %1994 = vmatprep.mubr.f32.mxu0 0.0
      %1995 = vmatmul.mubr.f32.gmra.mrb[0].mxu0 %v723
      %v1996 = vpop.f32.mrb[0].mxu0
      %v1997 = vadd.f32 %v1772, %v1996
      %v1998 = vpop.f32.mrb[0].mxu0
      %1999 = vmatprep.mubr.f32.mxu0 0.0
      %2000 = vmatmul.mubr.f32.gmra.mrb[0].mxu0 %v726
      %v2001 = vpop.f32.mrb[0].mxu0
      %v2002 = vadd.f32 %v1777, %v2001
      %v2003 = vpop.f32.mrb[0].mxu0
      %2004 = vmatprep.mubr.f32.mxu0 0.0
      %2005 = vmatmul.mubr.f32.gmra.mrb[0].mxu0 %v728
      %v2006 = vpop.f32.mrb[0].mxu0
      %v2007 = vadd.f32 %v1782, %v2006
      %v2008 = vpop.f32.mrb[0].mxu0
      %2009 = vmatprep.mubr.f32.mxu0 0.0
      %2010 = vmatmul.mubr.f32.gmra.mrb[0].mxu0 %v731
      %v2011 = vpop.f32.mrb[0].mxu0
      %v2012 = vadd.f32 %v1787, %v2011
      %v2013 = vpop.f32.mrb[0].mxu0
      %2014 = vmatprep.mubr.f32.mxu0 0.0
      %2015 = vmatmul.mubr.f32.gmra.mrb[0].mxu0 %v733
      %v2016 = vpop.f32.mrb[0].mxu0
      %v2017 = vadd.f32 %v1792, %v2016
      %v2018 = vpop.f32.mrb[0].mxu0
      %2019 = vmatprep.mubr.f32.mxu0 0.0
      %2020 = vmatmul.mubr.f32.gmra.mrb[0].mxu0 %v736
      %v2021 = vpop.f32.mrb[0].mxu0
      %v2022 = vadd.f32 %v1797, %v2021
      %v2023 = vpop.f32.mrb[0].mxu0
      %2024 = vmatprep.mubr.f32.mxu0 0.0
      %2025 = vmatmul.mubr.f32.gmra.mrb[0].mxu0 %v738
      %v2026 = vpop.f32.mrb[0].mxu0
      %v2027 = vadd.f32 %v1802, %v2026
      %v2028 = vpop.f32.mrb[0].mxu0
      %2029 = vmatprep.mubr.f32.mxu0 0.0
      %2030 = vmatmul.mubr.f32.gmra.mrb[0].mxu0 %v741
      %v2031 = vpop.f32.mrb[0].mxu0
      %v2032 = vadd.f32 %v1807, %v2031
      %v2033 = vpop.f32.mrb[0].mxu0
      %2034 = vmatprep.mubr.f32.mxu0 0.0
      %2035 = vmatmul.mubr.f32.gmra.mrb[0].mxu0 %v743
      %v2036 = vpop.f32.mrb[0].mxu0
      %v2037 = vadd.f32 %v1812, %v2036
      %v2038 = vpop.f32.mrb[0].mxu0
      %2039 = vmatprep.mubr.f32.mxu0 0.0
      %2040 = vmatmul.mubr.f32.gmra.mrb[0].mxu0 %v786
      %v2041 = vpop.f32.mrb[0].mxu0
      %v2042 = vadd.f32 %v1817, %v2041
      %v2043 = vpop.f32.mrb[0].mxu0
      %2044 = vmatprep.mubr.f32.mxu0 0.0
      %2045 = vmatmul.mubr.f32.gmra.mrb[0].mxu0 %v788
      %v2046 = vpop.f32.mrb[0].mxu0
      %v2047 = vadd.f32 %v1822, %v2046
      %v2048 = vpop.f32.mrb[0].mxu0
      %2049 = vmatprep.mubr.f32.mxu0 0.0
      %2050 = vmatmul.mubr.f32.gmra.mrb[0].mxu0 %v668
      %v2051 = vpop.f32.mrb[0].mxu0
      %v2052 = vadd.f32 %v1827, %v2051
      %v2053 = vpop.f32.mrb[0].mxu0
      %2054 = vmatprep.mubr.f32.mxu0 0.0
      %2055 = vmatmul.mubr.f32.gmra.mrb[0].mxu0 %v668
      %v2056 = vpop.f32.mrb[0].mxu0
      %v2057 = vadd.f32 %v1832, %v2056
      %v2058 = vpop.f32.mrb[0].mxu0
      %2059 = vdwg.mxu0
      %2060 = vst [vmem:[%s222] sm:$0xff] %v1902
      %2061 = vst [vmem:[%s222 + $0x8] sm:$0xff] %v1907
      %2062 = vst [vmem:[%s222 + $0x10] sm:$0xff] %v1912
      %2063 = vst [vmem:[%s222 + $0x18] sm:$0xff] %v1917
      %2064 = vst [vmem:[%s222 + $0x20] sm:$0xff] %v1922
      %2065 = vst [vmem:[%s222 + $0x28] sm:$0xff] %v1927
      %2066 = vst [vmem:[%s222 + $0x30] sm:$0xff] %v1932
      %2067 = vst [vmem:[%s222 + $0x38] sm:$0xff] %v1937
      %2068 = vst [vmem:[%s222 + $0x40] sm:$0xff] %v1942
      %2069 = vst [vmem:[%s222 + $0x48] sm:$0xff] %v1947
      %2070 = vst [vmem:[%s222 + $0x50] sm:$0xff] %v1952
      %2071 = vst [vmem:[%s222 + $0x58] sm:$0xff] %v1957
      %2072 = vst [vmem:[%s222 + $0x60] sm:$0xff] %v1962
      %2073 = vst [vmem:[%s222 + $0x68] sm:$0xff] %v1967
      %2074 = vst [vmem:[%s222 + $0x70] sm:$0xff] %v1972
      %2075 = vst [vmem:[%s222 + $0x78] sm:$0xff] %v1977
      %2076 = vst [vmem:[%s222 + $0x80] sm:$0xff] %v1982
      %2077 = vst [vmem:[%s222 + $0x88] sm:$0xff] %v1987
      %2078 = vst [vmem:[%s222 + $0x90] sm:$0xff] %v1992
      %2079 = vst [vmem:[%s222 + $0x98] sm:$0xff] %v1997
      %2080 = vst [vmem:[%s222 + $0xa0] sm:$0xff] %v2002
      %2081 = vst [vmem:[%s222 + $0xa8] sm:$0xff] %v2007
      %2082 = vst [vmem:[%s222 + $0xb0] sm:$0xff] %v2012
      %2083 = vst [vmem:[%s222 + $0xb8] sm:$0xff] %v2017
      %2084 = vst [vmem:[%s222 + $0xc0] sm:$0xff] %v2022
      %2085 = vst [vmem:[%s222 + $0xc8] sm:$0xff] %v2027
      %2086 = vst [vmem:[%s222 + $0xd0] sm:$0xff] %v2032
      %2087 = vst [vmem:[%s222 + $0xd8] sm:$0xff] %v2037
      %2088 = vst [vmem:[%s222 + $0xe0] sm:$0xff] %v2042
      %2089 = vst [vmem:[%s222 + $0xe8] sm:$0xff] %v2047
      %2090 = vst [vmem:[%s222 + $0xf0] sm:$0xff] %v2052
      %2091 = vst [vmem:[%s222 + $0xf8] sm:$0xff] %v2057
      %v2092 = vadd.f32 %v1902, %v1907
      %v2093 = vadd.f32 %v2092, %v1912
      %v2094 = vadd.f32 %v2093, %v1917
      %v2095 = vadd.f32 %v2094, %v1922
      %v2096 = vadd.f32 %v2095, %v1927
      %v2097 = vadd.f32 %v2096, %v1932
      %v2098 = vadd.f32 %v2097, %v1937
      %v2099 = vadd.f32 %v2098, %v1942
      %v2100 = vadd.f32 %v2099, %v1947
      %v2101 = vadd.f32 %v2100, %v1952
      %v2102 = vadd.f32 %v2101, %v1957
      %v2103 = vadd.f32 %v2102, %v1962
      %v2104 = vadd.f32 %v2103, %v1967
      %v2105 = vadd.f32 %v2104, %v1972
      %v2106 = vadd.f32 %v2105, %v1977
      %v2107 = vadd.f32 %v2106, %v1982
      %v2108 = vadd.f32 %v2107, %v1987
      %v2109 = vadd.f32 %v2108, %v1992
      %v2110 = vadd.f32 %v2109, %v1997
      %v2111 = vadd.f32 %v2110, %v2002
      %v2112 = vadd.f32 %v2111, %v2007
      %v2113 = vadd.f32 %v2112, %v2012
      %v2114 = vadd.f32 %v2113, %v2017
      %v2115 = vadd.f32 %v2114, %v2022
      %v2116 = vadd.f32 %v2115, %v2027
      %v2117 = vadd.f32 %v2116, %v2032
      %v2118 = vadd.f32 %v2117, %v2037
      %v2119 = vadd.f32 %v2118, %v2042
      %v2120 = vadd.f32 %v2119, %v2047
      %v2121 = vadd.f32 %v2120, %v2052
      %v2122 = vadd.f32 %v2121, %v2057
      %v2123 = vrot.slane %v2122, 4
      %v2124 = vadd.f32 %v2122, %v2123
      %v2125 = vrot.slane %v2124, 2
      %v2126 = vadd.f32 %v2124, %v2125
      %v2127 = vrot.slane %v2126, 1
      %v2128 = vadd.f32 %v2126, %v2127
      %v2129 = vmul.f32 %v1902, %v1902
      %v2130 = vmul.f32 %v1907, %v1907
      %v2131 = vmul.f32 %v1912, %v1912
      %v2132 = vmul.f32 %v1917, %v1917
      %v2133 = vmul.f32 %v1922, %v1922
      %v2134 = vmul.f32 %v1927, %v1927
      %v2135 = vmul.f32 %v1932, %v1932
      %v2136 = vmul.f32 %v1937, %v1937
      %v2137 = vmul.f32 %v1942, %v1942
      %v2138 = vmul.f32 %v1947, %v1947
      %v2139 = vmul.f32 %v1952, %v1952
      %v2140 = vmul.f32 %v1957, %v1957
      %v2141 = vmul.f32 %v1962, %v1962
      %v2142 = vmul.f32 %v1967, %v1967
      %v2143 = vmul.f32 %v1972, %v1972
      %v2144 = vmul.f32 %v1977, %v1977
      %v2145 = vmul.f32 %v1982, %v1982
      %v2146 = vmul.f32 %v1987, %v1987
      %v2147 = vmul.f32 %v1992, %v1992
      %v2148 = vmul.f32 %v1997, %v1997
      %v2149 = vmul.f32 %v2002, %v2002
      %v2150 = vmul.f32 %v2007, %v2007
      %v2151 = vmul.f32 %v2012, %v2012
      %v2152 = vmul.f32 %v2017, %v2017
      %v2153 = vmul.f32 %v2022, %v2022
      %v2154 = vmul.f32 %v2027, %v2027
      %v2155 = vmul.f32 %v2032, %v2032
      %v2156 = vmul.f32 %v2037, %v2037
      %v2157 = vmul.f32 %v2042, %v2042
      %v2158 = vmul.f32 %v2047, %v2047
      %v2159 = vmul.f32 %v2052, %v2052
      %v2160 = vmul.f32 %v2057, %v2057
      %v2161 = vadd.f32 %v2129, %v2130
      %v2162 = vadd.f32 %v2161, %v2131
      %v2163 = vadd.f32 %v2162, %v2132
      %v2164 = vadd.f32 %v2163, %v2133
      %v2165 = vadd.f32 %v2164, %v2134
      %v2166 = vadd.f32 %v2165, %v2135
      %v2167 = vadd.f32 %v2166, %v2136
      %v2168 = vadd.f32 %v2167, %v2137
      %v2169 = vadd.f32 %v2168, %v2138
      %v2170 = vadd.f32 %v2169, %v2139
      %v2171 = vadd.f32 %v2170, %v2140
      %v2172 = vadd.f32 %v2171, %v2141
      %v2173 = vadd.f32 %v2172, %v2142
      %v2174 = vadd.f32 %v2173, %v2143
      %v2175 = vadd.f32 %v2174, %v2144
      %v2176 = vadd.f32 %v2175, %v2145
      %v2177 = vadd.f32 %v2176, %v2146
      %v2178 = vadd.f32 %v2177, %v2147
      %v2179 = vadd.f32 %v2178, %v2148
      %v2180 = vadd.f32 %v2179, %v2149
      %v2181 = vadd.f32 %v2180, %v2150
      %v2182 = vadd.f32 %v2181, %v2151
      %v2183 = vadd.f32 %v2182, %v2152
      %v2184 = vadd.f32 %v2183, %v2153
      %v2185 = vadd.f32 %v2184, %v2154
      %v2186 = vadd.f32 %v2185, %v2155
      %v2187 = vadd.f32 %v2186, %v2156
      %v2188 = vadd.f32 %v2187, %v2157
      %v2189 = vadd.f32 %v2188, %v2158
      %v2190 = vadd.f32 %v2189, %v2159
      %v2191 = vadd.f32 %v2190, %v2160
      %v2192 = vrot.slane %v2191, 4
      %v2193 = vadd.f32 %v2191, %v2192
      %v2194 = vrot.slane %v2193, 2
      %v2195 = vadd.f32 %v2193, %v2194
      %v2196 = vrot.slane %v2195, 1
      %v2197 = vadd.f32 %v2195, %v2196
      %v2198 = vsel %vm397, %v2128, %v2197
      %p2199 = scmp.eq.s32.totalorder %s17, 0
      // Predicated region
      $region37: #{bottleneck_forward.5} parent=35 // pred_check
        %p2200 = pneg %p2199
      $region38: #{bottleneck_forward.5} parent=35 // pred_check_branch
        %2202 = sbr.rel (%p2200) target = $region40
      $region39: #{bottleneck_forward.5} parent=35 // pred_region
        %2203 = vst [vmem:[%s5] sm:$0x3] 0.0
      $region40: #{bottleneck_forward.5} parent=35 // pred_fallthru
        _
      %v2204 = vld [vmem:[%s5] sm:$0x3]
      %v2205 = vadd.f32 %v2204, %v2198
      %2206 = vst [vmem:[%s5] sm:$0x3] %v2205
      %p2207 = scmp.lt.s32.totalorder %s17, 1
      %s2208 = scalar_select %p2207, %s17, 1
      %s2209 = smul.addr %s2208, 32
      %s2210 = smul.addr %s2209, 8
      %s2211 = scalar_lea.vmem %s4, %s2210
      // Predicated region
      $region41: #{bottleneck_forward.5} parent=35 // pred_check
        %p2212 = pneg %p124
      $region42: #{bottleneck_forward.5} parent=35 // pred_check_branch
        %2214 = sbr.rel (%p2212) target = $region44
      $region43: #{bottleneck_forward.5} parent=35 // pred_region
        _
      $region44: #{bottleneck_forward.5} parent=35 // pred_fallthru
        _
      // Predicated region
      $region45: #{bottleneck_forward.5} parent=35 // pred_check
        %p2215 = pneg %p145
      $region46: #{bottleneck_forward.5} parent=35 // pred_check_branch
        %2217 = sbr.rel (%p2215) target = $region48
      $region47: #{bottleneck_forward.5} parent=35 // pred_region
        _
      $region48: #{bottleneck_forward.5} parent=35 // pred_fallthru
        _
      // Predicated region
      $region49: #{bottleneck_forward.5} parent=35 // pred_check
        %p2218 = pneg %p145
      $region50: #{bottleneck_forward.5} parent=35 // pred_check_branch
        %2220 = sbr.rel (%p2218) target = $region52
      $region51: #{bottleneck_forward.5} parent=35 // pred_region
        _
      $region52: #{bottleneck_forward.5} parent=35 // pred_fallthru
        _
    $region36: #{bottleneck_forward.5} parent=5 // pred_fallthru
      _
    %p2221 = scmp.le.s32.totalorder 2, %s12
    // Predicated region
    $region53: #{bottleneck_forward.5} parent=5 // pred_check
      %p2222 = pneg %p2221
    $region54: #{bottleneck_forward.5} parent=5 // pred_check_branch
      %2224 = sbr.rel (%p2222) target = $region56
    $region55: #{bottleneck_forward.5} parent=5 // pred_region
      %s2225 = ssub.s32 %s12, 2
      // Predicated region
      $region57: #{bottleneck_forward.5} parent=55 // pred_check
        %p2226 = pneg %p130
      $region58: #{bottleneck_forward.5} parent=55 // pred_check_branch
        %2228 = sbr.rel (%p2226) target = $region60
      $region59: #{bottleneck_forward.5} parent=55 // pred_region
        %p2229 = scmp.lt.s32.totalorder %s18, 1
        %s2230 = scalar_select %p2229, %s18, 1
        %s2231 = smul.addr %s2230, 32
        %s2232 = smul.addr %s2231, 8
        %s2233 = scalar_lea.vmem %s4, %s2232
      $region60: #{bottleneck_forward.5} parent=55 // pred_fallthru
        _
    $region56: #{bottleneck_forward.5} parent=5 // pred_fallthru
      _
  $region6: #{bottleneck_forward.5} parent=0 // loop_footer
    %s16 = sadd.s32 1, %s12
  $region7: #{bottleneck_forward.5} parent=0 // loop_footer_branch
    %11 = sbr.rel target = $region3
  $region8: #{bottleneck_forward.5} parent=0 // loop_exit
    _

// kernel: bottleneck_forward.7
$region0: #{bottleneck_forward.7}
  #allocation0 [shape = 'u32[]', space=smem, size = 0x4, offset = 0x4, fixed_abs, tag = 'smem constant byte address 0x4 - core index']
  #allocation1 [shape = 'u32[144,128]{1,0:T(1,128)}', space=vmem, size = 0x12000, scoped, tag = 'internal scratch']
  %s0 = inlined_call_operand.vmem [shape: f32[512,128], index: 0, kind: input, shape index: {}]
  %s1 = inlined_call_operand.vmem [shape: f32[512,128], index: 1, kind: input, shape index: {}]
  %s2 = inlined_call_operand.vmem [shape: f32[1,128], index: 2, kind: input, shape index: {}]
  %s3 = inlined_call_operand.vmem [shape: f32[1,128], index: 3, kind: input, shape index: {}]
  %s4 = inlined_call_operand.vmem [shape: f32[1,128], index: 4, kind: input, shape index: {}]
  %s5 = inlined_call_operand.vmem [shape: f32[1,128], index: 5, kind: input, shape index: {}]
  %s6 = inlined_call_operand.vmem [shape: f32[512,128], index: 6, kind: output, shape index: {}]
  %s7 = sld [smem:[#allocation0]]
  $region57: #{bottleneck_forward.7} parent=0
    _
  %s9 = ssub.s32 1, %s7
  %s10 = scalar_select 0, %s9, %s7
  loop: start=0, step=1, limit=4
  $region2: #{bottleneck_forward.7} parent=0 // loop_pre_header
    _
  $region3: #{bottleneck_forward.7} parent=0 // loop_header
    %s12 = sphi 0, %s16
    %p13 = scmp.ge.s32.totalorder %s12, 4
    %s22 = sphi 0, %s24
    %s25 = sphi 0, %s22
    %s26 = sphi 0, %s25
    %s42 = sphi 0, %s26
    %s48 = sphi 0, %s50
    %s51 = sphi 0, %s48
    %s52 = sphi 0, %s51
    %s68 = sphi 0, %s52
    %s72 = sphi 0, %s72
    %s74 = sphi 0, %s72
    %s75 = sphi 0, %s74
    %s89 = sphi 0, %s75
    %s93 = sphi 0, %s93
    %s95 = sphi 0, %s93
    %s96 = sphi 0, %s95
    %s110 = sphi 0, %s96
    %s114 = sphi 0, %s114
    %s116 = sphi 0, %s114
    %s117 = sphi 0, %s116
    %s131 = sphi 0, %s117
    %s135 = sphi 0, %s135
    %s137 = sphi 0, %s135
    %s138 = sphi 0, %s137
    %s152 = sphi 0, %s138
    %s158 = sphi 0, %s160
    %s161 = sphi 0, %s158
    %s162 = sphi 0, %s161
    %s178 = sphi 0, %s162
  $region4: #{bottleneck_forward.7} parent=0 // loop_header_branch
    %15 = sbr.rel (%p13) target = $region8
  $region5: #{bottleneck_forward.7} parent=0 // loop_body
    %s17 = ssub.s32 %s12, 1
    %s18 = ssub.s32 %s12, 2
    %s19 = sadd.s32 %s12, 1
    %s20 = ssub.s32 %s12, %s19
    %p21 = scmp.eq.s32.totalorder %s20, 0
    %s23 = sadd.s32 %s22, 1
    %s24 = scalar_select %p21, %s22, %s23
    %p27 = pneg %p21
    %p28 = scmp.eq.s32.totalorder %s12, 1
    %p29 = por %p27, %p28
    %p30 = scmp.ne.s32.totalorder %s22, %s25
    %p31 = scmp.eq.s32.totalorder %s12, 0
    %p32 = por %p30, %p31
    %p33 = scmp.ne.s32.totalorder %s22, %s25
    %p34 = scmp.eq.s32.totalorder %s17, 1
    %p35 = por %p33, %p34
    %p36 = scmp.ne.s32.totalorder %s25, %s26
    %p37 = scmp.eq.s32.totalorder %s17, 0
    %p38 = por %p36, %p37
    %p39 = scmp.ne.s32.totalorder %s25, %s26
    %p40 = scmp.eq.s32.totalorder %s18, 1
    %p41 = por %p39, %p40
    %p43 = scmp.ne.s32.totalorder %s26, %s42
    %p44 = scmp.eq.s32.totalorder %s18, 0
    %p45 = por %p43, %p44
    %s46 = ssub.s32 %s12, %s19
    %p47 = scmp.eq.s32.totalorder %s46, 0
    %s49 = sadd.s32 %s48, 1
    %s50 = scalar_select %p47, %s48, %s49
    %p53 = pneg %p47
    %p54 = scmp.eq.s32.totalorder %s12, 1
    %p55 = por %p53, %p54
    %p56 = scmp.ne.s32.totalorder %s48, %s51
    %p57 = scmp.eq.s32.totalorder %s12, 0
    %p58 = por %p56, %p57
    %p59 = scmp.ne.s32.totalorder %s48, %s51
    %p60 = scmp.eq.s32.totalorder %s17, 1
    %p61 = por %p59, %p60
    %p62 = scmp.ne.s32.totalorder %s51, %s52
    %p63 = scmp.eq.s32.totalorder %s17, 0
    %p64 = por %p62, %p63
    %p65 = scmp.ne.s32.totalorder %s51, %s52
    %p66 = scmp.eq.s32.totalorder %s18, 1
    %p67 = por %p65, %p66
    %p69 = scmp.ne.s32.totalorder %s52, %s68
    %p70 = scmp.eq.s32.totalorder %s18, 0
    %p71 = por %p69, %p70
    %s73 = sadd.s32 %s72, 1
    %p76 = scmp.eq.s32.totalorder %s12, 1
    %p77 = scmp.ne.s32.totalorder %s72, %s74
    %p78 = scmp.eq.s32.totalorder %s12, 0
    %p79 = por %p77, %p78
    %p80 = scmp.ne.s32.totalorder %s72, %s74
    %p81 = scmp.eq.s32.totalorder %s17, 1
    %p82 = por %p80, %p81
    %p83 = scmp.ne.s32.totalorder %s74, %s75
    %p84 = scmp.eq.s32.totalorder %s17, 0
    %p85 = por %p83, %p84
    %p86 = scmp.ne.s32.totalorder %s74, %s75
    %p87 = scmp.eq.s32.totalorder %s18, 1
    %p88 = por %p86, %p87
    %p90 = scmp.ne.s32.totalorder %s75, %s89
    %p91 = scmp.eq.s32.totalorder %s18, 0
    %p92 = por %p90, %p91
    %s94 = sadd.s32 %s93, 1
    %p97 = scmp.eq.s32.totalorder %s12, 1
    %p98 = scmp.ne.s32.totalorder %s93, %s95
    %p99 = scmp.eq.s32.totalorder %s12, 0
    %p100 = por %p98, %p99
    %p101 = scmp.ne.s32.totalorder %s93, %s95
    %p102 = scmp.eq.s32.totalorder %s17, 1
    %p103 = por %p101, %p102
    %p104 = scmp.ne.s32.totalorder %s95, %s96
    %p105 = scmp.eq.s32.totalorder %s17, 0
    %p106 = por %p104, %p105
    %p107 = scmp.ne.s32.totalorder %s95, %s96
    %p108 = scmp.eq.s32.totalorder %s18, 1
    %p109 = por %p107, %p108
    %p111 = scmp.ne.s32.totalorder %s96, %s110
    %p112 = scmp.eq.s32.totalorder %s18, 0
    %p113 = por %p111, %p112
    %s115 = sadd.s32 %s114, 1
    %p118 = scmp.eq.s32.totalorder %s12, 1
    %p119 = scmp.ne.s32.totalorder %s114, %s116
    %p120 = scmp.eq.s32.totalorder %s12, 0
    %p121 = por %p119, %p120
    %p122 = scmp.ne.s32.totalorder %s114, %s116
    %p123 = scmp.eq.s32.totalorder %s17, 1
    %p124 = por %p122, %p123
    %p125 = scmp.ne.s32.totalorder %s116, %s117
    %p126 = scmp.eq.s32.totalorder %s17, 0
    %p127 = por %p125, %p126
    %p128 = scmp.ne.s32.totalorder %s116, %s117
    %p129 = scmp.eq.s32.totalorder %s18, 1
    %p130 = por %p128, %p129
    %p132 = scmp.ne.s32.totalorder %s117, %s131
    %p133 = scmp.eq.s32.totalorder %s18, 0
    %p134 = por %p132, %p133
    %s136 = sadd.s32 %s135, 1
    %p139 = scmp.eq.s32.totalorder %s12, 1
    %p140 = scmp.ne.s32.totalorder %s135, %s137
    %p141 = scmp.eq.s32.totalorder %s12, 0
    %p142 = por %p140, %p141
    %p143 = scmp.ne.s32.totalorder %s135, %s137
    %p144 = scmp.eq.s32.totalorder %s17, 1
    %p145 = por %p143, %p144
    %p146 = scmp.ne.s32.totalorder %s137, %s138
    %p147 = scmp.eq.s32.totalorder %s17, 0
    %p148 = por %p146, %p147
    %p149 = scmp.ne.s32.totalorder %s137, %s138
    %p150 = scmp.eq.s32.totalorder %s18, 1
    %p151 = por %p149, %p150
    %p153 = scmp.ne.s32.totalorder %s138, %s152
    %p154 = scmp.eq.s32.totalorder %s18, 0
    %p155 = por %p153, %p154
    %s156 = ssub.s32 %s12, %s19
    %p157 = scmp.eq.s32.totalorder %s156, 0
    %s159 = sadd.s32 %s158, 1
    %s160 = scalar_select %p157, %s158, %s159
    %p163 = pneg %p157
    %p164 = scmp.eq.s32.totalorder %s12, 1
    %p165 = por %p163, %p164
    %p166 = scmp.ne.s32.totalorder %s158, %s161
    %p167 = scmp.eq.s32.totalorder %s12, 0
    %p168 = por %p166, %p167
    %p169 = scmp.ne.s32.totalorder %s158, %s161
    %p170 = scmp.eq.s32.totalorder %s17, 1
    %p171 = por %p169, %p170
    %p172 = scmp.ne.s32.totalorder %s161, %s162
    %p173 = scmp.eq.s32.totalorder %s17, 0
    %p174 = por %p172, %p173
    %p175 = scmp.ne.s32.totalorder %s161, %s162
    %p176 = scmp.eq.s32.totalorder %s18, 1
    %p177 = por %p175, %p176
    %p179 = scmp.ne.s32.totalorder %s162, %s178
    %p180 = scmp.eq.s32.totalorder %s18, 0
    %p181 = por %p179, %p180
    %p182 = scmp.le.s32.totalorder 1, %s12
    %p183 = scmp.lt.s32.totalorder %s12, 3
    %p184 = pnand %p182, %p183
    %p185 = pneg %p184
    // Predicated region
    $region9: #{bottleneck_forward.7} parent=5 // pred_check
      _
    $region10: #{bottleneck_forward.7} parent=5 // pred_check_branch
      %187 = sbr.rel (%p184) target = $region12
    $region11: #{bottleneck_forward.7} parent=5 // pred_region
      %s188 = ssub.s32 %s12, 1
      // Predicated region
      $region13: #{bottleneck_forward.7} parent=11 // pred_check
        %p189 = pneg %p85
      $region14: #{bottleneck_forward.7} parent=11 // pred_check_branch
        %191 = sbr.rel (%p189) target = $region16
      $region15: #{bottleneck_forward.7} parent=11 // pred_region
        _
      $region16: #{bottleneck_forward.7} parent=11 // pred_fallthru
        _
      // Predicated region
      $region17: #{bottleneck_forward.7} parent=11 // pred_check
        %p192 = pneg %p106
      $region18: #{bottleneck_forward.7} parent=11 // pred_check_branch
        %194 = sbr.rel (%p192) target = $region20
      $region19: #{bottleneck_forward.7} parent=11 // pred_region
        _
      $region20: #{bottleneck_forward.7} parent=11 // pred_fallthru
        _
      // Predicated region
      $region21: #{bottleneck_forward.7} parent=11 // pred_check
        %p195 = pneg %p127
      $region22: #{bottleneck_forward.7} parent=11 // pred_check_branch
        %197 = sbr.rel (%p195) target = $region24
      $region23: #{bottleneck_forward.7} parent=11 // pred_region
        _
      $region24: #{bottleneck_forward.7} parent=11 // pred_fallthru
        _
      // Predicated region
      $region25: #{bottleneck_forward.7} parent=11 // pred_check
        %p198 = pneg %p148
      $region26: #{bottleneck_forward.7} parent=11 // pred_check_branch
        %200 = sbr.rel (%p198) target = $region28
      $region27: #{bottleneck_forward.7} parent=11 // pred_region
        _
      $region28: #{bottleneck_forward.7} parent=11 // pred_fallthru
        _
    $region12: #{bottleneck_forward.7} parent=5 // pred_fallthru
      _
    %p201 = scmp.lt.s32.totalorder %s12, 2
    // Predicated region
    $region29: #{bottleneck_forward.7} parent=5 // pred_check
      %p202 = pneg %p201
    $region30: #{bottleneck_forward.7} parent=5 // pred_check_branch
      %204 = sbr.rel (%p202) target = $region32
    $region31: #{bottleneck_forward.7} parent=5 // pred_region
      // Predicated region
      $region33: #{bottleneck_forward.7} parent=31 // pred_check
        %p205 = pneg %p32
      $region34: #{bottleneck_forward.7} parent=31 // pred_check_branch
        %207 = sbr.rel (%p205) target = $region36
      $region35: #{bottleneck_forward.7} parent=31 // pred_region
        %s208 = smul.u32 32, %s12
        %p209 = scmp.lt.s32.totalorder %s208, 63
        %s210 = scalar_select %p209, %s208, 63
        %s211 = smul.addr %s210, 8
        %s212 = scalar_lea.vmem %s0, %s211
        %s213 = smul.u32 32, %s12
      $region36: #{bottleneck_forward.7} parent=31 // pred_fallthru
        _
      // Predicated region
      $region37: #{bottleneck_forward.7} parent=31 // pred_check
        %p214 = pneg %p58
      $region38: #{bottleneck_forward.7} parent=31 // pred_check_branch
        %216 = sbr.rel (%p214) target = $region40
      $region39: #{bottleneck_forward.7} parent=31 // pred_region
        %s217 = smul.u32 32, %s12
        %p218 = scmp.lt.s32.totalorder %s217, 63
        %s219 = scalar_select %p218, %s217, 63
        %s220 = smul.addr %s219, 8
        %s221 = scalar_lea.vmem %s1, %s220
        %s222 = smul.u32 32, %s12
      $region40: #{bottleneck_forward.7} parent=31 // pred_fallthru
        _
    $region32: #{bottleneck_forward.7} parent=5 // pred_fallthru
      _
    %p223 = scmp.le.s32.totalorder 1, %s12
    %p224 = scmp.lt.s32.totalorder %s12, 3
    %p225 = pnand %p223, %p224
    %p226 = pneg %p225
    // Predicated region
    $region41: #{bottleneck_forward.7} parent=5 // pred_check
      _
    $region42: #{bottleneck_forward.7} parent=5 // pred_check_branch
      %228 = sbr.rel (%p225) target = $region44
    $region43: #{bottleneck_forward.7} parent=5 // pred_region
      %s229 = ssub.s32 %s12, 1
      %s230 = smul.u32 32, %s17
      %p231 = scmp.lt.s32.totalorder %s230, 63
      %s232 = scalar_select %p231, %s230, 63
      %s233 = smul.addr %s232, 8
      %s234 = scalar_lea.vmem %s0, %s233
      %p235 = pneg %p38
      %p236 = pneg %p35
      %s237 = smul.u32 32, %s17
      %p238 = scmp.lt.s32.totalorder %s237, 63
      %s239 = scalar_select %p238, %s237, 63
      %s240 = smul.addr %s239, 8
      %s241 = scalar_lea.vmem %s1, %s240
      %p242 = pneg %p64
      %p243 = pneg %p61
      %p244 = pneg %p85
      %p245 = pneg %p82
      %p246 = pneg %p106
      %p247 = pneg %p103
      %p248 = pneg %p127
      %p249 = pneg %p124
      %p250 = pneg %p148
      %p251 = pneg %p145
      %p252 = pneg %p174
      %p253 = pneg %p171
      %s254 = smul.u32 32, %s17
      %p255 = scmp.lt.s32.totalorder %s254, 63
      %s256 = scalar_select %p255, %s254, 63
      %s257 = smul.addr %s256, 8
      %s258 = scalar_lea.vmem %s6, %s257
      %s259 = smul.u32 32, %s17
      %p260 = scmp.lt.s32.totalorder %s259, 63
      %s261 = scalar_select %p260, %s259, 63
      %s262 = smul.addr %s261, 8
      %s263 = scalar_lea.vmem %s0, %s262
      %s264 = smul.u32 32, %s17
      %s265 = smul.u32 32, %s17
      %p266 = scmp.lt.s32.totalorder %s265, 63
      %s267 = scalar_select %p266, %s265, 63
      %s268 = smul.addr %s267, 8
      %s269 = scalar_lea.vmem %s1, %s268
      %s270 = smul.u32 32, %s17
      %s271 = smul.u32 32, %s17
      %p272 = scmp.lt.s32.totalorder %s271, 63
      %s273 = scalar_select %p272, %s271, 63
      %s274 = smul.addr %s273, 8
      %s275 = scalar_lea.vmem %s6, %s274
      %s276 = smul.u32 32, %s17
      %v277 = vld [vmem:[%s263] sm:$0xff]
      %v278 = vld [vmem:[%s263 + $0x8] sm:$0xff]
      %v279 = vld [vmem:[%s263 + $0x10] sm:$0xff]
      %v280 = vld [vmem:[%s263 + $0x18] sm:$0xff]
      %v281 = vld [vmem:[%s263 + $0x20] sm:$0xff]
      %v282 = vld [vmem:[%s263 + $0x28] sm:$0xff]
      %v283 = vld [vmem:[%s263 + $0x30] sm:$0xff]
      %v284 = vld [vmem:[%s263 + $0x38] sm:$0xff]
      %v285 = vld [vmem:[%s263 + $0x40] sm:$0xff]
      %v286 = vld [vmem:[%s263 + $0x48] sm:$0xff]
      %v287 = vld [vmem:[%s263 + $0x50] sm:$0xff]
      %v288 = vld [vmem:[%s263 + $0x58] sm:$0xff]
      %v289 = vld [vmem:[%s263 + $0x60] sm:$0xff]
      %v290 = vld [vmem:[%s263 + $0x68] sm:$0xff]
      %v291 = vld [vmem:[%s263 + $0x70] sm:$0xff]
      %v292 = vld [vmem:[%s263 + $0x78] sm:$0xff]
      %v293 = vld [vmem:[%s263 + $0x80] sm:$0xff]
      %v294 = vld [vmem:[%s263 + $0x88] sm:$0xff]
      %v295 = vld [vmem:[%s263 + $0x90] sm:$0xff]
      %v296 = vld [vmem:[%s263 + $0x98] sm:$0xff]
      %v297 = vld [vmem:[%s263 + $0xa0] sm:$0xff]
      %v298 = vld [vmem:[%s263 + $0xa8] sm:$0xff]
      %v299 = vld [vmem:[%s263 + $0xb0] sm:$0xff]
      %v300 = vld [vmem:[%s263 + $0xb8] sm:$0xff]
      %v301 = vld [vmem:[%s263 + $0xc0] sm:$0xff]
      %v302 = vld [vmem:[%s263 + $0xc8] sm:$0xff]
      %v303 = vld [vmem:[%s263 + $0xd0] sm:$0xff]
      %v304 = vld [vmem:[%s263 + $0xd8] sm:$0xff]
      %v305 = vld [vmem:[%s263 + $0xe0] sm:$0xff]
      %v306 = vld [vmem:[%s263 + $0xe8] sm:$0xff]
      %v307 = vld [vmem:[%s263 + $0xf0] sm:$0xff]
      %v308 = vld [vmem:[%s263 + $0xf8] sm:$0xff]
      %v309 = vld [vmem:[%s2] sm:$0x1]
      %v311 = vlaneseq
      %v312 = vshrl.u32 %v311, 7
      %v313 = vsub.s32 0, %v312
      %v314 = vrot.slane %v309, %v313
      %v316 = vmul.f32 %v277, %v314
      %v317 = vmul.f32 %v278, %v314
      %v318 = vmul.f32 %v279, %v314
      %v319 = vmul.f32 %v280, %v314
      %v320 = vmul.f32 %v281, %v314
      %v321 = vmul.f32 %v282, %v314
      %v322 = vmul.f32 %v283, %v314
      %v323 = vmul.f32 %v284, %v314
      %v324 = vmul.f32 %v285, %v314
      %v325 = vmul.f32 %v286, %v314
      %v326 = vmul.f32 %v287, %v314
      %v327 = vmul.f32 %v288, %v314
      %v328 = vmul.f32 %v289, %v314
      %v329 = vmul.f32 %v290, %v314
      %v330 = vmul.f32 %v291, %v314
      %v331 = vmul.f32 %v292, %v314
      %v332 = vmul.f32 %v293, %v314
      %v333 = vmul.f32 %v294, %v314
      %v334 = vmul.f32 %v295, %v314
      %v335 = vmul.f32 %v296, %v314
      %v336 = vmul.f32 %v297, %v314
      %v337 = vmul.f32 %v298, %v314
      %v338 = vmul.f32 %v299, %v314
      %v339 = vmul.f32 %v300, %v314
      %v340 = vmul.f32 %v301, %v314
      %v341 = vmul.f32 %v302, %v314
      %v342 = vmul.f32 %v303, %v314
      %v343 = vmul.f32 %v304, %v314
      %v344 = vmul.f32 %v305, %v314
      %v345 = vmul.f32 %v306, %v314
      %v346 = vmul.f32 %v307, %v314
      %v347 = vmul.f32 %v308, %v314
      %v348 = vld [vmem:[%s3] sm:$0x1]
      %v350 = vlaneseq
      %v351 = vshrl.u32 %v350, 7
      %v352 = vsub.s32 0, %v351
      %v353 = vrot.slane %v348, %v352
      %v355 = vadd.f32 %v316, %v353
      %v356 = vadd.f32 %v317, %v353
      %v357 = vadd.f32 %v318, %v353
      %v358 = vadd.f32 %v319, %v353
      %v359 = vadd.f32 %v320, %v353
      %v360 = vadd.f32 %v321, %v353
      %v361 = vadd.f32 %v322, %v353
      %v362 = vadd.f32 %v323, %v353
      %v363 = vadd.f32 %v324, %v353
      %v364 = vadd.f32 %v325, %v353
      %v365 = vadd.f32 %v326, %v353
      %v366 = vadd.f32 %v327, %v353
      %v367 = vadd.f32 %v328, %v353
      %v368 = vadd.f32 %v329, %v353
      %v369 = vadd.f32 %v330, %v353
      %v370 = vadd.f32 %v331, %v353
      %v371 = vadd.f32 %v332, %v353
      %v372 = vadd.f32 %v333, %v353
      %v373 = vadd.f32 %v334, %v353
      %v374 = vadd.f32 %v335, %v353
      %v375 = vadd.f32 %v336, %v353
      %v376 = vadd.f32 %v337, %v353
      %v377 = vadd.f32 %v338, %v353
      %v378 = vadd.f32 %v339, %v353
      %v379 = vadd.f32 %v340, %v353
      %v380 = vadd.f32 %v341, %v353
      %v381 = vadd.f32 %v342, %v353
      %v382 = vadd.f32 %v343, %v353
      %v383 = vadd.f32 %v344, %v353
      %v384 = vadd.f32 %v345, %v353
      %v385 = vadd.f32 %v346, %v353
      %v386 = vadd.f32 %v347, %v353
      %v387 = vld [vmem:[%s269] sm:$0xff]
      %v388 = vld [vmem:[%s269 + $0x8] sm:$0xff]
      %v389 = vld [vmem:[%s269 + $0x10] sm:$0xff]
      %v390 = vld [vmem:[%s269 + $0x18] sm:$0xff]
      %v391 = vld [vmem:[%s269 + $0x20] sm:$0xff]
      %v392 = vld [vmem:[%s269 + $0x28] sm:$0xff]
      %v393 = vld [vmem:[%s269 + $0x30] sm:$0xff]
      %v394 = vld [vmem:[%s269 + $0x38] sm:$0xff]
      %v395 = vld [vmem:[%s269 + $0x40] sm:$0xff]
      %v396 = vld [vmem:[%s269 + $0x48] sm:$0xff]
      %v397 = vld [vmem:[%s269 + $0x50] sm:$0xff]
      %v398 = vld [vmem:[%s269 + $0x58] sm:$0xff]
      %v399 = vld [vmem:[%s269 + $0x60] sm:$0xff]
      %v400 = vld [vmem:[%s269 + $0x68] sm:$0xff]
      %v401 = vld [vmem:[%s269 + $0x70] sm:$0xff]
      %v402 = vld [vmem:[%s269 + $0x78] sm:$0xff]
      %v403 = vld [vmem:[%s269 + $0x80] sm:$0xff]
      %v404 = vld [vmem:[%s269 + $0x88] sm:$0xff]
      %v405 = vld [vmem:[%s269 + $0x90] sm:$0xff]
      %v406 = vld [vmem:[%s269 + $0x98] sm:$0xff]
      %v407 = vld [vmem:[%s269 + $0xa0] sm:$0xff]
      %v408 = vld [vmem:[%s269 + $0xa8] sm:$0xff]
      %v409 = vld [vmem:[%s269 + $0xb0] sm:$0xff]
      %v410 = vld [vmem:[%s269 + $0xb8] sm:$0xff]
      %v411 = vld [vmem:[%s269 + $0xc0] sm:$0xff]
      %v412 = vld [vmem:[%s269 + $0xc8] sm:$0xff]
      %v413 = vld [vmem:[%s269 + $0xd0] sm:$0xff]
      %v414 = vld [vmem:[%s269 + $0xd8] sm:$0xff]
      %v415 = vld [vmem:[%s269 + $0xe0] sm:$0xff]
      %v416 = vld [vmem:[%s269 + $0xe8] sm:$0xff]
      %v417 = vld [vmem:[%s269 + $0xf0] sm:$0xff]
      %v418 = vld [vmem:[%s269 + $0xf8] sm:$0xff]
      %v419 = vld [vmem:[%s4] sm:$0x1]
      %v421 = vlaneseq
      %v422 = vshrl.u32 %v421, 7
      %v423 = vsub.s32 0, %v422
      %v424 = vrot.slane %v419, %v423
      %v426 = vmul.f32 %v387, %v424
      %v427 = vmul.f32 %v388, %v424
      %v428 = vmul.f32 %v389, %v424
      %v429 = vmul.f32 %v390, %v424
      %v430 = vmul.f32 %v391, %v424
      %v431 = vmul.f32 %v392, %v424
      %v432 = vmul.f32 %v393, %v424
      %v433 = vmul.f32 %v394, %v424
      %v434 = vmul.f32 %v395, %v424
      %v435 = vmul.f32 %v396, %v424
      %v436 = vmul.f32 %v397, %v424
      %v437 = vmul.f32 %v398, %v424
      %v438 = vmul.f32 %v399, %v424
      %v439 = vmul.f32 %v400, %v424
      %v440 = vmul.f32 %v401, %v424
      %v441 = vmul.f32 %v402, %v424
      %v442 = vmul.f32 %v403, %v424
      %v443 = vmul.f32 %v404, %v424
      %v444 = vmul.f32 %v405, %v424
      %v445 = vmul.f32 %v406, %v424
      %v446 = vmul.f32 %v407, %v424
      %v447 = vmul.f32 %v408, %v424
      %v448 = vmul.f32 %v409, %v424
      %v449 = vmul.f32 %v410, %v424
      %v450 = vmul.f32 %v411, %v424
      %v451 = vmul.f32 %v412, %v424
      %v452 = vmul.f32 %v413, %v424
      %v453 = vmul.f32 %v414, %v424
      %v454 = vmul.f32 %v415, %v424
      %v455 = vmul.f32 %v416, %v424
      %v456 = vmul.f32 %v417, %v424
      %v457 = vmul.f32 %v418, %v424
      %v458 = vld [vmem:[%s5] sm:$0x1]
      %v460 = vlaneseq
      %v461 = vshrl.u32 %v460, 7
      %v462 = vsub.s32 0, %v461
      %v463 = vrot.slane %v458, %v462
      %v465 = vadd.f32 %v426, %v463
      %v466 = vadd.f32 %v427, %v463
      %v467 = vadd.f32 %v428, %v463
      %v468 = vadd.f32 %v429, %v463
      %v469 = vadd.f32 %v430, %v463
      %v470 = vadd.f32 %v431, %v463
      %v471 = vadd.f32 %v432, %v463
      %v472 = vadd.f32 %v433, %v463
      %v473 = vadd.f32 %v434, %v463
      %v474 = vadd.f32 %v435, %v463
      %v475 = vadd.f32 %v436, %v463
      %v476 = vadd.f32 %v437, %v463
      %v477 = vadd.f32 %v438, %v463
      %v478 = vadd.f32 %v439, %v463
      %v479 = vadd.f32 %v440, %v463
      %v480 = vadd.f32 %v441, %v463
      %v481 = vadd.f32 %v442, %v463
      %v482 = vadd.f32 %v443, %v463
      %v483 = vadd.f32 %v444, %v463
      %v484 = vadd.f32 %v445, %v463
      %v485 = vadd.f32 %v446, %v463
      %v486 = vadd.f32 %v447, %v463
      %v487 = vadd.f32 %v448, %v463
      %v488 = vadd.f32 %v449, %v463
      %v489 = vadd.f32 %v450, %v463
      %v490 = vadd.f32 %v451, %v463
      %v491 = vadd.f32 %v452, %v463
      %v492 = vadd.f32 %v453, %v463
      %v493 = vadd.f32 %v454, %v463
      %v494 = vadd.f32 %v455, %v463
      %v495 = vadd.f32 %v456, %v463
      %v496 = vadd.f32 %v457, %v463
      %v497 = vadd.f32 %v355, %v465
      %v498 = vadd.f32 %v356, %v466
      %v499 = vadd.f32 %v357, %v467
      %v500 = vadd.f32 %v358, %v468
      %v501 = vadd.f32 %v359, %v469
      %v502 = vadd.f32 %v360, %v470
      %v503 = vadd.f32 %v361, %v471
      %v504 = vadd.f32 %v362, %v472
      %v505 = vadd.f32 %v363, %v473
      %v506 = vadd.f32 %v364, %v474
      %v507 = vadd.f32 %v365, %v475
      %v508 = vadd.f32 %v366, %v476
      %v509 = vadd.f32 %v367, %v477
      %v510 = vadd.f32 %v368, %v478
      %v511 = vadd.f32 %v369, %v479
      %v512 = vadd.f32 %v370, %v480
      %v513 = vadd.f32 %v371, %v481
      %v514 = vadd.f32 %v372, %v482
      %v515 = vadd.f32 %v373, %v483
      %v516 = vadd.f32 %v374, %v484
      %v517 = vadd.f32 %v375, %v485
      %v518 = vadd.f32 %v376, %v486
      %v519 = vadd.f32 %v377, %v487
      %v520 = vadd.f32 %v378, %v488
      %v521 = vadd.f32 %v379, %v489
      %v522 = vadd.f32 %v380, %v490
      %v523 = vadd.f32 %v381, %v491
      %v524 = vadd.f32 %v382, %v492
      %v525 = vadd.f32 %v383, %v493
      %v526 = vadd.f32 %v384, %v494
      %v527 = vadd.f32 %v385, %v495
      %v528 = vadd.f32 %v386, %v496
      %v529 = vmax.f32 %v497, 0.0
      %v530 = vmax.f32 %v498, 0.0
      %v531 = vmax.f32 %v499, 0.0
      %v532 = vmax.f32 %v500, 0.0
      %v533 = vmax.f32 %v501, 0.0
      %v534 = vmax.f32 %v502, 0.0
      %v535 = vmax.f32 %v503, 0.0
      %v536 = vmax.f32 %v504, 0.0
      %v537 = vmax.f32 %v505, 0.0
      %v538 = vmax.f32 %v506, 0.0
      %v539 = vmax.f32 %v507, 0.0
      %v540 = vmax.f32 %v508, 0.0
      %v541 = vmax.f32 %v509, 0.0
      %v542 = vmax.f32 %v510, 0.0
      %v543 = vmax.f32 %v511, 0.0
      %v544 = vmax.f32 %v512, 0.0
      %v545 = vmax.f32 %v513, 0.0
      %v546 = vmax.f32 %v514, 0.0
      %v547 = vmax.f32 %v515, 0.0
      %v548 = vmax.f32 %v516, 0.0
      %v549 = vmax.f32 %v517, 0.0
      %v550 = vmax.f32 %v518, 0.0
      %v551 = vmax.f32 %v519, 0.0
      %v552 = vmax.f32 %v520, 0.0
      %v553 = vmax.f32 %v521, 0.0
      %v554 = vmax.f32 %v522, 0.0
      %v555 = vmax.f32 %v523, 0.0
      %v556 = vmax.f32 %v524, 0.0
      %v557 = vmax.f32 %v525, 0.0
      %v558 = vmax.f32 %v526, 0.0
      %v559 = vmax.f32 %v527, 0.0
      %v560 = vmax.f32 %v528, 0.0
      %561 = vst [vmem:[%s275] sm:$0xff] %v529
      %562 = vst [vmem:[%s275 + $0x8] sm:$0xff] %v530
      %563 = vst [vmem:[%s275 + $0x10] sm:$0xff] %v531
      %564 = vst [vmem:[%s275 + $0x18] sm:$0xff] %v532
      %565 = vst [vmem:[%s275 + $0x20] sm:$0xff] %v533
      %566 = vst [vmem:[%s275 + $0x28] sm:$0xff] %v534
      %567 = vst [vmem:[%s275 + $0x30] sm:$0xff] %v535
      %568 = vst [vmem:[%s275 + $0x38] sm:$0xff] %v536
      %569 = vst [vmem:[%s275 + $0x40] sm:$0xff] %v537
      %570 = vst [vmem:[%s275 + $0x48] sm:$0xff] %v538
      %571 = vst [vmem:[%s275 + $0x50] sm:$0xff] %v539
      %572 = vst [vmem:[%s275 + $0x58] sm:$0xff] %v540
      %573 = vst [vmem:[%s275 + $0x60] sm:$0xff] %v541
      %574 = vst [vmem:[%s275 + $0x68] sm:$0xff] %v542
      %575 = vst [vmem:[%s275 + $0x70] sm:$0xff] %v543
      %576 = vst [vmem:[%s275 + $0x78] sm:$0xff] %v544
      %577 = vst [vmem:[%s275 + $0x80] sm:$0xff] %v545
      %578 = vst [vmem:[%s275 + $0x88] sm:$0xff] %v546
      %579 = vst [vmem:[%s275 + $0x90] sm:$0xff] %v547
      %580 = vst [vmem:[%s275 + $0x98] sm:$0xff] %v548
      %581 = vst [vmem:[%s275 + $0xa0] sm:$0xff] %v549
      %582 = vst [vmem:[%s275 + $0xa8] sm:$0xff] %v550
      %583 = vst [vmem:[%s275 + $0xb0] sm:$0xff] %v551
      %584 = vst [vmem:[%s275 + $0xb8] sm:$0xff] %v552
      %585 = vst [vmem:[%s275 + $0xc0] sm:$0xff] %v553
      %586 = vst [vmem:[%s275 + $0xc8] sm:$0xff] %v554
      %587 = vst [vmem:[%s275 + $0xd0] sm:$0xff] %v555
      %588 = vst [vmem:[%s275 + $0xd8] sm:$0xff] %v556
      %589 = vst [vmem:[%s275 + $0xe0] sm:$0xff] %v557
      %590 = vst [vmem:[%s275 + $0xe8] sm:$0xff] %v558
      %591 = vst [vmem:[%s275 + $0xf0] sm:$0xff] %v559
      %592 = vst [vmem:[%s275 + $0xf8] sm:$0xff] %v560
      %s593 = smul.u32 32, %s17
      %p594 = scmp.lt.s32.totalorder %s593, 63
      %s595 = scalar_select %p594, %s593, 63
      %s596 = smul.addr %s595, 8
      %s597 = scalar_lea.vmem %s6, %s596
      // Predicated region
      $region45: #{bottleneck_forward.7} parent=43 // pred_check
        %p598 = pneg %p171
      $region46: #{bottleneck_forward.7} parent=43 // pred_check_branch
        %600 = sbr.rel (%p598) target = $region48
      $region47: #{bottleneck_forward.7} parent=43 // pred_region
        %s601 = smul.u32 32, %s17
      $region48: #{bottleneck_forward.7} parent=43 // pred_fallthru
        _
    $region44: #{bottleneck_forward.7} parent=5 // pred_fallthru
      _
    %p602 = scmp.le.s32.totalorder 2, %s12
    // Predicated region
    $region49: #{bottleneck_forward.7} parent=5 // pred_check
      %p603 = pneg %p602
    $region50: #{bottleneck_forward.7} parent=5 // pred_check_branch
      %605 = sbr.rel (%p603) target = $region52
    $region51: #{bottleneck_forward.7} parent=5 // pred_region
      %s606 = ssub.s32 %s12, 2
      // Predicated region
      $region53: #{bottleneck_forward.7} parent=51 // pred_check
        %p607 = pneg %p177
      $region54: #{bottleneck_forward.7} parent=51 // pred_check_branch
        %609 = sbr.rel (%p607) target = $region56
      $region55: #{bottleneck_forward.7} parent=51 // pred_region
        %s610 = smul.u32 32, %s18
        %p611 = scmp.lt.s32.totalorder %s610, 63
        %s612 = scalar_select %p611, %s610, 63
        %s613 = smul.addr %s612, 8
        %s614 = scalar_lea.vmem %s6, %s613
      $region56: #{bottleneck_forward.7} parent=51 // pred_fallthru
        _
    $region52: #{bottleneck_forward.7} parent=5 // pred_fallthru
      _
  $region6: #{bottleneck_forward.7} parent=0 // loop_footer
    %s16 = sadd.s32 1, %s12
  $region7: #{bottleneck_forward.7} parent=0 // loop_footer_branch
    %11 = sbr.rel target = $region3
  $region8: #{bottleneck_forward.7} parent=0 // loop_exit
    _

// kernel: bottleneck_forward.6
$region0: #{bottleneck_forward.6}
  #allocation0 [shape = 'u32[]', space=smem, size = 0x4, offset = 0x4, fixed_abs, tag = 'smem constant byte address 0x4 - core index']
  #allocation1 [shape = 'u32[144,128]{1,0:T(1,128)}', space=vmem, size = 0x12000, scoped, tag = 'internal scratch']
  %s0 = inlined_call_operand.vmem [shape: f32[512,128], index: 0, kind: input, shape index: {}]
  %s1 = inlined_call_operand.vmem [shape: f32[1,128], index: 1, kind: input, shape index: {}]
  %s2 = inlined_call_operand.vmem [shape: f32[1,128], index: 2, kind: input, shape index: {}]
  %s3 = inlined_call_operand.vmem [shape: f32[128,128], index: 3, kind: input, shape index: {}]
  %s4 = inlined_call_operand.vmem [shape: f32[512,128], index: 4, kind: output, shape index: {0}]
  %s5 = inlined_call_operand.vmem [shape: f32[2,128], index: 5, kind: output, shape index: {1}]
  %6 = xla_tuple %s4, %s5
  %s7 = sld [smem:[#allocation0]]
  $region61: #{bottleneck_forward.6} parent=0
    _
  %s9 = ssub.s32 1, %s7
  %s10 = scalar_select 0, %s9, %s7
  loop: start=0, step=1, limit=4
  $region2: #{bottleneck_forward.6} parent=0 // loop_pre_header
    _
  $region3: #{bottleneck_forward.6} parent=0 // loop_header
    %s12 = sphi 0, %s16
    %p13 = scmp.ge.s32.totalorder %s12, 4
    %s22 = sphi 0, %s24
    %s25 = sphi 0, %s22
    %s26 = sphi 0, %s25
    %s42 = sphi 0, %s26
    %s46 = sphi 0, %s46
    %s48 = sphi 0, %s46
    %s49 = sphi 0, %s48
    %s63 = sphi 0, %s49
    %s67 = sphi 0, %s67
    %s69 = sphi 0, %s67
    %s70 = sphi 0, %s69
    %s84 = sphi 0, %s70
    %s88 = sphi 0, %s88
    %s90 = sphi 0, %s88
    %s91 = sphi 0, %s90
    %s105 = sphi 0, %s91
    %s111 = sphi 0, %s113
    %s114 = sphi 0, %s111
    %s115 = sphi 0, %s114
    %s131 = sphi 0, %s115
    %s135 = sphi 0, %s135
    %s137 = sphi 0, %s135
    %s138 = sphi 0, %s137
    %s152 = sphi 0, %s138
  $region4: #{bottleneck_forward.6} parent=0 // loop_header_branch
    %15 = sbr.rel (%p13) target = $region8
  $region5: #{bottleneck_forward.6} parent=0 // loop_body
    %s17 = ssub.s32 %s12, 1
    %s18 = ssub.s32 %s12, 2
    %s19 = sadd.s32 %s12, 1
    %s20 = ssub.s32 %s12, %s19
    %p21 = scmp.eq.s32.totalorder %s20, 0
    %s23 = sadd.s32 %s22, 1
    %s24 = scalar_select %p21, %s22, %s23
    %p27 = pneg %p21
    %p28 = scmp.eq.s32.totalorder %s12, 1
    %p29 = por %p27, %p28
    %p30 = scmp.ne.s32.totalorder %s22, %s25
    %p31 = scmp.eq.s32.totalorder %s12, 0
    %p32 = por %p30, %p31
    %p33 = scmp.ne.s32.totalorder %s22, %s25
    %p34 = scmp.eq.s32.totalorder %s17, 1
    %p35 = por %p33, %p34
    %p36 = scmp.ne.s32.totalorder %s25, %s26
    %p37 = scmp.eq.s32.totalorder %s17, 0
    %p38 = por %p36, %p37
    %p39 = scmp.ne.s32.totalorder %s25, %s26
    %p40 = scmp.eq.s32.totalorder %s18, 1
    %p41 = por %p39, %p40
    %p43 = scmp.ne.s32.totalorder %s26, %s42
    %p44 = scmp.eq.s32.totalorder %s18, 0
    %p45 = por %p43, %p44
    %s47 = sadd.s32 %s46, 1
    %p50 = scmp.eq.s32.totalorder %s12, 1
    %p51 = scmp.ne.s32.totalorder %s46, %s48
    %p52 = scmp.eq.s32.totalorder %s12, 0
    %p53 = por %p51, %p52
    %p54 = scmp.ne.s32.totalorder %s46, %s48
    %p55 = scmp.eq.s32.totalorder %s17, 1
    %p56 = por %p54, %p55
    %p57 = scmp.ne.s32.totalorder %s48, %s49
    %p58 = scmp.eq.s32.totalorder %s17, 0
    %p59 = por %p57, %p58
    %p60 = scmp.ne.s32.totalorder %s48, %s49
    %p61 = scmp.eq.s32.totalorder %s18, 1
    %p62 = por %p60, %p61
    %p64 = scmp.ne.s32.totalorder %s49, %s63
    %p65 = scmp.eq.s32.totalorder %s18, 0
    %p66 = por %p64, %p65
    %s68 = sadd.s32 %s67, 1
    %p71 = scmp.eq.s32.totalorder %s12, 1
    %p72 = scmp.ne.s32.totalorder %s67, %s69
    %p73 = scmp.eq.s32.totalorder %s12, 0
    %p74 = por %p72, %p73
    %p75 = scmp.ne.s32.totalorder %s67, %s69
    %p76 = scmp.eq.s32.totalorder %s17, 1
    %p77 = por %p75, %p76
    %p78 = scmp.ne.s32.totalorder %s69, %s70
    %p79 = scmp.eq.s32.totalorder %s17, 0
    %p80 = por %p78, %p79
    %p81 = scmp.ne.s32.totalorder %s69, %s70
    %p82 = scmp.eq.s32.totalorder %s18, 1
    %p83 = por %p81, %p82
    %p85 = scmp.ne.s32.totalorder %s70, %s84
    %p86 = scmp.eq.s32.totalorder %s18, 0
    %p87 = por %p85, %p86
    %s89 = sadd.s32 %s88, 1
    %p92 = scmp.eq.s32.totalorder %s12, 1
    %p93 = scmp.ne.s32.totalorder %s88, %s90
    %p94 = scmp.eq.s32.totalorder %s12, 0
    %p95 = por %p93, %p94
    %p96 = scmp.ne.s32.totalorder %s88, %s90
    %p97 = scmp.eq.s32.totalorder %s17, 1
    %p98 = por %p96, %p97
    %p99 = scmp.ne.s32.totalorder %s90, %s91
    %p100 = scmp.eq.s32.totalorder %s17, 0
    %p101 = por %p99, %p100
    %p102 = scmp.ne.s32.totalorder %s90, %s91
    %p103 = scmp.eq.s32.totalorder %s18, 1
    %p104 = por %p102, %p103
    %p106 = scmp.ne.s32.totalorder %s91, %s105
    %p107 = scmp.eq.s32.totalorder %s18, 0
    %p108 = por %p106, %p107
    %s109 = ssub.s32 %s12, %s19
    %p110 = scmp.eq.s32.totalorder %s109, 0
    %s112 = sadd.s32 %s111, 1
    %s113 = scalar_select %p110, %s111, %s112
    %p116 = pneg %p110
    %p117 = scmp.eq.s32.totalorder %s12, 1
    %p118 = por %p116, %p117
    %p119 = scmp.ne.s32.totalorder %s111, %s114
    %p120 = scmp.eq.s32.totalorder %s12, 0
    %p121 = por %p119, %p120
    %p122 = scmp.ne.s32.totalorder %s111, %s114
    %p123 = scmp.eq.s32.totalorder %s17, 1
    %p124 = por %p122, %p123
    %p125 = scmp.ne.s32.totalorder %s114, %s115
    %p126 = scmp.eq.s32.totalorder %s17, 0
    %p127 = por %p125, %p126
    %p128 = scmp.ne.s32.totalorder %s114, %s115
    %p129 = scmp.eq.s32.totalorder %s18, 1
    %p130 = por %p128, %p129
    %p132 = scmp.ne.s32.totalorder %s115, %s131
    %p133 = scmp.eq.s32.totalorder %s18, 0
    %p134 = por %p132, %p133
    %s136 = sadd.s32 %s135, 1
    %p139 = scmp.eq.s32.totalorder %s12, 1
    %p140 = scmp.ne.s32.totalorder %s135, %s137
    %p141 = scmp.eq.s32.totalorder %s12, 0
    %p142 = por %p140, %p141
    %p143 = scmp.ne.s32.totalorder %s135, %s137
    %p144 = scmp.eq.s32.totalorder %s17, 1
    %p145 = por %p143, %p144
    %p146 = scmp.ne.s32.totalorder %s137, %s138
    %p147 = scmp.eq.s32.totalorder %s17, 0
    %p148 = por %p146, %p147
    %p149 = scmp.ne.s32.totalorder %s137, %s138
    %p150 = scmp.eq.s32.totalorder %s18, 1
    %p151 = por %p149, %p150
    %p153 = scmp.ne.s32.totalorder %s138, %s152
    %p154 = scmp.eq.s32.totalorder %s18, 0
    %p155 = por %p153, %p154
    %p156 = scmp.le.s32.totalorder 1, %s12
    %p157 = scmp.lt.s32.totalorder %s12, 3
    %p158 = pnand %p156, %p157
    %p159 = pneg %p158
    // Predicated region
    $region9: #{bottleneck_forward.6} parent=5 // pred_check
      _
    $region10: #{bottleneck_forward.6} parent=5 // pred_check_branch
      %161 = sbr.rel (%p158) target = $region12
    $region11: #{bottleneck_forward.6} parent=5 // pred_region
      %s162 = ssub.s32 %s12, 1
      // Predicated region
      $region13: #{bottleneck_forward.6} parent=11 // pred_check
        %p163 = pneg %p59
      $region14: #{bottleneck_forward.6} parent=11 // pred_check_branch
        %165 = sbr.rel (%p163) target = $region16
      $region15: #{bottleneck_forward.6} parent=11 // pred_region
        _
      $region16: #{bottleneck_forward.6} parent=11 // pred_fallthru
        _
      // Predicated region
      $region17: #{bottleneck_forward.6} parent=11 // pred_check
        %p166 = pneg %p80
      $region18: #{bottleneck_forward.6} parent=11 // pred_check_branch
        %168 = sbr.rel (%p166) target = $region20
      $region19: #{bottleneck_forward.6} parent=11 // pred_region
        _
      $region20: #{bottleneck_forward.6} parent=11 // pred_fallthru
        _
      // Predicated region
      $region21: #{bottleneck_forward.6} parent=11 // pred_check
        %p169 = pneg %p101
      $region22: #{bottleneck_forward.6} parent=11 // pred_check_branch
        %171 = sbr.rel (%p169) target = $region24
      $region23: #{bottleneck_forward.6} parent=11 // pred_region
        _
      $region24: #{bottleneck_forward.6} parent=11 // pred_fallthru
        _
    $region12: #{bottleneck_forward.6} parent=5 // pred_fallthru
      _
    %p172 = scmp.lt.s32.totalorder %s12, 2
    // Predicated region
    $region25: #{bottleneck_forward.6} parent=5 // pred_check
      %p173 = pneg %p172
    $region26: #{bottleneck_forward.6} parent=5 // pred_check_branch
      %175 = sbr.rel (%p173) target = $region28
    $region27: #{bottleneck_forward.6} parent=5 // pred_region
      // Predicated region
      $region29: #{bottleneck_forward.6} parent=27 // pred_check
        %p176 = pneg %p32
      $region30: #{bottleneck_forward.6} parent=27 // pred_check_branch
        %178 = sbr.rel (%p176) target = $region32
      $region31: #{bottleneck_forward.6} parent=27 // pred_region
        %s179 = smul.u32 32, %s12
        %p180 = scmp.lt.s32.totalorder %s179, 63
        %s181 = scalar_select %p180, %s179, 63
        %s182 = smul.addr %s181, 8
        %s183 = scalar_lea.vmem %s0, %s182
        %s184 = smul.u32 32, %s12
      $region32: #{bottleneck_forward.6} parent=27 // pred_fallthru
        _
    $region28: #{bottleneck_forward.6} parent=5 // pred_fallthru
      _
    %p185 = scmp.le.s32.totalorder 1, %s12
    %p186 = scmp.lt.s32.totalorder %s12, 3
    %p187 = pnand %p185, %p186
    %p188 = pneg %p187
    // Predicated region
    $region33: #{bottleneck_forward.6} parent=5 // pred_check
      _
    $region34: #{bottleneck_forward.6} parent=5 // pred_check_branch
      %190 = sbr.rel (%p187) target = $region36
    $region35: #{bottleneck_forward.6} parent=5 // pred_region
      %s191 = ssub.s32 %s12, 1
      %s192 = smul.u32 32, %s17
      %p193 = scmp.lt.s32.totalorder %s192, 63
      %s194 = scalar_select %p193, %s192, 63
      %s195 = smul.addr %s194, 8
      %s196 = scalar_lea.vmem %s0, %s195
      %p197 = pneg %p38
      %p198 = pneg %p35
      %p199 = pneg %p59
      %p200 = pneg %p56
      %p201 = pneg %p80
      %p202 = pneg %p77
      %p203 = pneg %p101
      %p204 = pneg %p98
      %p205 = pneg %p127
      %p206 = pneg %p124
      %s207 = smul.u32 32, %s17
      %p208 = scmp.lt.s32.totalorder %s207, 63
      %s209 = scalar_select %p208, %s207, 63
      %s210 = smul.addr %s209, 8
      %s211 = scalar_lea.vmem %s4, %s210
      %p212 = pneg %p148
      %p213 = pneg %p145
      %s214 = smul.u32 32, %s17
      %p215 = scmp.lt.s32.totalorder %s214, 63
      %s216 = scalar_select %p215, %s214, 63
      %s217 = smul.addr %s216, 8
      %s218 = scalar_lea.vmem %s0, %s217
      %s219 = smul.u32 32, %s17
      %s220 = smul.u32 32, %s17
      %p221 = scmp.lt.s32.totalorder %s220, 63
      %s222 = scalar_select %p221, %s220, 63
      %s223 = smul.addr %s222, 8
      %s224 = scalar_lea.vmem %s4, %s223
      %s225 = smul.u32 32, %s17
      %v226 = vld [vmem:[%s218] sm:$0xff]
      %v227 = vld [vmem:[%s218 + $0x8] sm:$0xff]
      %v228 = vld [vmem:[%s218 + $0x10] sm:$0xff]
      %v229 = vld [vmem:[%s218 + $0x18] sm:$0xff]
      %v230 = vld [vmem:[%s218 + $0x20] sm:$0xff]
      %v231 = vld [vmem:[%s218 + $0x28] sm:$0xff]
      %v232 = vld [vmem:[%s218 + $0x30] sm:$0xff]
      %v233 = vld [vmem:[%s218 + $0x38] sm:$0xff]
      %v234 = vld [vmem:[%s218 + $0x40] sm:$0xff]
      %v235 = vld [vmem:[%s218 + $0x48] sm:$0xff]
      %v236 = vld [vmem:[%s218 + $0x50] sm:$0xff]
      %v237 = vld [vmem:[%s218 + $0x58] sm:$0xff]
      %v238 = vld [vmem:[%s218 + $0x60] sm:$0xff]
      %v239 = vld [vmem:[%s218 + $0x68] sm:$0xff]
      %v240 = vld [vmem:[%s218 + $0x70] sm:$0xff]
      %v241 = vld [vmem:[%s218 + $0x78] sm:$0xff]
      %v242 = vld [vmem:[%s218 + $0x80] sm:$0xff]
      %v243 = vld [vmem:[%s218 + $0x88] sm:$0xff]
      %v244 = vld [vmem:[%s218 + $0x90] sm:$0xff]
      %v245 = vld [vmem:[%s218 + $0x98] sm:$0xff]
      %v246 = vld [vmem:[%s218 + $0xa0] sm:$0xff]
      %v247 = vld [vmem:[%s218 + $0xa8] sm:$0xff]
      %v248 = vld [vmem:[%s218 + $0xb0] sm:$0xff]
      %v249 = vld [vmem:[%s218 + $0xb8] sm:$0xff]
      %v250 = vld [vmem:[%s218 + $0xc0] sm:$0xff]
      %v251 = vld [vmem:[%s218 + $0xc8] sm:$0xff]
      %v252 = vld [vmem:[%s218 + $0xd0] sm:$0xff]
      %v253 = vld [vmem:[%s218 + $0xd8] sm:$0xff]
      %v254 = vld [vmem:[%s218 + $0xe0] sm:$0xff]
      %v255 = vld [vmem:[%s218 + $0xe8] sm:$0xff]
      %v256 = vld [vmem:[%s218 + $0xf0] sm:$0xff]
      %v257 = vld [vmem:[%s218 + $0xf8] sm:$0xff]
      %v258 = vld [vmem:[%s1] sm:$0x1]
      %v260 = vlaneseq
      %v261 = vshrl.u32 %v260, 7
      %v262 = vsub.s32 0, %v261
      %v263 = vrot.slane %v258, %v262
      %v265 = vmul.f32 %v226, %v263
      %v266 = vmul.f32 %v227, %v263
      %v267 = vmul.f32 %v228, %v263
      %v268 = vmul.f32 %v229, %v263
      %v269 = vmul.f32 %v230, %v263
      %v270 = vmul.f32 %v231, %v263
      %v271 = vmul.f32 %v232, %v263
      %v272 = vmul.f32 %v233, %v263
      %v273 = vmul.f32 %v234, %v263
      %v274 = vmul.f32 %v235, %v263
      %v275 = vmul.f32 %v236, %v263
      %v276 = vmul.f32 %v237, %v263
      %v277 = vmul.f32 %v238, %v263
      %v278 = vmul.f32 %v239, %v263
      %v279 = vmul.f32 %v240, %v263
      %v280 = vmul.f32 %v241, %v263
      %v281 = vmul.f32 %v242, %v263
      %v282 = vmul.f32 %v243, %v263
      %v283 = vmul.f32 %v244, %v263
      %v284 = vmul.f32 %v245, %v263
      %v285 = vmul.f32 %v246, %v263
      %v286 = vmul.f32 %v247, %v263
      %v287 = vmul.f32 %v248, %v263
      %v288 = vmul.f32 %v249, %v263
      %v289 = vmul.f32 %v250, %v263
      %v290 = vmul.f32 %v251, %v263
      %v291 = vmul.f32 %v252, %v263
      %v292 = vmul.f32 %v253, %v263
      %v293 = vmul.f32 %v254, %v263
      %v294 = vmul.f32 %v255, %v263
      %v295 = vmul.f32 %v256, %v263
      %v296 = vmul.f32 %v257, %v263
      %v297 = vld [vmem:[%s2] sm:$0x1]
      %v299 = vlaneseq
      %v300 = vshrl.u32 %v299, 7
      %v301 = vsub.s32 0, %v300
      %v302 = vrot.slane %v297, %v301
      %v304 = vadd.f32 %v265, %v302
      %v305 = vadd.f32 %v266, %v302
      %v306 = vadd.f32 %v267, %v302
      %v307 = vadd.f32 %v268, %v302
      %v308 = vadd.f32 %v269, %v302
      %v309 = vadd.f32 %v270, %v302
      %v310 = vadd.f32 %v271, %v302
      %v311 = vadd.f32 %v272, %v302
      %v312 = vadd.f32 %v273, %v302
      %v313 = vadd.f32 %v274, %v302
      %v314 = vadd.f32 %v275, %v302
      %v315 = vadd.f32 %v276, %v302
      %v316 = vadd.f32 %v277, %v302
      %v317 = vadd.f32 %v278, %v302
      %v318 = vadd.f32 %v279, %v302
      %v319 = vadd.f32 %v280, %v302
      %v320 = vadd.f32 %v281, %v302
      %v321 = vadd.f32 %v282, %v302
      %v322 = vadd.f32 %v283, %v302
      %v323 = vadd.f32 %v284, %v302
      %v324 = vadd.f32 %v285, %v302
      %v325 = vadd.f32 %v286, %v302
      %v326 = vadd.f32 %v287, %v302
      %v327 = vadd.f32 %v288, %v302
      %v328 = vadd.f32 %v289, %v302
      %v329 = vadd.f32 %v290, %v302
      %v330 = vadd.f32 %v291, %v302
      %v331 = vadd.f32 %v292, %v302
      %v332 = vadd.f32 %v293, %v302
      %v333 = vadd.f32 %v294, %v302
      %v334 = vadd.f32 %v295, %v302
      %v335 = vadd.f32 %v296, %v302
      %v336 = vmax.f32 %v304, 0.0
      %v337 = vmax.f32 %v305, 0.0
      %v338 = vmax.f32 %v306, 0.0
      %v339 = vmax.f32 %v307, 0.0
      %v340 = vmax.f32 %v308, 0.0
      %v341 = vmax.f32 %v309, 0.0
      %v342 = vmax.f32 %v310, 0.0
      %v343 = vmax.f32 %v311, 0.0
      %v344 = vmax.f32 %v312, 0.0
      %v345 = vmax.f32 %v313, 0.0
      %v346 = vmax.f32 %v314, 0.0
      %v347 = vmax.f32 %v315, 0.0
      %v348 = vmax.f32 %v316, 0.0
      %v349 = vmax.f32 %v317, 0.0
      %v350 = vmax.f32 %v318, 0.0
      %v351 = vmax.f32 %v319, 0.0
      %v352 = vmax.f32 %v320, 0.0
      %v353 = vmax.f32 %v321, 0.0
      %v354 = vmax.f32 %v322, 0.0
      %v355 = vmax.f32 %v323, 0.0
      %v356 = vmax.f32 %v324, 0.0
      %v357 = vmax.f32 %v325, 0.0
      %v358 = vmax.f32 %v326, 0.0
      %v359 = vmax.f32 %v327, 0.0
      %v360 = vmax.f32 %v328, 0.0
      %v361 = vmax.f32 %v329, 0.0
      %v362 = vmax.f32 %v330, 0.0
      %v363 = vmax.f32 %v331, 0.0
      %v364 = vmax.f32 %v332, 0.0
      %v365 = vmax.f32 %v333, 0.0
      %v366 = vmax.f32 %v334, 0.0
      %v367 = vmax.f32 %v335, 0.0
      %v368 = vld [vmem:[%s3] sm:$0xff]
      %v369 = vld [vmem:[%s3 + $0x8] sm:$0xff]
      %v370 = vld [vmem:[%s3 + $0x10] sm:$0xff]
      %v371 = vld [vmem:[%s3 + $0x18] sm:$0xff]
      %v372 = vld [vmem:[%s3 + $0x20] sm:$0xff]
      %v373 = vld [vmem:[%s3 + $0x28] sm:$0xff]
      %v374 = vld [vmem:[%s3 + $0x30] sm:$0xff]
      %v375 = vld [vmem:[%s3 + $0x38] sm:$0xff]
      %v376 = vld [vmem:[%s3 + $0x40] sm:$0xff]
      %v377 = vld [vmem:[%s3 + $0x48] sm:$0xff]
      %v378 = vld [vmem:[%s3 + $0x50] sm:$0xff]
      %v379 = vld [vmem:[%s3 + $0x58] sm:$0xff]
      %v380 = vld [vmem:[%s3 + $0x60] sm:$0xff]
      %v381 = vld [vmem:[%s3 + $0x68] sm:$0xff]
      %v382 = vld [vmem:[%s3 + $0x70] sm:$0xff]
      %v383 = vld [vmem:[%s3 + $0x78] sm:$0xff]
      %384 = vmatprep.subr.mxu0 0.0
      %385 = vmatpush1.msra.mxu0 %v368
      %386 = vmatprep.subr.mxu0 0.0
      %387 = vmatpush1.msra.mxu0 %v369
      %388 = vmatprep.subr.mxu0 0.0
      %389 = vmatpush1.msra.mxu0 %v370
      %390 = vmatprep.subr.mxu0 0.0
      %391 = vmatpush1.msra.mxu0 %v371
      %392 = vmatprep.subr.mxu0 0.0
      %393 = vmatpush1.msra.mxu0 %v372
      %394 = vmatprep.subr.mxu0 0.0
      %395 = vmatpush1.msra.mxu0 %v373
      %396 = vmatprep.subr.mxu0 0.0
      %397 = vmatpush1.msra.mxu0 %v374
      %398 = vmatprep.subr.mxu0 0.0
      %399 = vmatpush1.msra.mxu0 %v375
      %400 = vmatprep.subr.mxu0 0.0
      %401 = vmatpush1.msra.mxu0 %v376
      %402 = vmatprep.subr.mxu0 0.0
      %403 = vmatpush1.msra.mxu0 %v377
      %404 = vmatprep.subr.mxu0 0.0
      %405 = vmatpush1.msra.mxu0 %v378
      %406 = vmatprep.subr.mxu0 0.0
      %407 = vmatpush1.msra.mxu0 %v379
      %408 = vmatprep.subr.mxu0 0.0
      %409 = vmatpush1.msra.mxu0 %v380
      %410 = vmatprep.subr.mxu0 0.0
      %411 = vmatpush1.msra.mxu0 %v381
      %412 = vmatprep.subr.mxu0 0.0
      %413 = vmatpush1.msra.mxu0 %v382
      %414 = vmatprep.subr.mxu0 0.0
      %415 = vmatpush1.msra.mxu0 %v383
      %416 = vmatprep.subr.mxu0 0.0
      %417 = vmatpush1.msra.mxu0 0.0
      %418 = vmatprep.subr.mxu0 0.0
      %419 = vmatpush1.msra.mxu0 0.0
      %420 = vmatprep.subr.mxu0 0.0
      %421 = vmatpush1.msra.mxu0 0.0
      %422 = vmatprep.subr.mxu0 0.0
      %423 = vmatpush1.msra.mxu0 0.0
      %424 = vmatprep.subr.mxu0 0.0
      %425 = vmatpush1.msra.mxu0 0.0
      %426 = vmatprep.subr.mxu0 0.0
      %427 = vmatpush1.msra.mxu0 0.0
      %428 = vmatprep.subr.mxu0 0.0
      %429 = vmatpush1.msra.mxu0 0.0
      %430 = vmatprep.subr.mxu0 0.0
      %431 = vmatpush1.msra.mxu0 0.0
      %432 = vmatprep.subr.mxu0 0.0
      %433 = vmatpush1.msra.mxu0 0.0
      %434 = vmatprep.subr.mxu0 0.0
      %435 = vmatpush1.msra.mxu0 0.0
      %436 = vmatprep.subr.mxu0 0.0
      %437 = vmatpush1.msra.mxu0 0.0
      %438 = vmatprep.subr.mxu0 0.0
      %439 = vmatpush1.msra.mxu0 0.0
      %440 = vmatprep.subr.mxu0 0.0
      %441 = vmatpush1.msra.mxu0 0.0
      %442 = vmatprep.subr.mxu0 0.0
      %443 = vmatpush1.msra.mxu0 0.0
      %444 = vmatprep.subr.mxu0 0.0
      %445 = vmatpush1.msra.mxu0 0.0
      %446 = vmatprep.subr.mxu0 0.0
      %447 = vmatpush1.msra.mxu0 0.0
      %448 = vmatprep.mubr.f32.mxu0 0.0
      %449 = vmatmul.mubr.f32.gmra.mrb[0].mxu0 %v336
      %v450 = vpop.f32.mrb[0].mxu0
      %v451 = vadd.f32 0.0, %v450
      %v452 = vpop.f32.mrb[0].mxu0
      %453 = vmatprep.mubr.f32.mxu0 0.0
      %454 = vmatmul.mubr.f32.gmra.mrb[0].mxu0 %v337
      %v455 = vpop.f32.mrb[0].mxu0
      %v456 = vadd.f32 0.0, %v455
      %v457 = vpop.f32.mrb[0].mxu0
      %458 = vmatprep.mubr.f32.mxu0 0.0
      %459 = vmatmul.mubr.f32.gmra.mrb[0].mxu0 %v338
      %v460 = vpop.f32.mrb[0].mxu0
      %v461 = vadd.f32 0.0, %v460
      %v462 = vpop.f32.mrb[0].mxu0
      %463 = vmatprep.mubr.f32.mxu0 0.0
      %464 = vmatmul.mubr.f32.gmra.mrb[0].mxu0 %v339
      %v465 = vpop.f32.mrb[0].mxu0
      %v466 = vadd.f32 0.0, %v465
      %v467 = vpop.f32.mrb[0].mxu0
      %468 = vmatprep.mubr.f32.mxu0 0.0
      %469 = vmatmul.mubr.f32.gmra.mrb[0].mxu0 %v340
      %v470 = vpop.f32.mrb[0].mxu0
      %v471 = vadd.f32 0.0, %v470
      %v472 = vpop.f32.mrb[0].mxu0
      %473 = vmatprep.mubr.f32.mxu0 0.0
      %474 = vmatmul.mubr.f32.gmra.mrb[0].mxu0 %v341
      %v475 = vpop.f32.mrb[0].mxu0
      %v476 = vadd.f32 0.0, %v475
      %v477 = vpop.f32.mrb[0].mxu0
      %478 = vmatprep.mubr.f32.mxu0 0.0
      %479 = vmatmul.mubr.f32.gmra.mrb[0].mxu0 %v342
      %v480 = vpop.f32.mrb[0].mxu0
      %v481 = vadd.f32 0.0, %v480
      %v482 = vpop.f32.mrb[0].mxu0
      %483 = vmatprep.mubr.f32.mxu0 0.0
      %484 = vmatmul.mubr.f32.gmra.mrb[0].mxu0 %v343
      %v485 = vpop.f32.mrb[0].mxu0
      %v486 = vadd.f32 0.0, %v485
      %v487 = vpop.f32.mrb[0].mxu0
      %488 = vmatprep.mubr.f32.mxu0 0.0
      %489 = vmatmul.mubr.f32.gmra.mrb[0].mxu0 %v344
      %v490 = vpop.f32.mrb[0].mxu0
      %v491 = vadd.f32 0.0, %v490
      %v492 = vpop.f32.mrb[0].mxu0
      %493 = vmatprep.mubr.f32.mxu0 0.0
      %494 = vmatmul.mubr.f32.gmra.mrb[0].mxu0 %v345
      %v495 = vpop.f32.mrb[0].mxu0
      %v496 = vadd.f32 0.0, %v495
      %v497 = vpop.f32.mrb[0].mxu0
      %498 = vmatprep.mubr.f32.mxu0 0.0
      %499 = vmatmul.mubr.f32.gmra.mrb[0].mxu0 %v346
      %v500 = vpop.f32.mrb[0].mxu0
      %v501 = vadd.f32 0.0, %v500
      %v502 = vpop.f32.mrb[0].mxu0
      %503 = vmatprep.mubr.f32.mxu0 0.0
      %504 = vmatmul.mubr.f32.gmra.mrb[0].mxu0 %v347
      %v505 = vpop.f32.mrb[0].mxu0
      %v506 = vadd.f32 0.0, %v505
      %v507 = vpop.f32.mrb[0].mxu0
      %508 = vmatprep.mubr.f32.mxu0 0.0
      %509 = vmatmul.mubr.f32.gmra.mrb[0].mxu0 %v348
      %v510 = vpop.f32.mrb[0].mxu0
      %v511 = vadd.f32 0.0, %v510
      %v512 = vpop.f32.mrb[0].mxu0
      %513 = vmatprep.mubr.f32.mxu0 0.0
      %514 = vmatmul.mubr.f32.gmra.mrb[0].mxu0 %v349
      %v515 = vpop.f32.mrb[0].mxu0
      %v516 = vadd.f32 0.0, %v515
      %v517 = vpop.f32.mrb[0].mxu0
      %518 = vmatprep.mubr.f32.mxu0 0.0
      %519 = vmatmul.mubr.f32.gmra.mrb[0].mxu0 %v350
      %v520 = vpop.f32.mrb[0].mxu0
      %v521 = vadd.f32 0.0, %v520
      %v522 = vpop.f32.mrb[0].mxu0
      %523 = vmatprep.mubr.f32.mxu0 0.0
      %524 = vmatmul.mubr.f32.gmra.mrb[0].mxu0 %v351
      %v525 = vpop.f32.mrb[0].mxu0
      %v526 = vadd.f32 0.0, %v525
      %v527 = vpop.f32.mrb[0].mxu0
      %528 = vmatprep.mubr.f32.mxu0 0.0
      %529 = vmatmul.mubr.f32.gmra.mrb[0].mxu0 %v352
      %v530 = vpop.f32.mrb[0].mxu0
      %v531 = vadd.f32 0.0, %v530
      %v532 = vpop.f32.mrb[0].mxu0
      %533 = vmatprep.mubr.f32.mxu0 0.0
      %534 = vmatmul.mubr.f32.gmra.mrb[0].mxu0 %v353
      %v535 = vpop.f32.mrb[0].mxu0
      %v536 = vadd.f32 0.0, %v535
      %v537 = vpop.f32.mrb[0].mxu0
      %538 = vmatprep.mubr.f32.mxu0 0.0
      %539 = vmatmul.mubr.f32.gmra.mrb[0].mxu0 %v354
      %v540 = vpop.f32.mrb[0].mxu0
      %v541 = vadd.f32 0.0, %v540
      %v542 = vpop.f32.mrb[0].mxu0
      %543 = vmatprep.mubr.f32.mxu0 0.0
      %544 = vmatmul.mubr.f32.gmra.mrb[0].mxu0 %v355
      %v545 = vpop.f32.mrb[0].mxu0
      %v546 = vadd.f32 0.0, %v545
      %v547 = vpop.f32.mrb[0].mxu0
      %548 = vmatprep.mubr.f32.mxu0 0.0
      %549 = vmatmul.mubr.f32.gmra.mrb[0].mxu0 %v356
      %v550 = vpop.f32.mrb[0].mxu0
      %v551 = vadd.f32 0.0, %v550
      %v552 = vpop.f32.mrb[0].mxu0
      %553 = vmatprep.mubr.f32.mxu0 0.0
      %554 = vmatmul.mubr.f32.gmra.mrb[0].mxu0 %v357
      %v555 = vpop.f32.mrb[0].mxu0
      %v556 = vadd.f32 0.0, %v555
      %v557 = vpop.f32.mrb[0].mxu0
      %558 = vmatprep.mubr.f32.mxu0 0.0
      %559 = vmatmul.mubr.f32.gmra.mrb[0].mxu0 %v358
      %v560 = vpop.f32.mrb[0].mxu0
      %v561 = vadd.f32 0.0, %v560
      %v562 = vpop.f32.mrb[0].mxu0
      %563 = vmatprep.mubr.f32.mxu0 0.0
      %564 = vmatmul.mubr.f32.gmra.mrb[0].mxu0 %v359
      %v565 = vpop.f32.mrb[0].mxu0
      %v566 = vadd.f32 0.0, %v565
      %v567 = vpop.f32.mrb[0].mxu0
      %568 = vmatprep.mubr.f32.mxu0 0.0
      %569 = vmatmul.mubr.f32.gmra.mrb[0].mxu0 %v360
      %v570 = vpop.f32.mrb[0].mxu0
      %v571 = vadd.f32 0.0, %v570
      %v572 = vpop.f32.mrb[0].mxu0
      %573 = vmatprep.mubr.f32.mxu0 0.0
      %574 = vmatmul.mubr.f32.gmra.mrb[0].mxu0 %v361
      %v575 = vpop.f32.mrb[0].mxu0
      %v576 = vadd.f32 0.0, %v575
      %v577 = vpop.f32.mrb[0].mxu0
      %578 = vmatprep.mubr.f32.mxu0 0.0
      %579 = vmatmul.mubr.f32.gmra.mrb[0].mxu0 %v362
      %v580 = vpop.f32.mrb[0].mxu0
      %v581 = vadd.f32 0.0, %v580
      %v582 = vpop.f32.mrb[0].mxu0
      %583 = vmatprep.mubr.f32.mxu0 0.0
      %584 = vmatmul.mubr.f32.gmra.mrb[0].mxu0 %v363
      %v585 = vpop.f32.mrb[0].mxu0
      %v586 = vadd.f32 0.0, %v585
      %v587 = vpop.f32.mrb[0].mxu0
      %588 = vmatprep.mubr.f32.mxu0 0.0
      %589 = vmatmul.mubr.f32.gmra.mrb[0].mxu0 %v364
      %v590 = vpop.f32.mrb[0].mxu0
      %v591 = vadd.f32 0.0, %v590
      %v592 = vpop.f32.mrb[0].mxu0
      %593 = vmatprep.mubr.f32.mxu0 0.0
      %594 = vmatmul.mubr.f32.gmra.mrb[0].mxu0 %v365
      %v595 = vpop.f32.mrb[0].mxu0
      %v596 = vadd.f32 0.0, %v595
      %v597 = vpop.f32.mrb[0].mxu0
      %598 = vmatprep.mubr.f32.mxu0 0.0
      %599 = vmatmul.mubr.f32.gmra.mrb[0].mxu0 %v366
      %v600 = vpop.f32.mrb[0].mxu0
      %v601 = vadd.f32 0.0, %v600
      %v602 = vpop.f32.mrb[0].mxu0
      %603 = vmatprep.mubr.f32.mxu0 0.0
      %604 = vmatmul.mubr.f32.gmra.mrb[0].mxu0 %v367
      %v605 = vpop.f32.mrb[0].mxu0
      %v606 = vadd.f32 0.0, %v605
      %v607 = vpop.f32.mrb[0].mxu0
      %608 = vdwg.mxu0
      %609 = vst [vmem:[%s224] sm:$0xff] %v451
      %610 = vst [vmem:[%s224 + $0x8] sm:$0xff] %v456
      %611 = vst [vmem:[%s224 + $0x10] sm:$0xff] %v461
      %612 = vst [vmem:[%s224 + $0x18] sm:$0xff] %v466
      %613 = vst [vmem:[%s224 + $0x20] sm:$0xff] %v471
      %614 = vst [vmem:[%s224 + $0x28] sm:$0xff] %v476
      %615 = vst [vmem:[%s224 + $0x30] sm:$0xff] %v481
      %616 = vst [vmem:[%s224 + $0x38] sm:$0xff] %v486
      %617 = vst [vmem:[%s224 + $0x40] sm:$0xff] %v491
      %618 = vst [vmem:[%s224 + $0x48] sm:$0xff] %v496
      %619 = vst [vmem:[%s224 + $0x50] sm:$0xff] %v501
      %620 = vst [vmem:[%s224 + $0x58] sm:$0xff] %v506
      %621 = vst [vmem:[%s224 + $0x60] sm:$0xff] %v511
      %622 = vst [vmem:[%s224 + $0x68] sm:$0xff] %v516
      %623 = vst [vmem:[%s224 + $0x70] sm:$0xff] %v521
      %624 = vst [vmem:[%s224 + $0x78] sm:$0xff] %v526
      %625 = vst [vmem:[%s224 + $0x80] sm:$0xff] %v531
      %626 = vst [vmem:[%s224 + $0x88] sm:$0xff] %v536
      %627 = vst [vmem:[%s224 + $0x90] sm:$0xff] %v541
      %628 = vst [vmem:[%s224 + $0x98] sm:$0xff] %v546
      %629 = vst [vmem:[%s224 + $0xa0] sm:$0xff] %v551
      %630 = vst [vmem:[%s224 + $0xa8] sm:$0xff] %v556
      %631 = vst [vmem:[%s224 + $0xb0] sm:$0xff] %v561
      %632 = vst [vmem:[%s224 + $0xb8] sm:$0xff] %v566
      %633 = vst [vmem:[%s224 + $0xc0] sm:$0xff] %v571
      %634 = vst [vmem:[%s224 + $0xc8] sm:$0xff] %v576
      %635 = vst [vmem:[%s224 + $0xd0] sm:$0xff] %v581
      %636 = vst [vmem:[%s224 + $0xd8] sm:$0xff] %v586
      %637 = vst [vmem:[%s224 + $0xe0] sm:$0xff] %v591
      %638 = vst [vmem:[%s224 + $0xe8] sm:$0xff] %v596
      %639 = vst [vmem:[%s224 + $0xf0] sm:$0xff] %v601
      %640 = vst [vmem:[%s224 + $0xf8] sm:$0xff] %v606
      %v641 = vadd.f32 %v451, %v456
      %v642 = vadd.f32 %v641, %v461
      %v643 = vadd.f32 %v642, %v466
      %v644 = vadd.f32 %v643, %v471
      %v645 = vadd.f32 %v644, %v476
      %v646 = vadd.f32 %v645, %v481
      %v647 = vadd.f32 %v646, %v486
      %v648 = vadd.f32 %v647, %v491
      %v649 = vadd.f32 %v648, %v496
      %v650 = vadd.f32 %v649, %v501
      %v651 = vadd.f32 %v650, %v506
      %v652 = vadd.f32 %v651, %v511
      %v653 = vadd.f32 %v652, %v516
      %v654 = vadd.f32 %v653, %v521
      %v655 = vadd.f32 %v654, %v526
      %v656 = vadd.f32 %v655, %v531
      %v657 = vadd.f32 %v656, %v536
      %v658 = vadd.f32 %v657, %v541
      %v659 = vadd.f32 %v658, %v546
      %v660 = vadd.f32 %v659, %v551
      %v661 = vadd.f32 %v660, %v556
      %v662 = vadd.f32 %v661, %v561
      %v663 = vadd.f32 %v662, %v566
      %v664 = vadd.f32 %v663, %v571
      %v665 = vadd.f32 %v664, %v576
      %v666 = vadd.f32 %v665, %v581
      %v667 = vadd.f32 %v666, %v586
      %v668 = vadd.f32 %v667, %v591
      %v669 = vadd.f32 %v668, %v596
      %v670 = vadd.f32 %v669, %v601
      %v671 = vadd.f32 %v670, %v606
      %v672 = vrot.slane %v671, 4
      %v673 = vadd.f32 %v671, %v672
      %v674 = vrot.slane %v673, 2
      %v675 = vadd.f32 %v673, %v674
      %v676 = vrot.slane %v675, 1
      %v677 = vadd.f32 %v675, %v676
      %v678 = vmul.f32 %v451, %v451
      %v679 = vmul.f32 %v456, %v456
      %v680 = vmul.f32 %v461, %v461
      %v681 = vmul.f32 %v466, %v466
      %v682 = vmul.f32 %v471, %v471
      %v683 = vmul.f32 %v476, %v476
      %v684 = vmul.f32 %v481, %v481
      %v685 = vmul.f32 %v486, %v486
      %v686 = vmul.f32 %v491, %v491
      %v687 = vmul.f32 %v496, %v496
      %v688 = vmul.f32 %v501, %v501
      %v689 = vmul.f32 %v506, %v506
      %v690 = vmul.f32 %v511, %v511
      %v691 = vmul.f32 %v516, %v516
      %v692 = vmul.f32 %v521, %v521
      %v693 = vmul.f32 %v526, %v526
      %v694 = vmul.f32 %v531, %v531
      %v695 = vmul.f32 %v536, %v536
      %v696 = vmul.f32 %v541, %v541
      %v697 = vmul.f32 %v546, %v546
      %v698 = vmul.f32 %v551, %v551
      %v699 = vmul.f32 %v556, %v556
      %v700 = vmul.f32 %v561, %v561
      %v701 = vmul.f32 %v566, %v566
      %v702 = vmul.f32 %v571, %v571
      %v703 = vmul.f32 %v576, %v576
      %v704 = vmul.f32 %v581, %v581
      %v705 = vmul.f32 %v586, %v586
      %v706 = vmul.f32 %v591, %v591
      %v707 = vmul.f32 %v596, %v596
      %v708 = vmul.f32 %v601, %v601
      %v709 = vmul.f32 %v606, %v606
      %v710 = vadd.f32 %v678, %v679
      %v711 = vadd.f32 %v710, %v680
      %v712 = vadd.f32 %v711, %v681
      %v713 = vadd.f32 %v712, %v682
      %v714 = vadd.f32 %v713, %v683
      %v715 = vadd.f32 %v714, %v684
      %v716 = vadd.f32 %v715, %v685
      %v717 = vadd.f32 %v716, %v686
      %v718 = vadd.f32 %v717, %v687
      %v719 = vadd.f32 %v718, %v688
      %v720 = vadd.f32 %v719, %v689
      %v721 = vadd.f32 %v720, %v690
      %v722 = vadd.f32 %v721, %v691
      %v723 = vadd.f32 %v722, %v692
      %v724 = vadd.f32 %v723, %v693
      %v725 = vadd.f32 %v724, %v694
      %v726 = vadd.f32 %v725, %v695
      %v727 = vadd.f32 %v726, %v696
      %v728 = vadd.f32 %v727, %v697
      %v729 = vadd.f32 %v728, %v698
      %v730 = vadd.f32 %v729, %v699
      %v731 = vadd.f32 %v730, %v700
      %v732 = vadd.f32 %v731, %v701
      %v733 = vadd.f32 %v732, %v702
      %v734 = vadd.f32 %v733, %v703
      %v735 = vadd.f32 %v734, %v704
      %v736 = vadd.f32 %v735, %v705
      %v737 = vadd.f32 %v736, %v706
      %v738 = vadd.f32 %v737, %v707
      %v739 = vadd.f32 %v738, %v708
      %v740 = vadd.f32 %v739, %v709
      %v741 = vrot.slane %v740, 4
      %v742 = vadd.f32 %v740, %v741
      %v743 = vrot.slane %v742, 2
      %v744 = vadd.f32 %v742, %v743
      %v745 = vrot.slane %v744, 1
      %v746 = vadd.f32 %v744, %v745
      %vm747 = vcmask 1040384
      %v748 = vsel %vm747, %v677, %v746
      %p749 = scmp.eq.s32.totalorder %s17, 0
      // Predicated region
      $region37: #{bottleneck_forward.6} parent=35 // pred_check
        %p750 = pneg %p749
      $region38: #{bottleneck_forward.6} parent=35 // pred_check_branch
        %752 = sbr.rel (%p750) target = $region40
      $region39: #{bottleneck_forward.6} parent=35 // pred_region
        %753 = vst [vmem:[%s5] sm:$0x3] 0.0
      $region40: #{bottleneck_forward.6} parent=35 // pred_fallthru
        _
      %v754 = vld [vmem:[%s5] sm:$0x3]
      %v755 = vadd.f32 %v754, %v748
      %756 = vst [vmem:[%s5] sm:$0x3] %v755
      %s757 = smul.u32 32, %s17
      %p758 = scmp.lt.s32.totalorder %s757, 63
      %s759 = scalar_select %p758, %s757, 63
      %s760 = smul.addr %s759, 8
      %s761 = scalar_lea.vmem %s4, %s760
      // Predicated region
      $region41: #{bottleneck_forward.6} parent=35 // pred_check
        %p762 = pneg %p124
      $region42: #{bottleneck_forward.6} parent=35 // pred_check_branch
        %764 = sbr.rel (%p762) target = $region44
      $region43: #{bottleneck_forward.6} parent=35 // pred_region
        %s765 = smul.u32 32, %s17
      $region44: #{bottleneck_forward.6} parent=35 // pred_fallthru
        _
      // Predicated region
      $region45: #{bottleneck_forward.6} parent=35 // pred_check
        %p766 = pneg %p145
      $region46: #{bottleneck_forward.6} parent=35 // pred_check_branch
        %768 = sbr.rel (%p766) target = $region48
      $region47: #{bottleneck_forward.6} parent=35 // pred_region
        _
      $region48: #{bottleneck_forward.6} parent=35 // pred_fallthru
        _
      // Predicated region
      $region49: #{bottleneck_forward.6} parent=35 // pred_check
        %p769 = pneg %p145
      $region50: #{bottleneck_forward.6} parent=35 // pred_check_branch
        %771 = sbr.rel (%p769) target = $region52
      $region51: #{bottleneck_forward.6} parent=35 // pred_region
        _
      $region52: #{bottleneck_forward.6} parent=35 // pred_fallthru
        _
    $region36: #{bottleneck_forward.6} parent=5 // pred_fallthru
      _
    %p772 = scmp.le.s32.totalorder 2, %s12
    // Predicated region
    $region53: #{bottleneck_forward.6} parent=5 // pred_check
      %p773 = pneg %p772
    $region54: #{bottleneck_forward.6} parent=5 // pred_check_branch
      %775 = sbr.rel (%p773) target = $region56
    $region55: #{bottleneck_forward.6} parent=5 // pred_region
      %s776 = ssub.s32 %s12, 2
      // Predicated region
      $region57: #{bottleneck_forward.6} parent=55 // pred_check
        %p777 = pneg %p130
      $region58: #{bottleneck_forward.6} parent=55 // pred_check_branch
        %779 = sbr.rel (%p777) target = $region60
      $region59: #{bottleneck_forward.6} parent=55 // pred_region
        %s780 = smul.u32 32, %s18
        %p781 = scmp.lt.s32.totalorder %s780, 63
        %s782 = scalar_select %p781, %s780, 63
        %s783 = smul.addr %s782, 8
        %s784 = scalar_lea.vmem %s4, %s783
      $region60: #{bottleneck_forward.6} parent=55 // pred_fallthru
        _
    $region56: #{bottleneck_forward.6} parent=5 // pred_fallthru
      _
  $region6: #{bottleneck_forward.6} parent=0 // loop_footer
    %s16 = sadd.s32 1, %s12
  $region7: #{bottleneck_forward.6} parent=0 // loop_footer_branch
    %11 = sbr.rel target = $region3
  $region8: #{bottleneck_forward.6} parent=0 // loop_exit
    _

</llo_original>
